<compile_context>
chip_gen: v7x
topology: tpu7x:2x2x1
jax: 0.10.0
libtpu: 0.0.40
codegen_flags: <defaults>
</compile_context>

<pallas_src>
import math
from functools import partial

import jax
import jax.numpy as jnp
from jax.experimental import pallas as pl
from jax.experimental.pallas import tpu as pltpu


LANE = 128
# The official Differential-Transformer sub-layer norm uses RMSNorm(..., eps=1e-5).
# TODO(synk): torch.nn.RMSNorm default eps is None (machine eps) -- adjust if the
# reference DiffAttention uses a different eps.
RMS_EPS = 1e-5


class NanoConfig:
    d_model = 32
    n_heads = 2
    n_layers = 4


def _round_up(n, m):
    return ((n + m - 1) // m) * m


# ----------------------------- fused Pallas kernel -------------------------

def _fused_stack_kernel(lam_ref, x_ref, wqkv_ref, wo_ref,
                        y_ref, k_ref, v_ref, *, B, T, H, D):
    """Runs all L DiffAttention layers on the lane-padded (B*T, Dp) slab.

    lam_ref  : SMEM (L,)          lambda_full per layer
    x_ref    : VMEM (B*T, Dp)     input activations (lanes >= D are zero)
    wqkv_ref : VMEM (L, Dp, C3)   fused [wq*scale | wk | wv | 0] projections
    wo_ref   : VMEM (L, D, Dp)    output proj, rows pre-scaled by gamma*(1-li),
                                  columns >= D are zero
    y_ref    : VMEM (B*T, Dp)     output activations (lanes >= D are zero)
    k_ref    : VMEM (B*T, L*D)    per-layer k projections packed along lanes
    v_ref    : VMEM (B*T, L*D)    per-layer v projections packed along lanes
    """
    L = wqkv_ref.shape[0]
    Dh = D // (2 * H)
    two_dh = 2 * Dh
    G = 2 * H                                   # number of softmax segments / layer

    # --- loop-invariant constants, built once (hoisted out of the layer loop) ---
    row = jax.lax.broadcasted_iota(jnp.int32, (T, T), 0)
    col = jax.lax.broadcasted_iota(jnp.int32, (T, T), 1)
    causal_add = jnp.where(col <= row, 0.0, -1e30).astype(jnp.float32)   # (T, T)
    mask_big = jnp.concatenate([causal_add] * G, axis=-1)                # (T, G*T)

    # Block-diagonal ones matrix: one MXU matmul gives every lane its own
    # segment (per-softmax) sum, replacing G separate XLU row reductions.
    one_blk = jnp.ones((T, T), jnp.float32)
    zero_blk = jnp.zeros((T, T), jnp.float32)
    seg_sum = jnp.concatenate(
        [jnp.concatenate([one_blk if j == g else zero_blk for j in range(G)],
                         axis=-1)
         for g in range(G)], axis=0)                                     # (G*T, G*T)

    dn = (((1,), (1,)), ((), ()))   # contract last dims: (T,Dh) x (T,Dh) -> (T,T)

    x = x_ref[...].astype(jnp.float32)          # (B*T, Dp)

    k_layers = []
    v_layers = []
    for l in range(L):                          # static unroll, L = 4
        w_qkv = wqkv_ref[l]                     # (Dp, C3)
        qkv = jnp.dot(x, w_qkv, preferred_element_type=jnp.float32)      # (BT, C3)

        # Scale already folded into the wq columns at prep time.
        q = qkv[:, 0 * D:1 * D]
        k = qkv[:, 1 * D:2 * D]
        v = qkv[:, 2 * D:3 * D]
        k_layers.append(k)                      # KV-cache mirror, stored once at end
        v_layers.append(v)

        lam = lam_ref[l]                        # scalar lambda_full (SMEM)
        w_o = wo_ref[l]                         # (D, Dp), gamma*(1-li) pre-folded

        x_blocks = []
        for b in range(B):                      # static, B = 1
            r0 = b * T
            qb = q[r0:r0 + T, :]
            kb = k[r0:r0 + T, :]
            vb = v[r0:r0 + T, :]

            # Scores for all 2H softmaxes, packed along lanes:
            # segments [s1_h0 .. s1_h{H-1} | s2_h0 .. s2_h{H-1}].
            s1_list, s2_list = [], []
            for h in range(H):
                c0 = h * two_dh
                s1_list.append(jax.lax.dot_general(
                    qb[:, c0:c0 + Dh], kb[:, c0:c0 + Dh], dn,
                    preferred_element_type=jnp.float32))
                s2_list.append(jax.lax.dot_general(
                    qb[:, c0 + Dh:c0 + two_dh], kb[:, c0 + Dh:c0 + two_dh], dn,
                    preferred_element_type=jnp.float32))
            s = jnp.concatenate(s1_list + s2_list, axis=-1) + mask_big   # (T, G*T)

            # One batched softmax pass.  A per-row global max is a valid shift
            # for every segment (softmax is shift-invariant per segment).
            m = jnp.max(s, axis=-1, keepdims=True)                       # (T, 1)
            e = jnp.exp(s - m)                                           # (T, G*T)
            denom = jnp.dot(e, seg_sum,
                            preferred_element_type=jnp.float32)          # seg sums
            p = e * pl.reciprocal(denom, approx=False)                   # exact

            # Differential combine: softmax(s1) - lambda * softmax(s2), all heads.
            a = p[:, :H * T] - lam * p[:, H * T:]                        # (T, H*T)

            acc = None
            for h in range(H):
                o = jnp.dot(a[:, h * T:(h + 1) * T],
                            vb[:, h * two_dh:(h + 1) * two_dh],
                            preferred_element_type=jnp.float32)          # (T, 2Dh)
                # Sub-layer RMSNorm (gamma and (1-lambda_init) folded into wo).
                ms = jnp.mean(o * o, axis=-1, keepdims=True)
                o = o * jax.lax.rsqrt(ms + RMS_EPS)
                # Head combine without lane concat: accumulate o_h @ wo[head rows].
                part = jnp.dot(o, w_o[h * two_dh:(h + 1) * two_dh, :],
                               preferred_element_type=jnp.float32)       # (T, Dp)
                acc = part if acc is None else acc + part
            x_blocks.append(acc)

        # TODO(synk): no residual connection / projection bias, matching the
        # reference semantics of the previously validated kernel.
        x = x_blocks[0] if B == 1 else jnp.concatenate(x_blocks, axis=0)  # (BT, Dp)

    # Lane-dense (128-wide, unmasked) stores.
    y_ref[...] = x.astype(y_ref.dtype)
    k_ref[...] = jnp.concatenate(k_layers, axis=-1).astype(k_ref.dtype)   # (BT, L*D)
    v_ref[...] = jnp.concatenate(v_layers, axis=-1).astype(v_ref.dtype)


def fused_diff_attn_stack(x_pad, wqkv, wo, lam, *, B, T, H, D):
    BT, Dp = x_pad.shape
    L = wqkv.shape[0]
    kernel = partial(_fused_stack_kernel, B=B, T=T, H=H, D=D)
    return pl.pallas_call(
        kernel,
        out_shape=(
            jax.ShapeDtypeStruct((BT, Dp), jnp.float32),       # y (lane padded)
            jax.ShapeDtypeStruct((BT, L * D), jnp.float32),    # k slab (16, 128)
            jax.ShapeDtypeStruct((BT, L * D), jnp.float32),    # v slab (16, 128)
        ),
        in_specs=[
            pl.BlockSpec(memory_space=pltpu.MemorySpace.SMEM),   # lam (L,)
            pl.BlockSpec(memory_space=pltpu.MemorySpace.VMEM),   # x (BT, Dp)
            pl.BlockSpec(memory_space=pltpu.MemorySpace.VMEM),   # wqkv (L, Dp, C3)
            pl.BlockSpec(memory_space=pltpu.MemorySpace.VMEM),   # wo (L, D, Dp)
        ],
        out_specs=(
            pl.BlockSpec(memory_space=pltpu.MemorySpace.VMEM),
            pl.BlockSpec(memory_space=pltpu.MemorySpace.VMEM),
            pl.BlockSpec(memory_space=pltpu.MemorySpace.VMEM),
        ),
    )(lam, x_pad, wqkv, wo)


# ----------------------------- JAX glue -----------------------------------

def prepare_params(params_list):
    """One-time host-side param fusion (hoisted out of the forward path).

    - wq columns pre-scaled by 1/sqrt(Dh)
    - gamma * (1 - lambda_init) folded into wo rows
    - everything zero-padded so last dims are 128-lane multiples
    """
    D = params_list[0]["wq"].shape[0]
    H = params_list[0]["n_heads"]
    Dh = D // (2 * H)
    scale = 1.0 / math.sqrt(Dh)
    Dp = _round_up(D, LANE)
    C3 = _round_up(3 * D, LANE)

    wqkv, wo = [], []
    for p in params_list:
        w = jnp.concatenate([p["wq"] * scale, p["wk"], p["wv"]], axis=1)   # (D, 3D)
        wqkv.append(jnp.pad(w, ((0, Dp - D), (0, C3 - 3 * D))))
        g_full = jnp.tile(p["gamma"], H) * (1.0 - p["lambda_init"])        # (D,)
        wo.append(jnp.pad(p["wo"] * g_full[:, None], ((0, 0), (0, Dp - D))))

    lam = jnp.stack([
        jnp.exp(jnp.sum(p["lambda_q1"] * p["lambda_k1"]))
        - jnp.exp(jnp.sum(p["lambda_q2"] * p["lambda_k2"]))
        + p["lambda_init"]
        for p in params_list]).astype(jnp.float32)                         # (L,)

    return {
        "wqkv": jnp.stack(wqkv).astype(jnp.float32),   # (L, Dp, C3)
        "wo": jnp.stack(wo).astype(jnp.float32),       # (L, D,  Dp)
        "lam": lam,                                    # (L,)
        "n_heads": H,
        "d_model": D,
        "n_layers": len(params_list),
    }


@partial(jax.jit, static_argnames=("n_heads",))
def _forward_jit(x, wqkv, wo, lam, n_heads):
    B, T, D = x.shape
    Dp = wqkv.shape[1]
    x2d = x.reshape(B * T, D).astype(jnp.float32)
    x_pad = jnp.pad(x2d, ((0, 0), (0, Dp - D)))          # lane-dense kernel input
    y_pad, k_slab, v_slab = fused_diff_attn_stack(
        x_pad, wqkv, wo, lam, B=B, T=T, H=n_heads, D=D)
    y = y_pad[:, :D].reshape(B, T, D)
    return y, k_slab, v_slab


def my_model_forward(x, prep, caches=None):
    """Forward pass. `prep` is the output of prepare_params() (computed once)."""
    H = prep["n_heads"]
    L = prep["n_layers"]
    y, k_slab, v_slab = _forward_jit(x, prep["wqkv"], prep["wo"], prep["lam"],
                                     n_heads=H)

    # TODO(synk): incremental-decode KV-cache path not exercised (prefill only);
    # caches mirror the torch tuple (k, v, None, offset + T).
    if caches is not None:
        B, T, D = x.shape
        Dh = D // (2 * H)
        for i in range(L):
            k_i = k_slab[:, i * D:(i + 1) * D].reshape(B, T, H, 2, Dh)
            v_i = v_slab[:, i * D:(i + 1) * D].reshape(B, T, H, 2 * Dh)
            prev_off = caches[i][3] if caches[i] is not None else 0
            caches[i] = (k_i, v_i, None, prev_off + T)
    return y, caches


def init_params(key, config):
    D, H = config.d_model, config.n_heads
    Dh = D // (2 * H)
    params = []
    for layer in range(config.n_layers):
        key, *ks = jax.random.split(key, 9)
        params.append({
            "n_heads": H,
            "wq": 0.02 * jax.random.normal(ks[0], (D, D), jnp.float32),
            "wk": 0.02 * jax.random.normal(ks[1], (D, D), jnp.float32),
            "wv": 0.02 * jax.random.normal(ks[2], (D, D), jnp.float32),
            "wo": 0.02 * jax.random.normal(ks[3], (D, D), jnp.float32),
            "lambda_q1": 0.1 * jax.random.normal(ks[4], (Dh,), jnp.float32),
            "lambda_k1": 0.1 * jax.random.normal(ks[5], (Dh,), jnp.float32),
            "lambda_q2": 0.1 * jax.random.normal(ks[6], (Dh,), jnp.float32),
            "lambda_k2": 0.1 * jax.random.normal(ks[7], (Dh,), jnp.float32),
            "gamma": jnp.ones((2 * Dh,), jnp.float32),
            "lambda_init": 0.8 - 0.6 * math.exp(-0.3 * layer),
        })
    return params


if __name__ == "__main__":
    config = NanoConfig()
    key = jax.random.PRNGKey(0)
    pkey, xkey = jax.random.split(key)
    params = init_params(pkey, config)

    # prepare_params is hoisted out of the forward path (perf feedback #6).
    prep = prepare_params(params)

    batch_size, seq_len = 1, 16
    x = jax.random.normal(xkey, (batch_size, seq_len, config.d_model), jnp.float32)
    caches = [(None, None, None, 0) for _ in range(config.n_layers)]

    y, caches = my_model_forward(x, prep, caches)
    jax.block_until_ready(y)
    assert y.shape == (batch_size, seq_len, config.d_model)
    assert jnp.all(jnp.isfinite(y))
    assert caches[0][3] == seq_len
    print("KERNEL_OK")
</pallas_src>

<mosaic_0001>
module attributes {stable_mosaic.version = 11 : i64} {
  func.func @_fused_stack_kernel(%arg0: memref<4xf32, #tpu.memory_space<smem>>, %arg1: memref<16x128xf32, #tpu.memory_space<vmem>>, %arg2: memref<4x128x128xf32, #tpu.memory_space<vmem>>, %arg3: memref<4x32x128xf32, #tpu.memory_space<vmem>>, %arg4: memref<16x128xf32, #tpu.memory_space<vmem>>, %arg5: memref<16x128xf32, #tpu.memory_space<vmem>>, %arg6: memref<16x128xf32, #tpu.memory_space<vmem>>) attributes {dimension_semantics = [], scalar_prefetch = 0 : i64, scratch_operands = 0 : i64, tpu.core_type = #tpu.core_type<tc>} {
    %0 = tpu.iota {dimensions = array<i32: 0>} : vector<16x16xi32>
    %1 = tpu.iota {dimensions = array<i32: 1>} : vector<16x16xi32>
    %2 = arith.cmpi sle, %1, %0 : vector<16x16xi32>
    %cst = arith.constant 0.000000e+00 : f32
    %cst_0 = arith.constant -1.000000e+30 : f32
    %3 = vector.broadcast %cst : f32 to vector<16x16xf32>
    %4 = vector.broadcast %cst_0 : f32 to vector<16x16xf32>
    %5 = arith.select %2, %3, %4 : vector<16x16xi1>, vector<16x16xf32>
    %6 = tpu.concatenate %5, %5, %5, %5 in 1 : vector<16x16xf32>, vector<16x16xf32>, vector<16x16xf32>, vector<16x16xf32> -> vector<16x64xf32>
    %cst_1 = arith.constant 1.000000e+00 : f32
    %7 = vector.broadcast %cst_1 : f32 to vector<16x16xf32>
    %cst_2 = arith.constant 0.000000e+00 : f32
    %8 = vector.broadcast %cst_2 : f32 to vector<16x16xf32>
    %9 = tpu.concatenate %7, %8, %8, %8 in 1 : vector<16x16xf32>, vector<16x16xf32>, vector<16x16xf32>, vector<16x16xf32> -> vector<16x64xf32>
    %10 = tpu.concatenate %8, %7, %8, %8 in 1 : vector<16x16xf32>, vector<16x16xf32>, vector<16x16xf32>, vector<16x16xf32> -> vector<16x64xf32>
    %11 = tpu.concatenate %8, %8, %7, %8 in 1 : vector<16x16xf32>, vector<16x16xf32>, vector<16x16xf32>, vector<16x16xf32> -> vector<16x64xf32>
    %12 = tpu.concatenate %8, %8, %8, %7 in 1 : vector<16x16xf32>, vector<16x16xf32>, vector<16x16xf32>, vector<16x16xf32> -> vector<16x64xf32>
    %13 = tpu.concatenate %9, %10, %11, %12 in 0 : vector<16x64xf32>, vector<16x64xf32>, vector<16x64xf32>, vector<16x64xf32> -> vector<64x64xf32>
    %c0 = arith.constant 0 : index
    %c0_3 = arith.constant 0 : index
    %14 = vector.load %arg1[%c0, %c0_3] : memref<16x128xf32, #tpu.memory_space<vmem>>, vector<16x128xf32>
    %c0_4 = arith.constant 0 : index
    %c0_5 = arith.constant 0 : index
    %c0_6 = arith.constant 0 : index
    %15 = vector.load %arg2[%c0_4, %c0_5, %c0_6] : memref<4x128x128xf32, #tpu.memory_space<vmem>>, vector<1x128x128xf32>
    %16 = vector.shape_cast %15 : vector<1x128x128xf32> to vector<128x128xf32>
    %cst_7 = arith.constant dense<0.000000e+00> : vector<16x128xf32>
    %17 = tpu.matmul %14, %16, %cst_7 {dimension_numbers = #tpu.dot_dimension_numbers<[1], [0], [0], [1], [0, 0, 1, 1], [], []>} : vector<16x128xf32>, vector<128x128xf32>, vector<16x128xf32> -> vector<16x128xf32>
    %18 = vector.extract_strided_slice %17 {offsets = [0, 0], sizes = [16, 32], strides = [1, 1]} : vector<16x128xf32> to vector<16x32xf32>
    %19 = vector.extract_strided_slice %17 {offsets = [0, 32], sizes = [16, 32], strides = [1, 1]} : vector<16x128xf32> to vector<16x32xf32>
    %20 = vector.extract_strided_slice %17 {offsets = [0, 64], sizes = [16, 32], strides = [1, 1]} : vector<16x128xf32> to vector<16x32xf32>
    %c0_8 = arith.constant 0 : index
    %21 = memref.load %arg0[%c0_8] : memref<4xf32, #tpu.memory_space<smem>>
    %c0_9 = arith.constant 0 : index
    %c0_10 = arith.constant 0 : index
    %c0_11 = arith.constant 0 : index
    %22 = vector.load %arg3[%c0_9, %c0_10, %c0_11] : memref<4x32x128xf32, #tpu.memory_space<vmem>>, vector<1x32x128xf32>
    %23 = vector.shape_cast %22 : vector<1x32x128xf32> to vector<32x128xf32>
    %24 = vector.extract_strided_slice %18 {offsets = [0, 0], sizes = [16, 8], strides = [1, 1]} : vector<16x32xf32> to vector<16x8xf32>
    %25 = vector.extract_strided_slice %19 {offsets = [0, 0], sizes = [16, 8], strides = [1, 1]} : vector<16x32xf32> to vector<16x8xf32>
    %cst_12 = arith.constant dense<0.000000e+00> : vector<16x16xf32>
    %26 = tpu.matmul %24, %25, %cst_12 {dimension_numbers = #tpu.dot_dimension_numbers<[1], [1], [0], [0], [0, 0, 1, 0], [], []>} : vector<16x8xf32>, vector<16x8xf32>, vector<16x16xf32> -> vector<16x16xf32>
    %27 = vector.extract_strided_slice %18 {offsets = [0, 8], sizes = [16, 8], strides = [1, 1]} : vector<16x32xf32> to vector<16x8xf32>
    %28 = vector.extract_strided_slice %19 {offsets = [0, 8], sizes = [16, 8], strides = [1, 1]} : vector<16x32xf32> to vector<16x8xf32>
    %cst_13 = arith.constant dense<0.000000e+00> : vector<16x16xf32>
    %29 = tpu.matmul %27, %28, %cst_13 {dimension_numbers = #tpu.dot_dimension_numbers<[1], [1], [0], [0], [0, 0, 1, 0], [], []>} : vector<16x8xf32>, vector<16x8xf32>, vector<16x16xf32> -> vector<16x16xf32>
    %30 = vector.extract_strided_slice %18 {offsets = [0, 16], sizes = [16, 8], strides = [1, 1]} : vector<16x32xf32> to vector<16x8xf32>
    %31 = vector.extract_strided_slice %19 {offsets = [0, 16], sizes = [16, 8], strides = [1, 1]} : vector<16x32xf32> to vector<16x8xf32>
    %cst_14 = arith.constant dense<0.000000e+00> : vector<16x16xf32>
    %32 = tpu.matmul %30, %31, %cst_14 {dimension_numbers = #tpu.dot_dimension_numbers<[1], [1], [0], [0], [0, 0, 1, 0], [], []>} : vector<16x8xf32>, vector<16x8xf32>, vector<16x16xf32> -> vector<16x16xf32>
    %33 = vector.extract_strided_slice %18 {offsets = [0, 24], sizes = [16, 8], strides = [1, 1]} : vector<16x32xf32> to vector<16x8xf32>
    %34 = vector.extract_strided_slice %19 {offsets = [0, 24], sizes = [16, 8], strides = [1, 1]} : vector<16x32xf32> to vector<16x8xf32>
    %cst_15 = arith.constant dense<0.000000e+00> : vector<16x16xf32>
    %35 = tpu.matmul %33, %34, %cst_15 {dimension_numbers = #tpu.dot_dimension_numbers<[1], [1], [0], [0], [0, 0, 1, 0], [], []>} : vector<16x8xf32>, vector<16x8xf32>, vector<16x16xf32> -> vector<16x16xf32>
    %36 = tpu.concatenate %26, %32, %29, %35 in 1 : vector<16x16xf32>, vector<16x16xf32>, vector<16x16xf32>, vector<16x16xf32> -> vector<16x64xf32>
    %37 = arith.addf %36, %6 : vector<16x64xf32>
    %cst_16 = arith.constant dense<0xFF800000> : vector<16xf32>
    %38 = vector.multi_reduction <maximumf>, %37, %cst_16 [1] : vector<16x64xf32> to vector<16xf32>
    %39 = vector.shape_cast %38 : vector<16xf32> to vector<16x1xf32>
    %40 = vector.broadcast %39 : vector<16x1xf32> to vector<16x64xf32>
    %41 = arith.subf %37, %40 : vector<16x64xf32>
    %42 = math.exp %41 : vector<16x64xf32>
    %cst_17 = arith.constant dense<0.000000e+00> : vector<16x64xf32>
    %43 = tpu.matmul %42, %13, %cst_17 {dimension_numbers = #tpu.dot_dimension_numbers<[1], [0], [0], [1], [0, 0, 1, 1], [], []>} : vector<16x64xf32>, vector<64x64xf32>, vector<16x64xf32> -> vector<16x64xf32>
    %44 = tpu.reciprocal %43 : vector<16x64xf32> -> vector<16x64xf32>
    %45 = arith.mulf %42, %44 : vector<16x64xf32>
    %46 = vector.extract_strided_slice %45 {offsets = [0, 0], sizes = [16, 32], strides = [1, 1]} : vector<16x64xf32> to vector<16x32xf32>
    %47 = vector.extract_strided_slice %45 {offsets = [0, 32], sizes = [16, 32], strides = [1, 1]} : vector<16x64xf32> to vector<16x32xf32>
    %48 = vector.broadcast %21 : f32 to vector<16x32xf32>
    %49 = arith.mulf %48, %47 : vector<16x32xf32>
    %50 = arith.subf %46, %49 : vector<16x32xf32>
    %51 = vector.extract_strided_slice %50 {offsets = [0, 0], sizes = [16, 16], strides = [1, 1]} : vector<16x32xf32> to vector<16x16xf32>
    %52 = vector.extract_strided_slice %20 {offsets = [0, 0], sizes = [16, 16], strides = [1, 1]} : vector<16x32xf32> to vector<16x16xf32>
    %cst_18 = arith.constant dense<0.000000e+00> : vector<16x16xf32>
    %53 = tpu.matmul %51, %52, %cst_18 {dimension_numbers = #tpu.dot_dimension_numbers<[1], [0], [0], [1], [0, 0, 1, 1], [], []>} : vector<16x16xf32>, vector<16x16xf32>, vector<16x16xf32> -> vector<16x16xf32>
    %54 = arith.mulf %53, %53 : vector<16x16xf32>
    %cst_19 = arith.constant dense<0.000000e+00> : vector<16xf32>
    %55 = vector.multi_reduction <add>, %54, %cst_19 [1] : vector<16x16xf32> to vector<16xf32>
    %56 = vector.shape_cast %55 : vector<16xf32> to vector<16x1xf32>
    %cst_20 = arith.constant 1.600000e+01 : f32
    %57 = vector.broadcast %cst_20 : f32 to vector<16x1xf32>
    %58 = arith.divf %56, %57 : vector<16x1xf32>
    %cst_21 = arith.constant 9.99999974E-6 : f32
    %59 = vector.broadcast %cst_21 : f32 to vector<16x1xf32>
    %60 = arith.addf %58, %59 : vector<16x1xf32>
    %61 = math.rsqrt %60 : vector<16x1xf32>
    %62 = vector.broadcast %61 : vector<16x1xf32> to vector<16x16xf32>
    %63 = arith.mulf %53, %62 : vector<16x16xf32>
    %64 = vector.extract_strided_slice %23 {offsets = [0, 0], sizes = [16, 128], strides = [1, 1]} : vector<32x128xf32> to vector<16x128xf32>
    %cst_22 = arith.constant dense<0.000000e+00> : vector<16x128xf32>
    %65 = tpu.matmul %63, %64, %cst_22 {dimension_numbers = #tpu.dot_dimension_numbers<[1], [0], [0], [1], [0, 0, 1, 1], [], []>} : vector<16x16xf32>, vector<16x128xf32>, vector<16x128xf32> -> vector<16x128xf32>
    %66 = vector.extract_strided_slice %50 {offsets = [0, 16], sizes = [16, 16], strides = [1, 1]} : vector<16x32xf32> to vector<16x16xf32>
    %67 = vector.extract_strided_slice %20 {offsets = [0, 16], sizes = [16, 16], strides = [1, 1]} : vector<16x32xf32> to vector<16x16xf32>
    %cst_23 = arith.constant dense<0.000000e+00> : vector<16x16xf32>
    %68 = tpu.matmul %66, %67, %cst_23 {dimension_numbers = #tpu.dot_dimension_numbers<[1], [0], [0], [1], [0, 0, 1, 1], [], []>} : vector<16x16xf32>, vector<16x16xf32>, vector<16x16xf32> -> vector<16x16xf32>
    %69 = arith.mulf %68, %68 : vector<16x16xf32>
    %cst_24 = arith.constant dense<0.000000e+00> : vector<16xf32>
    %70 = vector.multi_reduction <add>, %69, %cst_24 [1] : vector<16x16xf32> to vector<16xf32>
    %71 = vector.shape_cast %70 : vector<16xf32> to vector<16x1xf32>
    %cst_25 = arith.constant 1.600000e+01 : f32
    %72 = vector.broadcast %cst_25 : f32 to vector<16x1xf32>
    %73 = arith.divf %71, %72 : vector<16x1xf32>
    %cst_26 = arith.constant 9.99999974E-6 : f32
    %74 = vector.broadcast %cst_26 : f32 to vector<16x1xf32>
    %75 = arith.addf %73, %74 : vector<16x1xf32>
    %76 = math.rsqrt %75 : vector<16x1xf32>
    %77 = vector.broadcast %76 : vector<16x1xf32> to vector<16x16xf32>
    %78 = arith.mulf %68, %77 : vector<16x16xf32>
    %79 = vector.extract_strided_slice %23 {offsets = [16, 0], sizes = [16, 128], strides = [1, 1]} : vector<32x128xf32> to vector<16x128xf32>
    %cst_27 = arith.constant dense<0.000000e+00> : vector<16x128xf32>
    %80 = tpu.matmul %78, %79, %cst_27 {dimension_numbers = #tpu.dot_dimension_numbers<[1], [0], [0], [1], [0, 0, 1, 1], [], []>} : vector<16x16xf32>, vector<16x128xf32>, vector<16x128xf32> -> vector<16x128xf32>
    %81 = arith.addf %65, %80 : vector<16x128xf32>
    %c1 = arith.constant 1 : index
    %c0_28 = arith.constant 0 : index
    %c0_29 = arith.constant 0 : index
    %82 = vector.load %arg2[%c1, %c0_28, %c0_29] : memref<4x128x128xf32, #tpu.memory_space<vmem>>, vector<1x128x128xf32>
    %83 = vector.shape_cast %82 : vector<1x128x128xf32> to vector<128x128xf32>
    %cst_30 = arith.constant dense<0.000000e+00> : vector<16x128xf32>
    %84 = tpu.matmul %81, %83, %cst_30 {dimension_numbers = #tpu.dot_dimension_numbers<[1], [0], [0], [1], [0, 0, 1, 1], [], []>} : vector<16x128xf32>, vector<128x128xf32>, vector<16x128xf32> -> vector<16x128xf32>
    %85 = vector.extract_strided_slice %84 {offsets = [0, 0], sizes = [16, 32], strides = [1, 1]} : vector<16x128xf32> to vector<16x32xf32>
    %86 = vector.extract_strided_slice %84 {offsets = [0, 32], sizes = [16, 32], strides = [1, 1]} : vector<16x128xf32> to vector<16x32xf32>
    %87 = vector.extract_strided_slice %84 {offsets = [0, 64], sizes = [16, 32], strides = [1, 1]} : vector<16x128xf32> to vector<16x32xf32>
    %c1_31 = arith.constant 1 : index
    %88 = memref.load %arg0[%c1_31] : memref<4xf32, #tpu.memory_space<smem>>
    %c1_32 = arith.constant 1 : index
    %c0_33 = arith.constant 0 : index
    %c0_34 = arith.constant 0 : index
    %89 = vector.load %arg3[%c1_32, %c0_33, %c0_34] : memref<4x32x128xf32, #tpu.memory_space<vmem>>, vector<1x32x128xf32>
    %90 = vector.shape_cast %89 : vector<1x32x128xf32> to vector<32x128xf32>
    %91 = vector.extract_strided_slice %85 {offsets = [0, 0], sizes = [16, 8], strides = [1, 1]} : vector<16x32xf32> to vector<16x8xf32>
    %92 = vector.extract_strided_slice %86 {offsets = [0, 0], sizes = [16, 8], strides = [1, 1]} : vector<16x32xf32> to vector<16x8xf32>
    %cst_35 = arith.constant dense<0.000000e+00> : vector<16x16xf32>
    %93 = tpu.matmul %91, %92, %cst_35 {dimension_numbers = #tpu.dot_dimension_numbers<[1], [1], [0], [0], [0, 0, 1, 0], [], []>} : vector<16x8xf32>, vector<16x8xf32>, vector<16x16xf32> -> vector<16x16xf32>
    %94 = vector.extract_strided_slice %85 {offsets = [0, 8], sizes = [16, 8], strides = [1, 1]} : vector<16x32xf32> to vector<16x8xf32>
    %95 = vector.extract_strided_slice %86 {offsets = [0, 8], sizes = [16, 8], strides = [1, 1]} : vector<16x32xf32> to vector<16x8xf32>
    %cst_36 = arith.constant dense<0.000000e+00> : vector<16x16xf32>
    %96 = tpu.matmul %94, %95, %cst_36 {dimension_numbers = #tpu.dot_dimension_numbers<[1], [1], [0], [0], [0, 0, 1, 0], [], []>} : vector<16x8xf32>, vector<16x8xf32>, vector<16x16xf32> -> vector<16x16xf32>
    %97 = vector.extract_strided_slice %85 {offsets = [0, 16], sizes = [16, 8], strides = [1, 1]} : vector<16x32xf32> to vector<16x8xf32>
    %98 = vector.extract_strided_slice %86 {offsets = [0, 16], sizes = [16, 8], strides = [1, 1]} : vector<16x32xf32> to vector<16x8xf32>
    %cst_37 = arith.constant dense<0.000000e+00> : vector<16x16xf32>
    %99 = tpu.matmul %97, %98, %cst_37 {dimension_numbers = #tpu.dot_dimension_numbers<[1], [1], [0], [0], [0, 0, 1, 0], [], []>} : vector<16x8xf32>, vector<16x8xf32>, vector<16x16xf32> -> vector<16x16xf32>
    %100 = vector.extract_strided_slice %85 {offsets = [0, 24], sizes = [16, 8], strides = [1, 1]} : vector<16x32xf32> to vector<16x8xf32>
    %101 = vector.extract_strided_slice %86 {offsets = [0, 24], sizes = [16, 8], strides = [1, 1]} : vector<16x32xf32> to vector<16x8xf32>
    %cst_38 = arith.constant dense<0.000000e+00> : vector<16x16xf32>
    %102 = tpu.matmul %100, %101, %cst_38 {dimension_numbers = #tpu.dot_dimension_numbers<[1], [1], [0], [0], [0, 0, 1, 0], [], []>} : vector<16x8xf32>, vector<16x8xf32>, vector<16x16xf32> -> vector<16x16xf32>
    %103 = tpu.concatenate %93, %99, %96, %102 in 1 : vector<16x16xf32>, vector<16x16xf32>, vector<16x16xf32>, vector<16x16xf32> -> vector<16x64xf32>
    %104 = arith.addf %103, %6 : vector<16x64xf32>
    %cst_39 = arith.constant dense<0xFF800000> : vector<16xf32>
    %105 = vector.multi_reduction <maximumf>, %104, %cst_39 [1] : vector<16x64xf32> to vector<16xf32>
    %106 = vector.shape_cast %105 : vector<16xf32> to vector<16x1xf32>
    %107 = vector.broadcast %106 : vector<16x1xf32> to vector<16x64xf32>
    %108 = arith.subf %104, %107 : vector<16x64xf32>
    %109 = math.exp %108 : vector<16x64xf32>
    %cst_40 = arith.constant dense<0.000000e+00> : vector<16x64xf32>
    %110 = tpu.matmul %109, %13, %cst_40 {dimension_numbers = #tpu.dot_dimension_numbers<[1], [0], [0], [1], [0, 0, 1, 1], [], []>} : vector<16x64xf32>, vector<64x64xf32>, vector<16x64xf32> -> vector<16x64xf32>
    %111 = tpu.reciprocal %110 : vector<16x64xf32> -> vector<16x64xf32>
    %112 = arith.mulf %109, %111 : vector<16x64xf32>
    %113 = vector.extract_strided_slice %112 {offsets = [0, 0], sizes = [16, 32], strides = [1, 1]} : vector<16x64xf32> to vector<16x32xf32>
    %114 = vector.extract_strided_slice %112 {offsets = [0, 32], sizes = [16, 32], strides = [1, 1]} : vector<16x64xf32> to vector<16x32xf32>
    %115 = vector.broadcast %88 : f32 to vector<16x32xf32>
    %116 = arith.mulf %115, %114 : vector<16x32xf32>
    %117 = arith.subf %113, %116 : vector<16x32xf32>
    %118 = vector.extract_strided_slice %117 {offsets = [0, 0], sizes = [16, 16], strides = [1, 1]} : vector<16x32xf32> to vector<16x16xf32>
    %119 = vector.extract_strided_slice %87 {offsets = [0, 0], sizes = [16, 16], strides = [1, 1]} : vector<16x32xf32> to vector<16x16xf32>
    %cst_41 = arith.constant dense<0.000000e+00> : vector<16x16xf32>
    %120 = tpu.matmul %118, %119, %cst_41 {dimension_numbers = #tpu.dot_dimension_numbers<[1], [0], [0], [1], [0, 0, 1, 1], [], []>} : vector<16x16xf32>, vector<16x16xf32>, vector<16x16xf32> -> vector<16x16xf32>
    %121 = arith.mulf %120, %120 : vector<16x16xf32>
    %cst_42 = arith.constant dense<0.000000e+00> : vector<16xf32>
    %122 = vector.multi_reduction <add>, %121, %cst_42 [1] : vector<16x16xf32> to vector<16xf32>
    %123 = vector.shape_cast %122 : vector<16xf32> to vector<16x1xf32>
    %cst_43 = arith.constant 1.600000e+01 : f32
    %124 = vector.broadcast %cst_43 : f32 to vector<16x1xf32>
    %125 = arith.divf %123, %124 : vector<16x1xf32>
    %cst_44 = arith.constant 9.99999974E-6 : f32
    %126 = vector.broadcast %cst_44 : f32 to vector<16x1xf32>
    %127 = arith.addf %125, %126 : vector<16x1xf32>
    %128 = math.rsqrt %127 : vector<16x1xf32>
    %129 = vector.broadcast %128 : vector<16x1xf32> to vector<16x16xf32>
    %130 = arith.mulf %120, %129 : vector<16x16xf32>
    %131 = vector.extract_strided_slice %90 {offsets = [0, 0], sizes = [16, 128], strides = [1, 1]} : vector<32x128xf32> to vector<16x128xf32>
    %cst_45 = arith.constant dense<0.000000e+00> : vector<16x128xf32>
    %132 = tpu.matmul %130, %131, %cst_45 {dimension_numbers = #tpu.dot_dimension_numbers<[1], [0], [0], [1], [0, 0, 1, 1], [], []>} : vector<16x16xf32>, vector<16x128xf32>, vector<16x128xf32> -> vector<16x128xf32>
    %133 = vector.extract_strided_slice %117 {offsets = [0, 16], sizes = [16, 16], strides = [1, 1]} : vector<16x32xf32> to vector<16x16xf32>
    %134 = vector.extract_strided_slice %87 {offsets = [0, 16], sizes = [16, 16], strides = [1, 1]} : vector<16x32xf32> to vector<16x16xf32>
    %cst_46 = arith.constant dense<0.000000e+00> : vector<16x16xf32>
    %135 = tpu.matmul %133, %134, %cst_46 {dimension_numbers = #tpu.dot_dimension_numbers<[1], [0], [0], [1], [0, 0, 1, 1], [], []>} : vector<16x16xf32>, vector<16x16xf32>, vector<16x16xf32> -> vector<16x16xf32>
    %136 = arith.mulf %135, %135 : vector<16x16xf32>
    %cst_47 = arith.constant dense<0.000000e+00> : vector<16xf32>
    %137 = vector.multi_reduction <add>, %136, %cst_47 [1] : vector<16x16xf32> to vector<16xf32>
    %138 = vector.shape_cast %137 : vector<16xf32> to vector<16x1xf32>
    %cst_48 = arith.constant 1.600000e+01 : f32
    %139 = vector.broadcast %cst_48 : f32 to vector<16x1xf32>
    %140 = arith.divf %138, %139 : vector<16x1xf32>
    %cst_49 = arith.constant 9.99999974E-6 : f32
    %141 = vector.broadcast %cst_49 : f32 to vector<16x1xf32>
    %142 = arith.addf %140, %141 : vector<16x1xf32>
    %143 = math.rsqrt %142 : vector<16x1xf32>
    %144 = vector.broadcast %143 : vector<16x1xf32> to vector<16x16xf32>
    %145 = arith.mulf %135, %144 : vector<16x16xf32>
    %146 = vector.extract_strided_slice %90 {offsets = [16, 0], sizes = [16, 128], strides = [1, 1]} : vector<32x128xf32> to vector<16x128xf32>
    %cst_50 = arith.constant dense<0.000000e+00> : vector<16x128xf32>
    %147 = tpu.matmul %145, %146, %cst_50 {dimension_numbers = #tpu.dot_dimension_numbers<[1], [0], [0], [1], [0, 0, 1, 1], [], []>} : vector<16x16xf32>, vector<16x128xf32>, vector<16x128xf32> -> vector<16x128xf32>
    %148 = arith.addf %132, %147 : vector<16x128xf32>
    %c2 = arith.constant 2 : index
    %c0_51 = arith.constant 0 : index
    %c0_52 = arith.constant 0 : index
    %149 = vector.load %arg2[%c2, %c0_51, %c0_52] : memref<4x128x128xf32, #tpu.memory_space<vmem>>, vector<1x128x128xf32>
    %150 = vector.shape_cast %149 : vector<1x128x128xf32> to vector<128x128xf32>
    %cst_53 = arith.constant dense<0.000000e+00> : vector<16x128xf32>
    %151 = tpu.matmul %148, %150, %cst_53 {dimension_numbers = #tpu.dot_dimension_numbers<[1], [0], [0], [1], [0, 0, 1, 1], [], []>} : vector<16x128xf32>, vector<128x128xf32>, vector<16x128xf32> -> vector<16x128xf32>
    %152 = vector.extract_strided_slice %151 {offsets = [0, 0], sizes = [16, 32], strides = [1, 1]} : vector<16x128xf32> to vector<16x32xf32>
    %153 = vector.extract_strided_slice %151 {offsets = [0, 32], sizes = [16, 32], strides = [1, 1]} : vector<16x128xf32> to vector<16x32xf32>
    %154 = vector.extract_strided_slice %151 {offsets = [0, 64], sizes = [16, 32], strides = [1, 1]} : vector<16x128xf32> to vector<16x32xf32>
    %c2_54 = arith.constant 2 : index
    %155 = memref.load %arg0[%c2_54] : memref<4xf32, #tpu.memory_space<smem>>
    %c2_55 = arith.constant 2 : index
    %c0_56 = arith.constant 0 : index
    %c0_57 = arith.constant 0 : index
    %156 = vector.load %arg3[%c2_55, %c0_56, %c0_57] : memref<4x32x128xf32, #tpu.memory_space<vmem>>, vector<1x32x128xf32>
    %157 = vector.shape_cast %156 : vector<1x32x128xf32> to vector<32x128xf32>
    %158 = vector.extract_strided_slice %152 {offsets = [0, 0], sizes = [16, 8], strides = [1, 1]} : vector<16x32xf32> to vector<16x8xf32>
    %159 = vector.extract_strided_slice %153 {offsets = [0, 0], sizes = [16, 8], strides = [1, 1]} : vector<16x32xf32> to vector<16x8xf32>
    %cst_58 = arith.constant dense<0.000000e+00> : vector<16x16xf32>
    %160 = tpu.matmul %158, %159, %cst_58 {dimension_numbers = #tpu.dot_dimension_numbers<[1], [1], [0], [0], [0, 0, 1, 0], [], []>} : vector<16x8xf32>, vector<16x8xf32>, vector<16x16xf32> -> vector<16x16xf32>
    %161 = vector.extract_strided_slice %152 {offsets = [0, 8], sizes = [16, 8], strides = [1, 1]} : vector<16x32xf32> to vector<16x8xf32>
    %162 = vector.extract_strided_slice %153 {offsets = [0, 8], sizes = [16, 8], strides = [1, 1]} : vector<16x32xf32> to vector<16x8xf32>
    %cst_59 = arith.constant dense<0.000000e+00> : vector<16x16xf32>
    %163 = tpu.matmul %161, %162, %cst_59 {dimension_numbers = #tpu.dot_dimension_numbers<[1], [1], [0], [0], [0, 0, 1, 0], [], []>} : vector<16x8xf32>, vector<16x8xf32>, vector<16x16xf32> -> vector<16x16xf32>
    %164 = vector.extract_strided_slice %152 {offsets = [0, 16], sizes = [16, 8], strides = [1, 1]} : vector<16x32xf32> to vector<16x8xf32>
    %165 = vector.extract_strided_slice %153 {offsets = [0, 16], sizes = [16, 8], strides = [1, 1]} : vector<16x32xf32> to vector<16x8xf32>
    %cst_60 = arith.constant dense<0.000000e+00> : vector<16x16xf32>
    %166 = tpu.matmul %164, %165, %cst_60 {dimension_numbers = #tpu.dot_dimension_numbers<[1], [1], [0], [0], [0, 0, 1, 0], [], []>} : vector<16x8xf32>, vector<16x8xf32>, vector<16x16xf32> -> vector<16x16xf32>
    %167 = vector.extract_strided_slice %152 {offsets = [0, 24], sizes = [16, 8], strides = [1, 1]} : vector<16x32xf32> to vector<16x8xf32>
    %168 = vector.extract_strided_slice %153 {offsets = [0, 24], sizes = [16, 8], strides = [1, 1]} : vector<16x32xf32> to vector<16x8xf32>
    %cst_61 = arith.constant dense<0.000000e+00> : vector<16x16xf32>
    %169 = tpu.matmul %167, %168, %cst_61 {dimension_numbers = #tpu.dot_dimension_numbers<[1], [1], [0], [0], [0, 0, 1, 0], [], []>} : vector<16x8xf32>, vector<16x8xf32>, vector<16x16xf32> -> vector<16x16xf32>
    %170 = tpu.concatenate %160, %166, %163, %169 in 1 : vector<16x16xf32>, vector<16x16xf32>, vector<16x16xf32>, vector<16x16xf32> -> vector<16x64xf32>
    %171 = arith.addf %170, %6 : vector<16x64xf32>
    %cst_62 = arith.constant dense<0xFF800000> : vector<16xf32>
    %172 = vector.multi_reduction <maximumf>, %171, %cst_62 [1] : vector<16x64xf32> to vector<16xf32>
    %173 = vector.shape_cast %172 : vector<16xf32> to vector<16x1xf32>
    %174 = vector.broadcast %173 : vector<16x1xf32> to vector<16x64xf32>
    %175 = arith.subf %171, %174 : vector<16x64xf32>
    %176 = math.exp %175 : vector<16x64xf32>
    %cst_63 = arith.constant dense<0.000000e+00> : vector<16x64xf32>
    %177 = tpu.matmul %176, %13, %cst_63 {dimension_numbers = #tpu.dot_dimension_numbers<[1], [0], [0], [1], [0, 0, 1, 1], [], []>} : vector<16x64xf32>, vector<64x64xf32>, vector<16x64xf32> -> vector<16x64xf32>
    %178 = tpu.reciprocal %177 : vector<16x64xf32> -> vector<16x64xf32>
    %179 = arith.mulf %176, %178 : vector<16x64xf32>
    %180 = vector.extract_strided_slice %179 {offsets = [0, 0], sizes = [16, 32], strides = [1, 1]} : vector<16x64xf32> to vector<16x32xf32>
    %181 = vector.extract_strided_slice %179 {offsets = [0, 32], sizes = [16, 32], strides = [1, 1]} : vector<16x64xf32> to vector<16x32xf32>
    %182 = vector.broadcast %155 : f32 to vector<16x32xf32>
    %183 = arith.mulf %182, %181 : vector<16x32xf32>
    %184 = arith.subf %180, %183 : vector<16x32xf32>
    %185 = vector.extract_strided_slice %184 {offsets = [0, 0], sizes = [16, 16], strides = [1, 1]} : vector<16x32xf32> to vector<16x16xf32>
    %186 = vector.extract_strided_slice %154 {offsets = [0, 0], sizes = [16, 16], strides = [1, 1]} : vector<16x32xf32> to vector<16x16xf32>
    %cst_64 = arith.constant dense<0.000000e+00> : vector<16x16xf32>
    %187 = tpu.matmul %185, %186, %cst_64 {dimension_numbers = #tpu.dot_dimension_numbers<[1], [0], [0], [1], [0, 0, 1, 1], [], []>} : vector<16x16xf32>, vector<16x16xf32>, vector<16x16xf32> -> vector<16x16xf32>
    %188 = arith.mulf %187, %187 : vector<16x16xf32>
    %cst_65 = arith.constant dense<0.000000e+00> : vector<16xf32>
    %189 = vector.multi_reduction <add>, %188, %cst_65 [1] : vector<16x16xf32> to vector<16xf32>
    %190 = vector.shape_cast %189 : vector<16xf32> to vector<16x1xf32>
    %cst_66 = arith.constant 1.600000e+01 : f32
    %191 = vector.broadcast %cst_66 : f32 to vector<16x1xf32>
    %192 = arith.divf %190, %191 : vector<16x1xf32>
    %cst_67 = arith.constant 9.99999974E-6 : f32
    %193 = vector.broadcast %cst_67 : f32 to vector<16x1xf32>
    %194 = arith.addf %192, %193 : vector<16x1xf32>
    %195 = math.rsqrt %194 : vector<16x1xf32>
    %196 = vector.broadcast %195 : vector<16x1xf32> to vector<16x16xf32>
    %197 = arith.mulf %187, %196 : vector<16x16xf32>
    %198 = vector.extract_strided_slice %157 {offsets = [0, 0], sizes = [16, 128], strides = [1, 1]} : vector<32x128xf32> to vector<16x128xf32>
    %cst_68 = arith.constant dense<0.000000e+00> : vector<16x128xf32>
    %199 = tpu.matmul %197, %198, %cst_68 {dimension_numbers = #tpu.dot_dimension_numbers<[1], [0], [0], [1], [0, 0, 1, 1], [], []>} : vector<16x16xf32>, vector<16x128xf32>, vector<16x128xf32> -> vector<16x128xf32>
    %200 = vector.extract_strided_slice %184 {offsets = [0, 16], sizes = [16, 16], strides = [1, 1]} : vector<16x32xf32> to vector<16x16xf32>
    %201 = vector.extract_strided_slice %154 {offsets = [0, 16], sizes = [16, 16], strides = [1, 1]} : vector<16x32xf32> to vector<16x16xf32>
    %cst_69 = arith.constant dense<0.000000e+00> : vector<16x16xf32>
    %202 = tpu.matmul %200, %201, %cst_69 {dimension_numbers = #tpu.dot_dimension_numbers<[1], [0], [0], [1], [0, 0, 1, 1], [], []>} : vector<16x16xf32>, vector<16x16xf32>, vector<16x16xf32> -> vector<16x16xf32>
    %203 = arith.mulf %202, %202 : vector<16x16xf32>
    %cst_70 = arith.constant dense<0.000000e+00> : vector<16xf32>
    %204 = vector.multi_reduction <add>, %203, %cst_70 [1] : vector<16x16xf32> to vector<16xf32>
    %205 = vector.shape_cast %204 : vector<16xf32> to vector<16x1xf32>
    %cst_71 = arith.constant 1.600000e+01 : f32
    %206 = vector.broadcast %cst_71 : f32 to vector<16x1xf32>
    %207 = arith.divf %205, %206 : vector<16x1xf32>
    %cst_72 = arith.constant 9.99999974E-6 : f32
    %208 = vector.broadcast %cst_72 : f32 to vector<16x1xf32>
    %209 = arith.addf %207, %208 : vector<16x1xf32>
    %210 = math.rsqrt %209 : vector<16x1xf32>
    %211 = vector.broadcast %210 : vector<16x1xf32> to vector<16x16xf32>
    %212 = arith.mulf %202, %211 : vector<16x16xf32>
    %213 = vector.extract_strided_slice %157 {offsets = [16, 0], sizes = [16, 128], strides = [1, 1]} : vector<32x128xf32> to vector<16x128xf32>
    %cst_73 = arith.constant dense<0.000000e+00> : vector<16x128xf32>
    %214 = tpu.matmul %212, %213, %cst_73 {dimension_numbers = #tpu.dot_dimension_numbers<[1], [0], [0], [1], [0, 0, 1, 1], [], []>} : vector<16x16xf32>, vector<16x128xf32>, vector<16x128xf32> -> vector<16x128xf32>
    %215 = arith.addf %199, %214 : vector<16x128xf32>
    %c3 = arith.constant 3 : index
    %c0_74 = arith.constant 0 : index
    %c0_75 = arith.constant 0 : index
    %216 = vector.load %arg2[%c3, %c0_74, %c0_75] : memref<4x128x128xf32, #tpu.memory_space<vmem>>, vector<1x128x128xf32>
    %217 = vector.shape_cast %216 : vector<1x128x128xf32> to vector<128x128xf32>
    %cst_76 = arith.constant dense<0.000000e+00> : vector<16x128xf32>
    %218 = tpu.matmul %215, %217, %cst_76 {dimension_numbers = #tpu.dot_dimension_numbers<[1], [0], [0], [1], [0, 0, 1, 1], [], []>} : vector<16x128xf32>, vector<128x128xf32>, vector<16x128xf32> -> vector<16x128xf32>
    %219 = vector.extract_strided_slice %218 {offsets = [0, 0], sizes = [16, 32], strides = [1, 1]} : vector<16x128xf32> to vector<16x32xf32>
    %220 = vector.extract_strided_slice %218 {offsets = [0, 32], sizes = [16, 32], strides = [1, 1]} : vector<16x128xf32> to vector<16x32xf32>
    %221 = vector.extract_strided_slice %218 {offsets = [0, 64], sizes = [16, 32], strides = [1, 1]} : vector<16x128xf32> to vector<16x32xf32>
    %c3_77 = arith.constant 3 : index
    %222 = memref.load %arg0[%c3_77] : memref<4xf32, #tpu.memory_space<smem>>
    %c3_78 = arith.constant 3 : index
    %c0_79 = arith.constant 0 : index
    %c0_80 = arith.constant 0 : index
    %223 = vector.load %arg3[%c3_78, %c0_79, %c0_80] : memref<4x32x128xf32, #tpu.memory_space<vmem>>, vector<1x32x128xf32>
    %224 = vector.shape_cast %223 : vector<1x32x128xf32> to vector<32x128xf32>
    %225 = vector.extract_strided_slice %219 {offsets = [0, 0], sizes = [16, 8], strides = [1, 1]} : vector<16x32xf32> to vector<16x8xf32>
    %226 = vector.extract_strided_slice %220 {offsets = [0, 0], sizes = [16, 8], strides = [1, 1]} : vector<16x32xf32> to vector<16x8xf32>
    %cst_81 = arith.constant dense<0.000000e+00> : vector<16x16xf32>
    %227 = tpu.matmul %225, %226, %cst_81 {dimension_numbers = #tpu.dot_dimension_numbers<[1], [1], [0], [0], [0, 0, 1, 0], [], []>} : vector<16x8xf32>, vector<16x8xf32>, vector<16x16xf32> -> vector<16x16xf32>
    %228 = vector.extract_strided_slice %219 {offsets = [0, 8], sizes = [16, 8], strides = [1, 1]} : vector<16x32xf32> to vector<16x8xf32>
    %229 = vector.extract_strided_slice %220 {offsets = [0, 8], sizes = [16, 8], strides = [1, 1]} : vector<16x32xf32> to vector<16x8xf32>
    %cst_82 = arith.constant dense<0.000000e+00> : vector<16x16xf32>
    %230 = tpu.matmul %228, %229, %cst_82 {dimension_numbers = #tpu.dot_dimension_numbers<[1], [1], [0], [0], [0, 0, 1, 0], [], []>} : vector<16x8xf32>, vector<16x8xf32>, vector<16x16xf32> -> vector<16x16xf32>
    %231 = vector.extract_strided_slice %219 {offsets = [0, 16], sizes = [16, 8], strides = [1, 1]} : vector<16x32xf32> to vector<16x8xf32>
    %232 = vector.extract_strided_slice %220 {offsets = [0, 16], sizes = [16, 8], strides = [1, 1]} : vector<16x32xf32> to vector<16x8xf32>
    %cst_83 = arith.constant dense<0.000000e+00> : vector<16x16xf32>
    %233 = tpu.matmul %231, %232, %cst_83 {dimension_numbers = #tpu.dot_dimension_numbers<[1], [1], [0], [0], [0, 0, 1, 0], [], []>} : vector<16x8xf32>, vector<16x8xf32>, vector<16x16xf32> -> vector<16x16xf32>
    %234 = vector.extract_strided_slice %219 {offsets = [0, 24], sizes = [16, 8], strides = [1, 1]} : vector<16x32xf32> to vector<16x8xf32>
    %235 = vector.extract_strided_slice %220 {offsets = [0, 24], sizes = [16, 8], strides = [1, 1]} : vector<16x32xf32> to vector<16x8xf32>
    %cst_84 = arith.constant dense<0.000000e+00> : vector<16x16xf32>
    %236 = tpu.matmul %234, %235, %cst_84 {dimension_numbers = #tpu.dot_dimension_numbers<[1], [1], [0], [0], [0, 0, 1, 0], [], []>} : vector<16x8xf32>, vector<16x8xf32>, vector<16x16xf32> -> vector<16x16xf32>
    %237 = tpu.concatenate %227, %233, %230, %236 in 1 : vector<16x16xf32>, vector<16x16xf32>, vector<16x16xf32>, vector<16x16xf32> -> vector<16x64xf32>
    %238 = arith.addf %237, %6 : vector<16x64xf32>
    %cst_85 = arith.constant dense<0xFF800000> : vector<16xf32>
    %239 = vector.multi_reduction <maximumf>, %238, %cst_85 [1] : vector<16x64xf32> to vector<16xf32>
    %240 = vector.shape_cast %239 : vector<16xf32> to vector<16x1xf32>
    %241 = vector.broadcast %240 : vector<16x1xf32> to vector<16x64xf32>
    %242 = arith.subf %238, %241 : vector<16x64xf32>
    %243 = math.exp %242 : vector<16x64xf32>
    %cst_86 = arith.constant dense<0.000000e+00> : vector<16x64xf32>
    %244 = tpu.matmul %243, %13, %cst_86 {dimension_numbers = #tpu.dot_dimension_numbers<[1], [0], [0], [1], [0, 0, 1, 1], [], []>} : vector<16x64xf32>, vector<64x64xf32>, vector<16x64xf32> -> vector<16x64xf32>
    %245 = tpu.reciprocal %244 : vector<16x64xf32> -> vector<16x64xf32>
    %246 = arith.mulf %243, %245 : vector<16x64xf32>
    %247 = vector.extract_strided_slice %246 {offsets = [0, 0], sizes = [16, 32], strides = [1, 1]} : vector<16x64xf32> to vector<16x32xf32>
    %248 = vector.extract_strided_slice %246 {offsets = [0, 32], sizes = [16, 32], strides = [1, 1]} : vector<16x64xf32> to vector<16x32xf32>
    %249 = vector.broadcast %222 : f32 to vector<16x32xf32>
    %250 = arith.mulf %249, %248 : vector<16x32xf32>
    %251 = arith.subf %247, %250 : vector<16x32xf32>
    %252 = vector.extract_strided_slice %251 {offsets = [0, 0], sizes = [16, 16], strides = [1, 1]} : vector<16x32xf32> to vector<16x16xf32>
    %253 = vector.extract_strided_slice %221 {offsets = [0, 0], sizes = [16, 16], strides = [1, 1]} : vector<16x32xf32> to vector<16x16xf32>
    %cst_87 = arith.constant dense<0.000000e+00> : vector<16x16xf32>
    %254 = tpu.matmul %252, %253, %cst_87 {dimension_numbers = #tpu.dot_dimension_numbers<[1], [0], [0], [1], [0, 0, 1, 1], [], []>} : vector<16x16xf32>, vector<16x16xf32>, vector<16x16xf32> -> vector<16x16xf32>
    %255 = arith.mulf %254, %254 : vector<16x16xf32>
    %cst_88 = arith.constant dense<0.000000e+00> : vector<16xf32>
    %256 = vector.multi_reduction <add>, %255, %cst_88 [1] : vector<16x16xf32> to vector<16xf32>
    %257 = vector.shape_cast %256 : vector<16xf32> to vector<16x1xf32>
    %cst_89 = arith.constant 1.600000e+01 : f32
    %258 = vector.broadcast %cst_89 : f32 to vector<16x1xf32>
    %259 = arith.divf %257, %258 : vector<16x1xf32>
    %cst_90 = arith.constant 9.99999974E-6 : f32
    %260 = vector.broadcast %cst_90 : f32 to vector<16x1xf32>
    %261 = arith.addf %259, %260 : vector<16x1xf32>
    %262 = math.rsqrt %261 : vector<16x1xf32>
    %263 = vector.broadcast %262 : vector<16x1xf32> to vector<16x16xf32>
    %264 = arith.mulf %254, %263 : vector<16x16xf32>
    %265 = vector.extract_strided_slice %224 {offsets = [0, 0], sizes = [16, 128], strides = [1, 1]} : vector<32x128xf32> to vector<16x128xf32>
    %cst_91 = arith.constant dense<0.000000e+00> : vector<16x128xf32>
    %266 = tpu.matmul %264, %265, %cst_91 {dimension_numbers = #tpu.dot_dimension_numbers<[1], [0], [0], [1], [0, 0, 1, 1], [], []>} : vector<16x16xf32>, vector<16x128xf32>, vector<16x128xf32> -> vector<16x128xf32>
    %267 = vector.extract_strided_slice %251 {offsets = [0, 16], sizes = [16, 16], strides = [1, 1]} : vector<16x32xf32> to vector<16x16xf32>
    %268 = vector.extract_strided_slice %221 {offsets = [0, 16], sizes = [16, 16], strides = [1, 1]} : vector<16x32xf32> to vector<16x16xf32>
    %cst_92 = arith.constant dense<0.000000e+00> : vector<16x16xf32>
    %269 = tpu.matmul %267, %268, %cst_92 {dimension_numbers = #tpu.dot_dimension_numbers<[1], [0], [0], [1], [0, 0, 1, 1], [], []>} : vector<16x16xf32>, vector<16x16xf32>, vector<16x16xf32> -> vector<16x16xf32>
    %270 = arith.mulf %269, %269 : vector<16x16xf32>
    %cst_93 = arith.constant dense<0.000000e+00> : vector<16xf32>
    %271 = vector.multi_reduction <add>, %270, %cst_93 [1] : vector<16x16xf32> to vector<16xf32>
    %272 = vector.shape_cast %271 : vector<16xf32> to vector<16x1xf32>
    %cst_94 = arith.constant 1.600000e+01 : f32
    %273 = vector.broadcast %cst_94 : f32 to vector<16x1xf32>
    %274 = arith.divf %272, %273 : vector<16x1xf32>
    %cst_95 = arith.constant 9.99999974E-6 : f32
    %275 = vector.broadcast %cst_95 : f32 to vector<16x1xf32>
    %276 = arith.addf %274, %275 : vector<16x1xf32>
    %277 = math.rsqrt %276 : vector<16x1xf32>
    %278 = vector.broadcast %277 : vector<16x1xf32> to vector<16x16xf32>
    %279 = arith.mulf %269, %278 : vector<16x16xf32>
    %280 = vector.extract_strided_slice %224 {offsets = [16, 0], sizes = [16, 128], strides = [1, 1]} : vector<32x128xf32> to vector<16x128xf32>
    %cst_96 = arith.constant dense<0.000000e+00> : vector<16x128xf32>
    %281 = tpu.matmul %279, %280, %cst_96 {dimension_numbers = #tpu.dot_dimension_numbers<[1], [0], [0], [1], [0, 0, 1, 1], [], []>} : vector<16x16xf32>, vector<16x128xf32>, vector<16x128xf32> -> vector<16x128xf32>
    %282 = arith.addf %266, %281 : vector<16x128xf32>
    %c0_97 = arith.constant 0 : index
    %c0_98 = arith.constant 0 : index
    %283 = vector.load %arg4[%c0_97, %c0_98] : memref<16x128xf32, #tpu.memory_space<vmem>>, vector<16x128xf32>
    tpu.vector_store %arg4[%c0_97, %c0_98], %282 {strides = array<i32>} : memref<16x128xf32, #tpu.memory_space<vmem>>, vector<16x128xf32>,
    %284 = tpu.concatenate %19, %86, %153, %220 in 1 : vector<16x32xf32>, vector<16x32xf32>, vector<16x32xf32>, vector<16x32xf32> -> vector<16x128xf32>
    %c0_99 = arith.constant 0 : index
    %c0_100 = arith.constant 0 : index
    %285 = vector.load %arg5[%c0_99, %c0_100] : memref<16x128xf32, #tpu.memory_space<vmem>>, vector<16x128xf32>
    tpu.vector_store %arg5[%c0_99, %c0_100], %284 {strides = array<i32>} : memref<16x128xf32, #tpu.memory_space<vmem>>, vector<16x128xf32>,
    %286 = tpu.concatenate %20, %87, %154, %221 in 1 : vector<16x32xf32>, vector<16x32xf32>, vector<16x32xf32>, vector<16x32xf32> -> vector<16x128xf32>
    %c0_101 = arith.constant 0 : index
    %c0_102 = arith.constant 0 : index
    %287 = vector.load %arg6[%c0_101, %c0_102] : memref<16x128xf32, #tpu.memory_space<vmem>>, vector<16x128xf32>
    tpu.vector_store %arg6[%c0_101, %c0_102], %286 {strides = array<i32>} : memref<16x128xf32, #tpu.memory_space<vmem>>, vector<16x128xf32>,
    return
  }
}

</mosaic_0001>

<llo_original>
// kernel: _forward_jit.1
$region0: #{_forward_jit.1}
  #allocation0 [shape = 'u32[]', space=smem, size = 0x4, offset = 0x4, fixed_abs, tag = 'smem constant byte address 0x4 - core index']
  #allocation1 [shape = 'u32[144,128]{1,0:T(1,128)}', space=vmem, size = 0x12000, scoped, tag = 'internal scratch']
  %s0 = inlined_call_operand.vmem [shape: f32[4], index: 0, kind: input, shape index: {}]
  %s1 = inlined_call_operand.vmem [shape: f32[16,128], index: 1, kind: input, shape index: {}]
  %s2 = inlined_call_operand.hbm [shape: f32[4,128,128], index: 2, kind: input, shape index: {}]
  %s3 = inlined_call_operand.hbm [shape: f32[4,32,128], index: 3, kind: input, shape index: {}]
  %s4 = inlined_call_operand.vmem [shape: f32[16,128], index: 4, kind: output, shape index: {0}]
  %s5 = inlined_call_operand.hbm [shape: f32[16,128], index: 5, kind: output, shape index: {1}]
  %s6 = inlined_call_operand.hbm [shape: f32[16,128], index: 6, kind: output, shape index: {2}]
  %7 = xla_tuple %s4, %s5, %s6
  %s8 = sld [smem:[#allocation0]]
  $region54: #{_forward_jit.1} parent=0
    _
  %s10 = ssub.s32 1, %s8
  %s11 = scalar_select 0, %s10, %s8
  $region1: #{_forward_jit.1} parent=0
    #allocation2 [shape = 'u8[512]{0}', space=smem, size = 0x200, scoped, tag = 'input window, operand 0, single buffered']
    #allocation3 [shape = 's32[1]{0}', space=sflag, size = 0x4, scoped, tag = 'scoped memory for _forward_jit.1']
    #allocation4 [shape = 's32[1]{0}', space=sflag, size = 0x4, scoped, tag = 'scoped memory for _forward_jit.1']
    #allocation5 [shape = 's32[1]{0}', space=sflag, size = 0x4, scoped, tag = 'scoped memory for _forward_jit.1']
    #allocation6 [shape = 'u8[262144]{0}', space=vmem, size = 0x40000, scoped, tag = 'input window, operand 2, single buffered']
    #allocation7 [shape = 'u8[65536]{0}', space=vmem, size = 0x10000, scoped, tag = 'input window, operand 3, single buffered']
    #allocation8 [shape = 's32[1]{0}', space=sflag, size = 0x4, scoped, tag = 'scoped memory for _forward_jit.1']
    #allocation9 [shape = 'u8[8192]{0}', space=vmem, size = 0x2000, scoped, tag = 'output window, operand 1, single buffered']
    #allocation10 [shape = 'u8[8192]{0}', space=vmem, size = 0x2000, scoped, tag = 'output window, operand 2, single buffered']
    #allocation11 [shape = 's32[1]{0}', space=sflag, size = 0x4, scoped, tag = 'scoped memory for _forward_jit.1']
    %12 = vsyncpa [#allocation5], 0
    %13 = vsyncpa [#allocation3], 0
    %14 = vsyncpa [#allocation8], 0
    %15 = vsyncpa [#allocation4], 0
    %16 = vsyncpa [#allocation11], 0
    // Predicated region
    $region2: #{_forward_jit.1} parent=1 // pred_check
      _
    $region3: #{_forward_jit.1} parent=1 // pred_check_branch
      %18 = sbr.rel (0) target = $region5
    $region4: #{_forward_jit.1} parent=1 // pred_region
      %s20 = ssub.s32 16, 16
      %21 = vsyncadd [#allocation5], %s20
      %s23 = sshll.u32 %s0, 4
      %s24 = int_to_ptr.vmem [resolvable:$true] %s23
      %26 = dma.vmem_to_smem %s24, 16, [#allocation2], [#allocation5]
    $region5: #{_forward_jit.1} parent=1 // pred_fallthru
      _
    // Predicated region
    $region6: #{_forward_jit.1} parent=1 // pred_check
      _
    $region7: #{_forward_jit.1} parent=1 // pred_check_branch
      %28 = sbr.rel (0) target = $region9
    $region8: #{_forward_jit.1} parent=1 // pred_region
      _
    $region9: #{_forward_jit.1} parent=1 // pred_fallthru
      _
    // Predicated region
    $region10: #{_forward_jit.1} parent=1 // pred_check
      _
    $region11: #{_forward_jit.1} parent=1 // pred_check_branch
      %30 = sbr.rel (0) target = $region13
    $region12: #{_forward_jit.1} parent=1 // pred_region
      %s32 = ssub.s32 8192, 8192
      %33 = vsyncadd [#allocation3], %s32
      %s34 = sshll.u32 [#allocation6], 4
      %s35 = int_to_ptr.vmem [resolvable:$true] %s34
      %40 = dma.hbm_to_vmem [thread:$0]  %s2, 8192, %s35, [#allocation3], 128, 128, 8
    $region13: #{_forward_jit.1} parent=1 // pred_fallthru
      _
    // Predicated region
    $region14: #{_forward_jit.1} parent=1 // pred_check
      _
    $region15: #{_forward_jit.1} parent=1 // pred_check_branch
      %42 = sbr.rel (0) target = $region17
    $region16: #{_forward_jit.1} parent=1 // pred_region
      %s44 = ssub.s32 2048, 2048
      %45 = vsyncadd [#allocation8], %s44
      %s46 = sshll.u32 [#allocation7], 4
      %s47 = int_to_ptr.vmem [resolvable:$true] %s46
      %52 = dma.hbm_to_vmem [thread:$0]  %s3, 2048, %s47, [#allocation8], 128, 128, 8
    $region17: #{_forward_jit.1} parent=1 // pred_fallthru
      _
    // Predicated region
    $region18: #{_forward_jit.1} parent=1 // pred_check
      _
    $region19: #{_forward_jit.1} parent=1 // pred_check_branch
      %54 = sbr.rel (0) target = $region21
    $region20: #{_forward_jit.1} parent=1 // pred_region
      %55 = dma.done [#allocation5], 16
    $region21: #{_forward_jit.1} parent=1 // pred_fallthru
      _
    // Predicated region
    $region22: #{_forward_jit.1} parent=1 // pred_check
      _
    $region23: #{_forward_jit.1} parent=1 // pred_check_branch
      %57 = sbr.rel (0) target = $region25
    $region24: #{_forward_jit.1} parent=1 // pred_region
      %58 = dma.done [#allocation3], 8192
    $region25: #{_forward_jit.1} parent=1 // pred_fallthru
      _
    // Predicated region
    $region26: #{_forward_jit.1} parent=1 // pred_check
      _
    $region27: #{_forward_jit.1} parent=1 // pred_check_branch
      %60 = sbr.rel (0) target = $region29
    $region28: #{_forward_jit.1} parent=1 // pred_region
      %61 = dma.done [#allocation8], 2048
    $region29: #{_forward_jit.1} parent=1 // pred_fallthru
      _
    %62 = sfence
    %v63 = vlaneseq
    %v64 = vshrl.u32 %v63, 7
    %v65 = vadd.s32 %v64, 8
    %v66 = vlaneseq
    %v67 = vand.u32 %v66, 127
    %vm68 = vcmp.le.s32.totalorder %v67, %v64
    %vm69 = vcmp.le.s32.totalorder %v67, %v65
    %v70 = vsel %vm68, 0.0, -1e+30
    %v71 = vsel %vm69, 0.0, -1e+30
    %74 = vrot.lane.b32.xlu0 %v70, 16
    %v75 = vpop.permute.xlu0 %74
    %76 = vrot.lane.b32.xlu0 %v71, 16
    %v77 = vpop.permute.xlu0 %76
    %80 = vrot.lane.b32.xlu0 %v70, 32
    %v81 = vpop.permute.xlu0 %80
    %82 = vrot.lane.b32.xlu0 %v71, 32
    %v83 = vpop.permute.xlu0 %82
    %86 = vrot.lane.b32.xlu0 %v70, 48
    %v87 = vpop.permute.xlu0 %86
    %88 = vrot.lane.b32.xlu0 %v71, 48
    %v89 = vpop.permute.xlu0 %88
    %vm92 = vcmask 130048
    %v93 = vsel %vm92, %v70, %v75
    %v94 = vsel %vm92, %v71, %v77
    %vm95 = vcmask 261120
    %v96 = vsel %vm95, %v93, %v81
    %v97 = vsel %vm95, %v94, %v83
    %vm98 = vcmask 392192
    %v99 = vsel %vm98, %v96, %v87
    %v100 = vsel %vm98, %v97, %v89
    %v101 = vsel %vm92, 1.0, 0.0
    %v102 = vsel %vm95, %v101, 0.0
    %v103 = vsel %vm98, %v102, 0.0
    %v104 = vsel %vm92, 0.0, 1.0
    %v105 = vsel %vm95, %v104, 0.0
    %v106 = vsel %vm98, %v105, 0.0
    %v107 = vsel %vm95, 0.0, 1.0
    %v108 = vsel %vm98, %v107, 0.0
    %v109 = vsel %vm98, 0.0, 1.0
    %v110 = vld [vmem:[%s1] sm:$0xff]
    %v111 = vld [vmem:[%s1 + $0x8] sm:$0xff]
    %v112 = vld [vmem:[#allocation6] sm:$0xff]
    %v113 = vld [vmem:[#allocation6 + $0x8] sm:$0xff]
    %v114 = vld [vmem:[#allocation6 + $0x10] sm:$0xff]
    %v115 = vld [vmem:[#allocation6 + $0x18] sm:$0xff]
    %v116 = vld [vmem:[#allocation6 + $0x20] sm:$0xff]
    %v117 = vld [vmem:[#allocation6 + $0x28] sm:$0xff]
    %v118 = vld [vmem:[#allocation6 + $0x30] sm:$0xff]
    %v119 = vld [vmem:[#allocation6 + $0x38] sm:$0xff]
    %v120 = vld [vmem:[#allocation6 + $0x40] sm:$0xff]
    %v121 = vld [vmem:[#allocation6 + $0x48] sm:$0xff]
    %v122 = vld [vmem:[#allocation6 + $0x50] sm:$0xff]
    %v123 = vld [vmem:[#allocation6 + $0x58] sm:$0xff]
    %v124 = vld [vmem:[#allocation6 + $0x60] sm:$0xff]
    %v125 = vld [vmem:[#allocation6 + $0x68] sm:$0xff]
    %v126 = vld [vmem:[#allocation6 + $0x70] sm:$0xff]
    %v127 = vld [vmem:[#allocation6 + $0x78] sm:$0xff]
    %128 = vmatprep.subr.mxu0 0.0
    %129 = vmatpush1.msra.mxu0 %v112
    %130 = vmatprep.subr.mxu0 0.0
    %131 = vmatpush1.msra.mxu0 %v113
    %132 = vmatprep.subr.mxu0 0.0
    %133 = vmatpush1.msra.mxu0 %v114
    %134 = vmatprep.subr.mxu0 0.0
    %135 = vmatpush1.msra.mxu0 %v115
    %136 = vmatprep.subr.mxu0 0.0
    %137 = vmatpush1.msra.mxu0 %v116
    %138 = vmatprep.subr.mxu0 0.0
    %139 = vmatpush1.msra.mxu0 %v117
    %140 = vmatprep.subr.mxu0 0.0
    %141 = vmatpush1.msra.mxu0 %v118
    %142 = vmatprep.subr.mxu0 0.0
    %143 = vmatpush1.msra.mxu0 %v119
    %144 = vmatprep.subr.mxu0 0.0
    %145 = vmatpush1.msra.mxu0 %v120
    %146 = vmatprep.subr.mxu0 0.0
    %147 = vmatpush1.msra.mxu0 %v121
    %148 = vmatprep.subr.mxu0 0.0
    %149 = vmatpush1.msra.mxu0 %v122
    %150 = vmatprep.subr.mxu0 0.0
    %151 = vmatpush1.msra.mxu0 %v123
    %152 = vmatprep.subr.mxu0 0.0
    %153 = vmatpush1.msra.mxu0 %v124
    %154 = vmatprep.subr.mxu0 0.0
    %155 = vmatpush1.msra.mxu0 %v125
    %156 = vmatprep.subr.mxu0 0.0
    %157 = vmatpush1.msra.mxu0 %v126
    %158 = vmatprep.subr.mxu0 0.0
    %159 = vmatpush1.msra.mxu0 %v127
    %160 = vmatprep.subr.mxu0 0.0
    %161 = vmatpush1.msra.mxu0 0.0
    %162 = vmatprep.subr.mxu0 0.0
    %163 = vmatpush1.msra.mxu0 0.0
    %164 = vmatprep.subr.mxu0 0.0
    %165 = vmatpush1.msra.mxu0 0.0
    %166 = vmatprep.subr.mxu0 0.0
    %167 = vmatpush1.msra.mxu0 0.0
    %168 = vmatprep.subr.mxu0 0.0
    %169 = vmatpush1.msra.mxu0 0.0
    %170 = vmatprep.subr.mxu0 0.0
    %171 = vmatpush1.msra.mxu0 0.0
    %172 = vmatprep.subr.mxu0 0.0
    %173 = vmatpush1.msra.mxu0 0.0
    %174 = vmatprep.subr.mxu0 0.0
    %175 = vmatpush1.msra.mxu0 0.0
    %176 = vmatprep.subr.mxu0 0.0
    %177 = vmatpush1.msra.mxu0 0.0
    %178 = vmatprep.subr.mxu0 0.0
    %179 = vmatpush1.msra.mxu0 0.0
    %180 = vmatprep.subr.mxu0 0.0
    %181 = vmatpush1.msra.mxu0 0.0
    %182 = vmatprep.subr.mxu0 0.0
    %183 = vmatpush1.msra.mxu0 0.0
    %184 = vmatprep.subr.mxu0 0.0
    %185 = vmatpush1.msra.mxu0 0.0
    %186 = vmatprep.subr.mxu0 0.0
    %187 = vmatpush1.msra.mxu0 0.0
    %188 = vmatprep.subr.mxu0 0.0
    %189 = vmatpush1.msra.mxu0 0.0
    %190 = vmatprep.subr.mxu0 0.0
    %191 = vmatpush1.msra.mxu0 0.0
    %192 = vmatprep.mubr.f32.mxu0 0.0
    %193 = vmatmul.mubr.f32.gmra.mrb[0].mxu0 %v110
    %v194 = vpop.f32.mrb[0].mxu0
    %v195 = vadd.f32 0.0, %v194
    %v196 = vpop.f32.mrb[0].mxu0
    %197 = vmatprep.mubr.f32.mxu0 0.0
    %198 = vmatmul.mubr.f32.gmra.mrb[0].mxu0 %v111
    %v199 = vpop.f32.mrb[0].mxu0
    %v200 = vadd.f32 0.0, %v199
    %v201 = vpop.f32.mrb[0].mxu0
    %202 = vdwg.mxu0
    %s203 = sld [smem:[#allocation2]]
    %v204 = vld [vmem:[#allocation7] sm:$0xff]
    %v205 = vld [vmem:[#allocation7 + $0x8] sm:$0xff]
    %v206 = vld [vmem:[#allocation7 + $0x10] sm:$0xff]
    %v207 = vld [vmem:[#allocation7 + $0x18] sm:$0xff]
    %210 = vrot.lane.b32.xlu0 %v195, 96
    %v211 = vpop.permute.xlu0 %210
    %212 = vrot.lane.b32.xlu0 %v200, 96
    %v213 = vpop.permute.xlu0 %212
    %vm214 = vcmask 64512
    %v215 = vsel %vm214, %v195, 0
    %v217 = vsel %vm214, %v200, 0
    %v219 = vsel %vm214, %v211, 0
    %v221 = vsel %vm214, %v213, 0
    %223 = vmatprep.subr.mxu0 0.0
    %224 = vmatpush1.xpose.msra.mxu0 %v219
    %225 = vmatprep.subr.mxu0 0.0
    %226 = vmatpush1.xpose.msra.mxu0 %v221
    %227 = vmatprep.subr.mxu0 0.0
    %228 = vmatpush1.xpose.msra.mxu0 0.0
    %229 = vmatprep.subr.mxu0 0.0
    %230 = vmatpush1.xpose.msra.mxu0 0.0
    %231 = vmatprep.subr.mxu0 0.0
    %232 = vmatpush1.xpose.msra.mxu0 0.0
    %233 = vmatprep.subr.mxu0 0.0
    %234 = vmatpush1.xpose.msra.mxu0 0.0
    %235 = vmatprep.subr.mxu0 0.0
    %236 = vmatpush1.xpose.msra.mxu0 0.0
    %237 = vmatprep.subr.mxu0 0.0
    %238 = vmatpush1.xpose.msra.mxu0 0.0
    %239 = vmatprep.subr.mxu0 0.0
    %240 = vmatpush1.xpose.msra.mxu0 0.0
    %241 = vmatprep.subr.mxu0 0.0
    %242 = vmatpush1.xpose.msra.mxu0 0.0
    %243 = vmatprep.subr.mxu0 0.0
    %244 = vmatpush1.xpose.msra.mxu0 0.0
    %245 = vmatprep.subr.mxu0 0.0
    %246 = vmatpush1.xpose.msra.mxu0 0.0
    %247 = vmatprep.subr.mxu0 0.0
    %248 = vmatpush1.xpose.msra.mxu0 0.0
    %249 = vmatprep.subr.mxu0 0.0
    %250 = vmatpush1.xpose.msra.mxu0 0.0
    %251 = vmatprep.subr.mxu0 0.0
    %252 = vmatpush1.xpose.msra.mxu0 0.0
    %253 = vmatprep.subr.mxu0 0.0
    %254 = vmatpush1.xpose.msra.mxu0 0.0
    %255 = vmatprep.subr.mxu0 0.0
    %256 = vmatpush1.xpose.msra.mxu0 0.0
    %257 = vmatprep.subr.mxu0 0.0
    %258 = vmatpush1.xpose.msra.mxu0 0.0
    %259 = vmatprep.subr.mxu0 0.0
    %260 = vmatpush1.xpose.msra.mxu0 0.0
    %261 = vmatprep.subr.mxu0 0.0
    %262 = vmatpush1.xpose.msra.mxu0 0.0
    %263 = vmatprep.subr.mxu0 0.0
    %264 = vmatpush1.xpose.msra.mxu0 0.0
    %265 = vmatprep.subr.mxu0 0.0
    %266 = vmatpush1.xpose.msra.mxu0 0.0
    %267 = vmatprep.subr.mxu0 0.0
    %268 = vmatpush1.xpose.msra.mxu0 0.0
    %269 = vmatprep.subr.mxu0 0.0
    %270 = vmatpush1.xpose.msra.mxu0 0.0
    %271 = vmatprep.subr.mxu0 0.0
    %272 = vmatpush1.xpose.msra.mxu0 0.0
    %273 = vmatprep.subr.mxu0 0.0
    %274 = vmatpush1.xpose.msra.mxu0 0.0
    %275 = vmatprep.subr.mxu0 0.0
    %276 = vmatpush1.xpose.msra.mxu0 0.0
    %277 = vmatprep.subr.mxu0 0.0
    %278 = vmatpush1.xpose.msra.mxu0 0.0
    %279 = vmatprep.subr.mxu0 0.0
    %280 = vmatpush1.xpose.msra.mxu0 0.0
    %281 = vmatprep.subr.mxu0 0.0
    %282 = vmatpush1.xpose.msra.mxu0 0.0
    %283 = vmatprep.subr.mxu0 0.0
    %284 = vmatpush1.xpose.msra.mxu0 0.0
    %285 = vmatprep.subr.mxu0 0.0
    %286 = vmatpush1.xpose.msra.mxu0 0.0
    %287 = vmatprep.mubr.f32.mxu0 0.0
    %288 = vmatmul.mubr.f32.gmra.mrb[0].mxu0 %v215
    %v289 = vpop.f32.mrb[0].mxu0
    %v290 = vadd.f32 0.0, %v289
    %v291 = vpop.f32.mrb[0].mxu0
    %292 = vmatprep.mubr.f32.mxu0 0.0
    %293 = vmatmul.mubr.f32.gmra.mrb[0].mxu0 %v217
    %v294 = vpop.f32.mrb[0].mxu0
    %v295 = vadd.f32 0.0, %v294
    %v296 = vpop.f32.mrb[0].mxu0
    %297 = vdwg.mxu0
    %298 = vrot.lane.b32.xlu0 %v195, 120
    %v299 = vpop.permute.xlu0 %298
    %300 = vrot.lane.b32.xlu0 %v200, 120
    %v301 = vpop.permute.xlu0 %300
    %302 = vrot.lane.b32.xlu0 %v195, 88
    %v303 = vpop.permute.xlu0 %302
    %304 = vrot.lane.b32.xlu0 %v200, 88
    %v305 = vpop.permute.xlu0 %304
    %v306 = vsel %vm214, %v299, 0
    %v308 = vsel %vm214, %v301, 0
    %v310 = vsel %vm214, %v303, 0
    %v312 = vsel %vm214, %v305, 0
    %314 = vmatprep.subr.mxu0 0.0
    %315 = vmatpush1.xpose.msra.mxu0 %v310
    %316 = vmatprep.subr.mxu0 0.0
    %317 = vmatpush1.xpose.msra.mxu0 %v312
    %318 = vmatprep.subr.mxu0 0.0
    %319 = vmatpush1.xpose.msra.mxu0 0.0
    %320 = vmatprep.subr.mxu0 0.0
    %321 = vmatpush1.xpose.msra.mxu0 0.0
    %322 = vmatprep.subr.mxu0 0.0
    %323 = vmatpush1.xpose.msra.mxu0 0.0
    %324 = vmatprep.subr.mxu0 0.0
    %325 = vmatpush1.xpose.msra.mxu0 0.0
    %326 = vmatprep.subr.mxu0 0.0
    %327 = vmatpush1.xpose.msra.mxu0 0.0
    %328 = vmatprep.subr.mxu0 0.0
    %329 = vmatpush1.xpose.msra.mxu0 0.0
    %330 = vmatprep.subr.mxu0 0.0
    %331 = vmatpush1.xpose.msra.mxu0 0.0
    %332 = vmatprep.subr.mxu0 0.0
    %333 = vmatpush1.xpose.msra.mxu0 0.0
    %334 = vmatprep.subr.mxu0 0.0
    %335 = vmatpush1.xpose.msra.mxu0 0.0
    %336 = vmatprep.subr.mxu0 0.0
    %337 = vmatpush1.xpose.msra.mxu0 0.0
    %338 = vmatprep.subr.mxu0 0.0
    %339 = vmatpush1.xpose.msra.mxu0 0.0
    %340 = vmatprep.subr.mxu0 0.0
    %341 = vmatpush1.xpose.msra.mxu0 0.0
    %342 = vmatprep.subr.mxu0 0.0
    %343 = vmatpush1.xpose.msra.mxu0 0.0
    %344 = vmatprep.subr.mxu0 0.0
    %345 = vmatpush1.xpose.msra.mxu0 0.0
    %346 = vmatprep.subr.mxu0 0.0
    %347 = vmatpush1.xpose.msra.mxu0 0.0
    %348 = vmatprep.subr.mxu0 0.0
    %349 = vmatpush1.xpose.msra.mxu0 0.0
    %350 = vmatprep.subr.mxu0 0.0
    %351 = vmatpush1.xpose.msra.mxu0 0.0
    %352 = vmatprep.subr.mxu0 0.0
    %353 = vmatpush1.xpose.msra.mxu0 0.0
    %354 = vmatprep.subr.mxu0 0.0
    %355 = vmatpush1.xpose.msra.mxu0 0.0
    %356 = vmatprep.subr.mxu0 0.0
    %357 = vmatpush1.xpose.msra.mxu0 0.0
    %358 = vmatprep.subr.mxu0 0.0
    %359 = vmatpush1.xpose.msra.mxu0 0.0
    %360 = vmatprep.subr.mxu0 0.0
    %361 = vmatpush1.xpose.msra.mxu0 0.0
    %362 = vmatprep.subr.mxu0 0.0
    %363 = vmatpush1.xpose.msra.mxu0 0.0
    %364 = vmatprep.subr.mxu0 0.0
    %365 = vmatpush1.xpose.msra.mxu0 0.0
    %366 = vmatprep.subr.mxu0 0.0
    %367 = vmatpush1.xpose.msra.mxu0 0.0
    %368 = vmatprep.subr.mxu0 0.0
    %369 = vmatpush1.xpose.msra.mxu0 0.0
    %370 = vmatprep.subr.mxu0 0.0
    %371 = vmatpush1.xpose.msra.mxu0 0.0
    %372 = vmatprep.subr.mxu0 0.0
    %373 = vmatpush1.xpose.msra.mxu0 0.0
    %374 = vmatprep.subr.mxu0 0.0
    %375 = vmatpush1.xpose.msra.mxu0 0.0
    %376 = vmatprep.subr.mxu0 0.0
    %377 = vmatpush1.xpose.msra.mxu0 0.0
    %378 = vmatprep.mubr.f32.mxu0 0.0
    %379 = vmatmul.mubr.f32.gmra.mrb[0].mxu0 %v306
    %v380 = vpop.f32.mrb[0].mxu0
    %v381 = vadd.f32 0.0, %v380
    %v382 = vpop.f32.mrb[0].mxu0
    %383 = vmatprep.mubr.f32.mxu0 0.0
    %384 = vmatmul.mubr.f32.gmra.mrb[0].mxu0 %v308
    %v385 = vpop.f32.mrb[0].mxu0
    %v386 = vadd.f32 0.0, %v385
    %v387 = vpop.f32.mrb[0].mxu0
    %388 = vdwg.mxu0
    %389 = vrot.lane.b32.xlu0 %v195, 112
    %v390 = vpop.permute.xlu0 %389
    %391 = vrot.lane.b32.xlu0 %v200, 112
    %v392 = vpop.permute.xlu0 %391
    %393 = vrot.lane.b32.xlu0 %v195, 80
    %v394 = vpop.permute.xlu0 %393
    %395 = vrot.lane.b32.xlu0 %v200, 80
    %v396 = vpop.permute.xlu0 %395
    %v397 = vsel %vm214, %v390, 0
    %v399 = vsel %vm214, %v392, 0
    %v401 = vsel %vm214, %v394, 0
    %v403 = vsel %vm214, %v396, 0
    %405 = vmatprep.subr.mxu0 0.0
    %406 = vmatpush1.xpose.msra.mxu0 %v401
    %407 = vmatprep.subr.mxu0 0.0
    %408 = vmatpush1.xpose.msra.mxu0 %v403
    %409 = vmatprep.subr.mxu0 0.0
    %410 = vmatpush1.xpose.msra.mxu0 0.0
    %411 = vmatprep.subr.mxu0 0.0
    %412 = vmatpush1.xpose.msra.mxu0 0.0
    %413 = vmatprep.subr.mxu0 0.0
    %414 = vmatpush1.xpose.msra.mxu0 0.0
    %415 = vmatprep.subr.mxu0 0.0
    %416 = vmatpush1.xpose.msra.mxu0 0.0
    %417 = vmatprep.subr.mxu0 0.0
    %418 = vmatpush1.xpose.msra.mxu0 0.0
    %419 = vmatprep.subr.mxu0 0.0
    %420 = vmatpush1.xpose.msra.mxu0 0.0
    %421 = vmatprep.subr.mxu0 0.0
    %422 = vmatpush1.xpose.msra.mxu0 0.0
    %423 = vmatprep.subr.mxu0 0.0
    %424 = vmatpush1.xpose.msra.mxu0 0.0
    %425 = vmatprep.subr.mxu0 0.0
    %426 = vmatpush1.xpose.msra.mxu0 0.0
    %427 = vmatprep.subr.mxu0 0.0
    %428 = vmatpush1.xpose.msra.mxu0 0.0
    %429 = vmatprep.subr.mxu0 0.0
    %430 = vmatpush1.xpose.msra.mxu0 0.0
    %431 = vmatprep.subr.mxu0 0.0
    %432 = vmatpush1.xpose.msra.mxu0 0.0
    %433 = vmatprep.subr.mxu0 0.0
    %434 = vmatpush1.xpose.msra.mxu0 0.0
    %435 = vmatprep.subr.mxu0 0.0
    %436 = vmatpush1.xpose.msra.mxu0 0.0
    %437 = vmatprep.subr.mxu0 0.0
    %438 = vmatpush1.xpose.msra.mxu0 0.0
    %439 = vmatprep.subr.mxu0 0.0
    %440 = vmatpush1.xpose.msra.mxu0 0.0
    %441 = vmatprep.subr.mxu0 0.0
    %442 = vmatpush1.xpose.msra.mxu0 0.0
    %443 = vmatprep.subr.mxu0 0.0
    %444 = vmatpush1.xpose.msra.mxu0 0.0
    %445 = vmatprep.subr.mxu0 0.0
    %446 = vmatpush1.xpose.msra.mxu0 0.0
    %447 = vmatprep.subr.mxu0 0.0
    %448 = vmatpush1.xpose.msra.mxu0 0.0
    %449 = vmatprep.subr.mxu0 0.0
    %450 = vmatpush1.xpose.msra.mxu0 0.0
    %451 = vmatprep.subr.mxu0 0.0
    %452 = vmatpush1.xpose.msra.mxu0 0.0
    %453 = vmatprep.subr.mxu0 0.0
    %454 = vmatpush1.xpose.msra.mxu0 0.0
    %455 = vmatprep.subr.mxu0 0.0
    %456 = vmatpush1.xpose.msra.mxu0 0.0
    %457 = vmatprep.subr.mxu0 0.0
    %458 = vmatpush1.xpose.msra.mxu0 0.0
    %459 = vmatprep.subr.mxu0 0.0
    %460 = vmatpush1.xpose.msra.mxu0 0.0
    %461 = vmatprep.subr.mxu0 0.0
    %462 = vmatpush1.xpose.msra.mxu0 0.0
    %463 = vmatprep.subr.mxu0 0.0
    %464 = vmatpush1.xpose.msra.mxu0 0.0
    %465 = vmatprep.subr.mxu0 0.0
    %466 = vmatpush1.xpose.msra.mxu0 0.0
    %467 = vmatprep.subr.mxu0 0.0
    %468 = vmatpush1.xpose.msra.mxu0 0.0
    %469 = vmatprep.mubr.f32.mxu0 0.0
    %470 = vmatmul.mubr.f32.gmra.mrb[0].mxu0 %v397
    %v471 = vpop.f32.mrb[0].mxu0
    %v472 = vadd.f32 0.0, %v471
    %v473 = vpop.f32.mrb[0].mxu0
    %474 = vmatprep.mubr.f32.mxu0 0.0
    %475 = vmatmul.mubr.f32.gmra.mrb[0].mxu0 %v399
    %v476 = vpop.f32.mrb[0].mxu0
    %v477 = vadd.f32 0.0, %v476
    %v478 = vpop.f32.mrb[0].mxu0
    %479 = vdwg.mxu0
    %480 = vrot.lane.b32.xlu0 %v195, 104
    %v481 = vpop.permute.xlu0 %480
    %482 = vrot.lane.b32.xlu0 %v200, 104
    %v483 = vpop.permute.xlu0 %482
    %484 = vrot.lane.b32.xlu0 %v195, 72
    %v485 = vpop.permute.xlu0 %484
    %486 = vrot.lane.b32.xlu0 %v200, 72
    %v487 = vpop.permute.xlu0 %486
    %v488 = vsel %vm214, %v481, 0
    %v490 = vsel %vm214, %v483, 0
    %v492 = vsel %vm214, %v485, 0
    %v494 = vsel %vm214, %v487, 0
    %496 = vmatprep.subr.mxu0 0.0
    %497 = vmatpush1.xpose.msra.mxu0 %v492
    %498 = vmatprep.subr.mxu0 0.0
    %499 = vmatpush1.xpose.msra.mxu0 %v494
    %500 = vmatprep.subr.mxu0 0.0
    %501 = vmatpush1.xpose.msra.mxu0 0.0
    %502 = vmatprep.subr.mxu0 0.0
    %503 = vmatpush1.xpose.msra.mxu0 0.0
    %504 = vmatprep.subr.mxu0 0.0
    %505 = vmatpush1.xpose.msra.mxu0 0.0
    %506 = vmatprep.subr.mxu0 0.0
    %507 = vmatpush1.xpose.msra.mxu0 0.0
    %508 = vmatprep.subr.mxu0 0.0
    %509 = vmatpush1.xpose.msra.mxu0 0.0
    %510 = vmatprep.subr.mxu0 0.0
    %511 = vmatpush1.xpose.msra.mxu0 0.0
    %512 = vmatprep.subr.mxu0 0.0
    %513 = vmatpush1.xpose.msra.mxu0 0.0
    %514 = vmatprep.subr.mxu0 0.0
    %515 = vmatpush1.xpose.msra.mxu0 0.0
    %516 = vmatprep.subr.mxu0 0.0
    %517 = vmatpush1.xpose.msra.mxu0 0.0
    %518 = vmatprep.subr.mxu0 0.0
    %519 = vmatpush1.xpose.msra.mxu0 0.0
    %520 = vmatprep.subr.mxu0 0.0
    %521 = vmatpush1.xpose.msra.mxu0 0.0
    %522 = vmatprep.subr.mxu0 0.0
    %523 = vmatpush1.xpose.msra.mxu0 0.0
    %524 = vmatprep.subr.mxu0 0.0
    %525 = vmatpush1.xpose.msra.mxu0 0.0
    %526 = vmatprep.subr.mxu0 0.0
    %527 = vmatpush1.xpose.msra.mxu0 0.0
    %528 = vmatprep.subr.mxu0 0.0
    %529 = vmatpush1.xpose.msra.mxu0 0.0
    %530 = vmatprep.subr.mxu0 0.0
    %531 = vmatpush1.xpose.msra.mxu0 0.0
    %532 = vmatprep.subr.mxu0 0.0
    %533 = vmatpush1.xpose.msra.mxu0 0.0
    %534 = vmatprep.subr.mxu0 0.0
    %535 = vmatpush1.xpose.msra.mxu0 0.0
    %536 = vmatprep.subr.mxu0 0.0
    %537 = vmatpush1.xpose.msra.mxu0 0.0
    %538 = vmatprep.subr.mxu0 0.0
    %539 = vmatpush1.xpose.msra.mxu0 0.0
    %540 = vmatprep.subr.mxu0 0.0
    %541 = vmatpush1.xpose.msra.mxu0 0.0
    %542 = vmatprep.subr.mxu0 0.0
    %543 = vmatpush1.xpose.msra.mxu0 0.0
    %544 = vmatprep.subr.mxu0 0.0
    %545 = vmatpush1.xpose.msra.mxu0 0.0
    %546 = vmatprep.subr.mxu0 0.0
    %547 = vmatpush1.xpose.msra.mxu0 0.0
    %548 = vmatprep.subr.mxu0 0.0
    %549 = vmatpush1.xpose.msra.mxu0 0.0
    %550 = vmatprep.subr.mxu0 0.0
    %551 = vmatpush1.xpose.msra.mxu0 0.0
    %552 = vmatprep.subr.mxu0 0.0
    %553 = vmatpush1.xpose.msra.mxu0 0.0
    %554 = vmatprep.subr.mxu0 0.0
    %555 = vmatpush1.xpose.msra.mxu0 0.0
    %556 = vmatprep.subr.mxu0 0.0
    %557 = vmatpush1.xpose.msra.mxu0 0.0
    %558 = vmatprep.subr.mxu0 0.0
    %559 = vmatpush1.xpose.msra.mxu0 0.0
    %560 = vmatprep.mubr.f32.mxu0 0.0
    %561 = vmatmul.mubr.f32.gmra.mrb[0].mxu0 %v488
    %v562 = vpop.f32.mrb[0].mxu0
    %v563 = vadd.f32 0.0, %v562
    %v564 = vpop.f32.mrb[0].mxu0
    %565 = vmatprep.mubr.f32.mxu0 0.0
    %566 = vmatmul.mubr.f32.gmra.mrb[0].mxu0 %v490
    %v567 = vpop.f32.mrb[0].mxu0
    %v568 = vadd.f32 0.0, %v567
    %v569 = vpop.f32.mrb[0].mxu0
    %570 = vdwg.mxu0
    %573 = vrot.lane.b32.xlu0 %v472, 16
    %v574 = vpop.permute.xlu0 %573
    %575 = vrot.lane.b32.xlu0 %v477, 16
    %v576 = vpop.permute.xlu0 %575
    %581 = vrot.lane.b32.xlu0 %v381, 32
    %v582 = vpop.permute.xlu0 %581
    %583 = vrot.lane.b32.xlu0 %v386, 32
    %v584 = vpop.permute.xlu0 %583
    %589 = vrot.lane.b32.xlu0 %v563, 48
    %v590 = vpop.permute.xlu0 %589
    %591 = vrot.lane.b32.xlu0 %v568, 48
    %v592 = vpop.permute.xlu0 %591
    %v595 = vsel %vm92, %v290, %v574
    %v596 = vsel %vm92, %v295, %v576
    %v597 = vsel %vm95, %v595, %v582
    %v598 = vsel %vm95, %v596, %v584
    %v599 = vsel %vm98, %v597, %v590
    %v600 = vsel %vm98, %v598, %v592
    %v601 = vadd.f32 %v599, %v99
    %v602 = vadd.f32 %v600, %v100
    %vm603 = vcmask 523264
    %v604 = vsel %vm603, %v601, -inf
    %605 = vmax.xlane.f32.xlu0 %v604
    %v606 = vpop.xlane.xlu0 %605
    %v607 = vsel %vm603, %v602, -inf
    %608 = vmax.xlane.f32.xlu0 %v607
    %v609 = vpop.xlane.xlu0 %608
    %v610 = vsub.f32 %v601, %v606
    %v611 = vsub.f32 %v602, %v609
    %v612 = vmul.f32 %v610, 1.442695
    %v613 = vpow.pop %v612
    %v614 = vmul.f32 %v611, 1.442695
    %v615 = vpow.pop %v614
    %v617 = vsel %vm603, %v613, 0
    %v620 = vsel %vm603, %v615, 0
    %622 = vmatprep.subr.mxu0 0.0
    %623 = vmatpush1.msra.mxu0 %v103
    %624 = vmatprep.subr.mxu0 0.0
    %625 = vmatpush1.msra.mxu0 %v103
    %626 = vmatprep.subr.mxu0 0.0
    %627 = vmatpush1.msra.mxu0 %v106
    %628 = vmatprep.subr.mxu0 0.0
    %629 = vmatpush1.msra.mxu0 %v106
    %630 = vmatprep.subr.mxu0 0.0
    %631 = vmatpush1.msra.mxu0 %v108
    %632 = vmatprep.subr.mxu0 0.0
    %633 = vmatpush1.msra.mxu0 %v108
    %634 = vmatprep.subr.mxu0 0.0
    %635 = vmatpush1.msra.mxu0 %v109
    %636 = vmatprep.subr.mxu0 0.0
    %637 = vmatpush1.msra.mxu0 %v109
    %638 = vmatprep.subr.mxu0 0.0
    %639 = vmatpush1.msra.mxu0 0.0
    %640 = vmatprep.subr.mxu0 0.0
    %641 = vmatpush1.msra.mxu0 0.0
    %642 = vmatprep.subr.mxu0 0.0
    %643 = vmatpush1.msra.mxu0 0.0
    %644 = vmatprep.subr.mxu0 0.0
    %645 = vmatpush1.msra.mxu0 0.0
    %646 = vmatprep.subr.mxu0 0.0
    %647 = vmatpush1.msra.mxu0 0.0
    %648 = vmatprep.subr.mxu0 0.0
    %649 = vmatpush1.msra.mxu0 0.0
    %650 = vmatprep.subr.mxu0 0.0
    %651 = vmatpush1.msra.mxu0 0.0
    %652 = vmatprep.subr.mxu0 0.0
    %653 = vmatpush1.msra.mxu0 0.0
    %654 = vmatprep.subr.mxu0 0.0
    %655 = vmatpush1.msra.mxu0 0.0
    %656 = vmatprep.subr.mxu0 0.0
    %657 = vmatpush1.msra.mxu0 0.0
    %658 = vmatprep.subr.mxu0 0.0
    %659 = vmatpush1.msra.mxu0 0.0
    %660 = vmatprep.subr.mxu0 0.0
    %661 = vmatpush1.msra.mxu0 0.0
    %662 = vmatprep.subr.mxu0 0.0
    %663 = vmatpush1.msra.mxu0 0.0
    %664 = vmatprep.subr.mxu0 0.0
    %665 = vmatpush1.msra.mxu0 0.0
    %666 = vmatprep.subr.mxu0 0.0
    %667 = vmatpush1.msra.mxu0 0.0
    %668 = vmatprep.subr.mxu0 0.0
    %669 = vmatpush1.msra.mxu0 0.0
    %670 = vmatprep.subr.mxu0 0.0
    %671 = vmatpush1.msra.mxu0 0.0
    %672 = vmatprep.subr.mxu0 0.0
    %673 = vmatpush1.msra.mxu0 0.0
    %674 = vmatprep.subr.mxu0 0.0
    %675 = vmatpush1.msra.mxu0 0.0
    %676 = vmatprep.subr.mxu0 0.0
    %677 = vmatpush1.msra.mxu0 0.0
    %678 = vmatprep.subr.mxu0 0.0
    %679 = vmatpush1.msra.mxu0 0.0
    %680 = vmatprep.subr.mxu0 0.0
    %681 = vmatpush1.msra.mxu0 0.0
    %682 = vmatprep.subr.mxu0 0.0
    %683 = vmatpush1.msra.mxu0 0.0
    %684 = vmatprep.subr.mxu0 0.0
    %685 = vmatpush1.msra.mxu0 0.0
    %686 = vmatprep.mubr.f32.mxu0 0.0
    %687 = vmatmul.mubr.f32.gmra.mrb[0].mxu0 %v617
    %v688 = vpop.f32.mrb[0].mxu0
    %v689 = vadd.f32 0.0, %v688
    %v690 = vpop.f32.mrb[0].mxu0
    %691 = vmatprep.mubr.f32.mxu0 0.0
    %692 = vmatmul.mubr.f32.gmra.mrb[0].mxu0 %v620
    %v693 = vpop.f32.mrb[0].mxu0
    %v694 = vadd.f32 0.0, %v693
    %v695 = vpop.f32.mrb[0].mxu0
    %696 = vdwg.mxu0
    %v697 = vrcp.pop %v689
    %v698 = vrcp.pop %v694
    %v699 = vmul.f32 %v613, %v697
    %v700 = vmul.f32 %v615, %v698
    %v701 = vstv %s203
    %v702 = vmul.f32 %v701, %v699
    %v703 = vmul.f32 %v701, %v700
    %706 = vrot.lane.b32.xlu0 %v702, 96
    %v707 = vpop.permute.xlu0 %706
    %708 = vrot.lane.b32.xlu0 %v703, 96
    %v709 = vpop.permute.xlu0 %708
    %v712 = vsub.f32 %v699, %v707
    %v713 = vsub.f32 %v700, %v709
    %714 = vrot.lane.b32.xlu0 %v195, 64
    %v715 = vpop.permute.xlu0 %714
    %716 = vrot.lane.b32.xlu0 %v200, 64
    %v717 = vpop.permute.xlu0 %716
    %v721 = vsel %vm92, %v712, 0
    %v724 = vsel %vm92, %v713, 0
    %726 = vmatprep.subr.mxu0 0.0
    %727 = vmatpush1.msra.mxu0 %v715
    %728 = vmatprep.subr.mxu0 0.0
    %729 = vmatpush1.msra.mxu0 %v717
    %730 = vmatprep.subr.mxu0 0.0
    %731 = vmatpush1.msra.mxu0 0.0
    %732 = vmatprep.subr.mxu0 0.0
    %733 = vmatpush1.msra.mxu0 0.0
    %734 = vmatprep.subr.mxu0 0.0
    %735 = vmatpush1.msra.mxu0 0.0
    %736 = vmatprep.subr.mxu0 0.0
    %737 = vmatpush1.msra.mxu0 0.0
    %738 = vmatprep.subr.mxu0 0.0
    %739 = vmatpush1.msra.mxu0 0.0
    %740 = vmatprep.subr.mxu0 0.0
    %741 = vmatpush1.msra.mxu0 0.0
    %742 = vmatprep.subr.mxu0 0.0
    %743 = vmatpush1.msra.mxu0 0.0
    %744 = vmatprep.subr.mxu0 0.0
    %745 = vmatpush1.msra.mxu0 0.0
    %746 = vmatprep.subr.mxu0 0.0
    %747 = vmatpush1.msra.mxu0 0.0
    %748 = vmatprep.subr.mxu0 0.0
    %749 = vmatpush1.msra.mxu0 0.0
    %750 = vmatprep.subr.mxu0 0.0
    %751 = vmatpush1.msra.mxu0 0.0
    %752 = vmatprep.subr.mxu0 0.0
    %753 = vmatpush1.msra.mxu0 0.0
    %754 = vmatprep.subr.mxu0 0.0
    %755 = vmatpush1.msra.mxu0 0.0
    %756 = vmatprep.subr.mxu0 0.0
    %757 = vmatpush1.msra.mxu0 0.0
    %758 = vmatprep.subr.mxu0 0.0
    %759 = vmatpush1.msra.mxu0 0.0
    %760 = vmatprep.subr.mxu0 0.0
    %761 = vmatpush1.msra.mxu0 0.0
    %762 = vmatprep.subr.mxu0 0.0
    %763 = vmatpush1.msra.mxu0 0.0
    %764 = vmatprep.subr.mxu0 0.0
    %765 = vmatpush1.msra.mxu0 0.0
    %766 = vmatprep.subr.mxu0 0.0
    %767 = vmatpush1.msra.mxu0 0.0
    %768 = vmatprep.subr.mxu0 0.0
    %769 = vmatpush1.msra.mxu0 0.0
    %770 = vmatprep.subr.mxu0 0.0
    %771 = vmatpush1.msra.mxu0 0.0
    %772 = vmatprep.subr.mxu0 0.0
    %773 = vmatpush1.msra.mxu0 0.0
    %774 = vmatprep.subr.mxu0 0.0
    %775 = vmatpush1.msra.mxu0 0.0
    %776 = vmatprep.subr.mxu0 0.0
    %777 = vmatpush1.msra.mxu0 0.0
    %778 = vmatprep.subr.mxu0 0.0
    %779 = vmatpush1.msra.mxu0 0.0
    %780 = vmatprep.subr.mxu0 0.0
    %781 = vmatpush1.msra.mxu0 0.0
    %782 = vmatprep.subr.mxu0 0.0
    %783 = vmatpush1.msra.mxu0 0.0
    %784 = vmatprep.subr.mxu0 0.0
    %785 = vmatpush1.msra.mxu0 0.0
    %786 = vmatprep.subr.mxu0 0.0
    %787 = vmatpush1.msra.mxu0 0.0
    %788 = vmatprep.subr.mxu0 0.0
    %789 = vmatpush1.msra.mxu0 0.0
    %790 = vmatprep.mubr.f32.mxu0 0.0
    %791 = vmatmul.mubr.f32.gmra.mrb[0].mxu0 %v721
    %v792 = vpop.f32.mrb[0].mxu0
    %v793 = vadd.f32 0.0, %v792
    %v794 = vpop.f32.mrb[0].mxu0
    %795 = vmatprep.mubr.f32.mxu0 0.0
    %796 = vmatmul.mubr.f32.gmra.mrb[0].mxu0 %v724
    %v797 = vpop.f32.mrb[0].mxu0
    %v798 = vadd.f32 0.0, %v797
    %v799 = vpop.f32.mrb[0].mxu0
    %800 = vdwg.mxu0
    %v801 = vmul.f32 %v793, %v793
    %v802 = vmul.f32 %v798, %v798
    %v803 = vsel %vm92, %v801, 0.0
    %804 = vadd.xlane.f32.xlu0 %v803
    %v805 = vpop.xlane.xlu0 %804
    %v806 = vsel %vm92, %v802, 0.0
    %807 = vadd.xlane.f32.xlu0 %v806
    %v808 = vpop.xlane.xlu0 %807
    %v809 = vrcp.pop 16.0
    %v810 = vmul.f32 %v805, %v809
    %v811 = vmul.f32 %v808, %v809
    %v812 = vadd.f32 %v810, 1e-05
    %v813 = vadd.f32 %v811, 1e-05
    %v814 = vrsqrt.pop %v812
    %v815 = vrsqrt.pop %v813
    %v816 = vmul.f32 %v793, %v814
    %v817 = vmul.f32 %v798, %v815
    %818 = vrot.lane.b32.xlu0 %v712, 112
    %v819 = vpop.permute.xlu0 %818
    %820 = vrot.lane.b32.xlu0 %v713, 112
    %v821 = vpop.permute.xlu0 %820
    %822 = vrot.lane.b32.xlu0 %v195, 48
    %v823 = vpop.permute.xlu0 %822
    %824 = vrot.lane.b32.xlu0 %v200, 48
    %v825 = vpop.permute.xlu0 %824
    %v828 = vsel %vm92, %v819, 0
    %v830 = vsel %vm92, %v821, 0
    %832 = vmatprep.subr.mxu0 0.0
    %833 = vmatpush1.msra.mxu0 %v823
    %834 = vmatprep.subr.mxu0 0.0
    %835 = vmatpush1.msra.mxu0 %v825
    %836 = vmatprep.subr.mxu0 0.0
    %837 = vmatpush1.msra.mxu0 0.0
    %838 = vmatprep.subr.mxu0 0.0
    %839 = vmatpush1.msra.mxu0 0.0
    %840 = vmatprep.subr.mxu0 0.0
    %841 = vmatpush1.msra.mxu0 0.0
    %842 = vmatprep.subr.mxu0 0.0
    %843 = vmatpush1.msra.mxu0 0.0
    %844 = vmatprep.subr.mxu0 0.0
    %845 = vmatpush1.msra.mxu0 0.0
    %846 = vmatprep.subr.mxu0 0.0
    %847 = vmatpush1.msra.mxu0 0.0
    %848 = vmatprep.subr.mxu0 0.0
    %849 = vmatpush1.msra.mxu0 0.0
    %850 = vmatprep.subr.mxu0 0.0
    %851 = vmatpush1.msra.mxu0 0.0
    %852 = vmatprep.subr.mxu0 0.0
    %853 = vmatpush1.msra.mxu0 0.0
    %854 = vmatprep.subr.mxu0 0.0
    %855 = vmatpush1.msra.mxu0 0.0
    %856 = vmatprep.subr.mxu0 0.0
    %857 = vmatpush1.msra.mxu0 0.0
    %858 = vmatprep.subr.mxu0 0.0
    %859 = vmatpush1.msra.mxu0 0.0
    %860 = vmatprep.subr.mxu0 0.0
    %861 = vmatpush1.msra.mxu0 0.0
    %862 = vmatprep.subr.mxu0 0.0
    %863 = vmatpush1.msra.mxu0 0.0
    %864 = vmatprep.subr.mxu0 0.0
    %865 = vmatpush1.msra.mxu0 0.0
    %866 = vmatprep.subr.mxu0 0.0
    %867 = vmatpush1.msra.mxu0 0.0
    %868 = vmatprep.subr.mxu0 0.0
    %869 = vmatpush1.msra.mxu0 0.0
    %870 = vmatprep.subr.mxu0 0.0
    %871 = vmatpush1.msra.mxu0 0.0
    %872 = vmatprep.subr.mxu0 0.0
    %873 = vmatpush1.msra.mxu0 0.0
    %874 = vmatprep.subr.mxu0 0.0
    %875 = vmatpush1.msra.mxu0 0.0
    %876 = vmatprep.subr.mxu0 0.0
    %877 = vmatpush1.msra.mxu0 0.0
    %878 = vmatprep.subr.mxu0 0.0
    %879 = vmatpush1.msra.mxu0 0.0
    %880 = vmatprep.subr.mxu0 0.0
    %881 = vmatpush1.msra.mxu0 0.0
    %882 = vmatprep.subr.mxu0 0.0
    %883 = vmatpush1.msra.mxu0 0.0
    %884 = vmatprep.subr.mxu0 0.0
    %885 = vmatpush1.msra.mxu0 0.0
    %886 = vmatprep.subr.mxu0 0.0
    %887 = vmatpush1.msra.mxu0 0.0
    %888 = vmatprep.subr.mxu0 0.0
    %889 = vmatpush1.msra.mxu0 0.0
    %890 = vmatprep.subr.mxu0 0.0
    %891 = vmatpush1.msra.mxu0 0.0
    %892 = vmatprep.subr.mxu0 0.0
    %893 = vmatpush1.msra.mxu0 0.0
    %894 = vmatprep.subr.mxu0 0.0
    %895 = vmatpush1.msra.mxu0 0.0
    %896 = vmatprep.mubr.f32.mxu0 0.0
    %897 = vmatmul.mubr.f32.gmra.mrb[0].mxu0 %v828
    %v898 = vpop.f32.mrb[0].mxu0
    %v899 = vadd.f32 0.0, %v898
    %v900 = vpop.f32.mrb[0].mxu0
    %901 = vmatprep.mubr.f32.mxu0 0.0
    %902 = vmatmul.mubr.f32.gmra.mrb[0].mxu0 %v830
    %v903 = vpop.f32.mrb[0].mxu0
    %v904 = vadd.f32 0.0, %v903
    %v905 = vpop.f32.mrb[0].mxu0
    %906 = vdwg.mxu0
    %v907 = vmul.f32 %v899, %v899
    %v908 = vmul.f32 %v904, %v904
    %v909 = vsel %vm92, %v907, 0.0
    %910 = vadd.xlane.f32.xlu0 %v909
    %v911 = vpop.xlane.xlu0 %910
    %v912 = vsel %vm92, %v908, 0.0
    %913 = vadd.xlane.f32.xlu0 %v912
    %v914 = vpop.xlane.xlu0 %913
    %v915 = vmul.f32 %v911, %v809
    %v916 = vmul.f32 %v914, %v809
    %v917 = vadd.f32 %v915, 1e-05
    %v918 = vadd.f32 %v916, 1e-05
    %v919 = vrsqrt.pop %v917
    %v920 = vrsqrt.pop %v918
    %v921 = vmul.f32 %v899, %v919
    %v922 = vmul.f32 %v904, %v920
    %v924 = vsel %vm92, %v921, 0
    %v927 = vsel %vm92, %v922, 0
    %929 = vmatprep.subr.mxu0 0.0
    %930 = vmatpush1.msra.mxu0 %v206
    %931 = vmatprep.subr.mxu0 0.0
    %932 = vmatpush1.msra.mxu0 %v207
    %933 = vmatprep.subr.mxu0 0.0
    %934 = vmatpush1.msra.mxu0 0.0
    %935 = vmatprep.subr.mxu0 0.0
    %936 = vmatpush1.msra.mxu0 0.0
    %937 = vmatprep.subr.mxu0 0.0
    %938 = vmatpush1.msra.mxu0 0.0
    %939 = vmatprep.subr.mxu0 0.0
    %940 = vmatpush1.msra.mxu0 0.0
    %941 = vmatprep.subr.mxu0 0.0
    %942 = vmatpush1.msra.mxu0 0.0
    %943 = vmatprep.subr.mxu0 0.0
    %944 = vmatpush1.msra.mxu0 0.0
    %945 = vmatprep.subr.mxu0 0.0
    %946 = vmatpush1.msra.mxu0 0.0
    %947 = vmatprep.subr.mxu0 0.0
    %948 = vmatpush1.msra.mxu0 0.0
    %949 = vmatprep.subr.mxu0 0.0
    %950 = vmatpush1.msra.mxu0 0.0
    %951 = vmatprep.subr.mxu0 0.0
    %952 = vmatpush1.msra.mxu0 0.0
    %953 = vmatprep.subr.mxu0 0.0
    %954 = vmatpush1.msra.mxu0 0.0
    %955 = vmatprep.subr.mxu0 0.0
    %956 = vmatpush1.msra.mxu0 0.0
    %957 = vmatprep.subr.mxu0 0.0
    %958 = vmatpush1.msra.mxu0 0.0
    %959 = vmatprep.subr.mxu0 0.0
    %960 = vmatpush1.msra.mxu0 0.0
    %961 = vmatprep.subr.mxu0 0.0
    %962 = vmatpush1.msra.mxu0 0.0
    %963 = vmatprep.subr.mxu0 0.0
    %964 = vmatpush1.msra.mxu0 0.0
    %965 = vmatprep.subr.mxu0 0.0
    %966 = vmatpush1.msra.mxu0 0.0
    %967 = vmatprep.subr.mxu0 0.0
    %968 = vmatpush1.msra.mxu0 0.0
    %969 = vmatprep.subr.mxu0 0.0
    %970 = vmatpush1.msra.mxu0 0.0
    %971 = vmatprep.subr.mxu0 0.0
    %972 = vmatpush1.msra.mxu0 0.0
    %973 = vmatprep.subr.mxu0 0.0
    %974 = vmatpush1.msra.mxu0 0.0
    %975 = vmatprep.subr.mxu0 0.0
    %976 = vmatpush1.msra.mxu0 0.0
    %977 = vmatprep.subr.mxu0 0.0
    %978 = vmatpush1.msra.mxu0 0.0
    %979 = vmatprep.subr.mxu0 0.0
    %980 = vmatpush1.msra.mxu0 0.0
    %981 = vmatprep.subr.mxu0 0.0
    %982 = vmatpush1.msra.mxu0 0.0
    %983 = vmatprep.subr.mxu0 0.0
    %984 = vmatpush1.msra.mxu0 0.0
    %985 = vmatprep.subr.mxu0 0.0
    %986 = vmatpush1.msra.mxu0 0.0
    %987 = vmatprep.subr.mxu0 0.0
    %988 = vmatpush1.msra.mxu0 0.0
    %989 = vmatprep.subr.mxu0 0.0
    %990 = vmatpush1.msra.mxu0 0.0
    %991 = vmatprep.subr.mxu0 0.0
    %992 = vmatpush1.msra.mxu0 0.0
    %993 = vmatprep.mubr.f32.mxu0 0.0
    %994 = vmatmul.mubr.f32.gmra.mrb[0].mxu0 %v924
    %v995 = vpop.f32.mrb[0].mxu0
    %v996 = vadd.f32 0.0, %v995
    %v997 = vpop.f32.mrb[0].mxu0
    %998 = vmatprep.mubr.f32.mxu0 0.0
    %999 = vmatmul.mubr.f32.gmra.mrb[0].mxu0 %v927
    %v1000 = vpop.f32.mrb[0].mxu0
    %v1001 = vadd.f32 0.0, %v1000
    %v1002 = vpop.f32.mrb[0].mxu0
    %1003 = vdwg.mxu0
    %v1005 = vsel %vm92, %v816, 0
    %v1008 = vsel %vm92, %v817, 0
    %1010 = vmatprep.subr.mxu0 0.0
    %1011 = vmatpush1.msra.mxu0 %v204
    %1012 = vmatprep.subr.mxu0 0.0
    %1013 = vmatpush1.msra.mxu0 %v205
    %1014 = vmatprep.subr.mxu0 0.0
    %1015 = vmatpush1.msra.mxu0 0.0
    %1016 = vmatprep.subr.mxu0 0.0
    %1017 = vmatpush1.msra.mxu0 0.0
    %1018 = vmatprep.subr.mxu0 0.0
    %1019 = vmatpush1.msra.mxu0 0.0
    %1020 = vmatprep.subr.mxu0 0.0
    %1021 = vmatpush1.msra.mxu0 0.0
    %1022 = vmatprep.subr.mxu0 0.0
    %1023 = vmatpush1.msra.mxu0 0.0
    %1024 = vmatprep.subr.mxu0 0.0
    %1025 = vmatpush1.msra.mxu0 0.0
    %1026 = vmatprep.subr.mxu0 0.0
    %1027 = vmatpush1.msra.mxu0 0.0
    %1028 = vmatprep.subr.mxu0 0.0
    %1029 = vmatpush1.msra.mxu0 0.0
    %1030 = vmatprep.subr.mxu0 0.0
    %1031 = vmatpush1.msra.mxu0 0.0
    %1032 = vmatprep.subr.mxu0 0.0
    %1033 = vmatpush1.msra.mxu0 0.0
    %1034 = vmatprep.subr.mxu0 0.0
    %1035 = vmatpush1.msra.mxu0 0.0
    %1036 = vmatprep.subr.mxu0 0.0
    %1037 = vmatpush1.msra.mxu0 0.0
    %1038 = vmatprep.subr.mxu0 0.0
    %1039 = vmatpush1.msra.mxu0 0.0
    %1040 = vmatprep.subr.mxu0 0.0
    %1041 = vmatpush1.msra.mxu0 0.0
    %1042 = vmatprep.subr.mxu0 0.0
    %1043 = vmatpush1.msra.mxu0 0.0
    %1044 = vmatprep.subr.mxu0 0.0
    %1045 = vmatpush1.msra.mxu0 0.0
    %1046 = vmatprep.subr.mxu0 0.0
    %1047 = vmatpush1.msra.mxu0 0.0
    %1048 = vmatprep.subr.mxu0 0.0
    %1049 = vmatpush1.msra.mxu0 0.0
    %1050 = vmatprep.subr.mxu0 0.0
    %1051 = vmatpush1.msra.mxu0 0.0
    %1052 = vmatprep.subr.mxu0 0.0
    %1053 = vmatpush1.msra.mxu0 0.0
    %1054 = vmatprep.subr.mxu0 0.0
    %1055 = vmatpush1.msra.mxu0 0.0
    %1056 = vmatprep.subr.mxu0 0.0
    %1057 = vmatpush1.msra.mxu0 0.0
    %1058 = vmatprep.subr.mxu0 0.0
    %1059 = vmatpush1.msra.mxu0 0.0
    %1060 = vmatprep.subr.mxu0 0.0
    %1061 = vmatpush1.msra.mxu0 0.0
    %1062 = vmatprep.subr.mxu0 0.0
    %1063 = vmatpush1.msra.mxu0 0.0
    %1064 = vmatprep.subr.mxu0 0.0
    %1065 = vmatpush1.msra.mxu0 0.0
    %1066 = vmatprep.subr.mxu0 0.0
    %1067 = vmatpush1.msra.mxu0 0.0
    %1068 = vmatprep.subr.mxu0 0.0
    %1069 = vmatpush1.msra.mxu0 0.0
    %1070 = vmatprep.subr.mxu0 0.0
    %1071 = vmatpush1.msra.mxu0 0.0
    %1072 = vmatprep.subr.mxu0 0.0
    %1073 = vmatpush1.msra.mxu0 0.0
    %1074 = vmatprep.mubr.f32.mxu0 0.0
    %1075 = vmatmul.mubr.f32.gmra.mrb[0].mxu0 %v1005
    %v1076 = vpop.f32.mrb[0].mxu0
    %v1077 = vadd.f32 %v996, %v1076
    %v1078 = vpop.f32.mrb[0].mxu0
    %1079 = vmatprep.mubr.f32.mxu0 0.0
    %1080 = vmatmul.mubr.f32.gmra.mrb[0].mxu0 %v1008
    %v1081 = vpop.f32.mrb[0].mxu0
    %v1082 = vadd.f32 %v1001, %v1081
    %v1083 = vpop.f32.mrb[0].mxu0
    %1084 = vdwg.mxu0
    %s1085 = scalar_lea.vmem [#allocation6], 128
    %v1086 = vld [vmem:[%s1085] sm:$0xff]
    %v1087 = vld [vmem:[%s1085 + $0x8] sm:$0xff]
    %v1088 = vld [vmem:[%s1085 + $0x10] sm:$0xff]
    %v1089 = vld [vmem:[%s1085 + $0x18] sm:$0xff]
    %v1090 = vld [vmem:[%s1085 + $0x20] sm:$0xff]
    %v1091 = vld [vmem:[%s1085 + $0x28] sm:$0xff]
    %v1092 = vld [vmem:[%s1085 + $0x30] sm:$0xff]
    %v1093 = vld [vmem:[%s1085 + $0x38] sm:$0xff]
    %v1094 = vld [vmem:[%s1085 + $0x40] sm:$0xff]
    %v1095 = vld [vmem:[%s1085 + $0x48] sm:$0xff]
    %v1096 = vld [vmem:[%s1085 + $0x50] sm:$0xff]
    %v1097 = vld [vmem:[%s1085 + $0x58] sm:$0xff]
    %v1098 = vld [vmem:[%s1085 + $0x60] sm:$0xff]
    %v1099 = vld [vmem:[%s1085 + $0x68] sm:$0xff]
    %v1100 = vld [vmem:[%s1085 + $0x70] sm:$0xff]
    %v1101 = vld [vmem:[%s1085 + $0x78] sm:$0xff]
    %1102 = vmatprep.subr.mxu0 0.0
    %1103 = vmatpush1.msra.mxu0 %v1086
    %1104 = vmatprep.subr.mxu0 0.0
    %1105 = vmatpush1.msra.mxu0 %v1087
    %1106 = vmatprep.subr.mxu0 0.0
    %1107 = vmatpush1.msra.mxu0 %v1088
    %1108 = vmatprep.subr.mxu0 0.0
    %1109 = vmatpush1.msra.mxu0 %v1089
    %1110 = vmatprep.subr.mxu0 0.0
    %1111 = vmatpush1.msra.mxu0 %v1090
    %1112 = vmatprep.subr.mxu0 0.0
    %1113 = vmatpush1.msra.mxu0 %v1091
    %1114 = vmatprep.subr.mxu0 0.0
    %1115 = vmatpush1.msra.mxu0 %v1092
    %1116 = vmatprep.subr.mxu0 0.0
    %1117 = vmatpush1.msra.mxu0 %v1093
    %1118 = vmatprep.subr.mxu0 0.0
    %1119 = vmatpush1.msra.mxu0 %v1094
    %1120 = vmatprep.subr.mxu0 0.0
    %1121 = vmatpush1.msra.mxu0 %v1095
    %1122 = vmatprep.subr.mxu0 0.0
    %1123 = vmatpush1.msra.mxu0 %v1096
    %1124 = vmatprep.subr.mxu0 0.0
    %1125 = vmatpush1.msra.mxu0 %v1097
    %1126 = vmatprep.subr.mxu0 0.0
    %1127 = vmatpush1.msra.mxu0 %v1098
    %1128 = vmatprep.subr.mxu0 0.0
    %1129 = vmatpush1.msra.mxu0 %v1099
    %1130 = vmatprep.subr.mxu0 0.0
    %1131 = vmatpush1.msra.mxu0 %v1100
    %1132 = vmatprep.subr.mxu0 0.0
    %1133 = vmatpush1.msra.mxu0 %v1101
    %1134 = vmatprep.subr.mxu0 0.0
    %1135 = vmatpush1.msra.mxu0 0.0
    %1136 = vmatprep.subr.mxu0 0.0
    %1137 = vmatpush1.msra.mxu0 0.0
    %1138 = vmatprep.subr.mxu0 0.0
    %1139 = vmatpush1.msra.mxu0 0.0
    %1140 = vmatprep.subr.mxu0 0.0
    %1141 = vmatpush1.msra.mxu0 0.0
    %1142 = vmatprep.subr.mxu0 0.0
    %1143 = vmatpush1.msra.mxu0 0.0
    %1144 = vmatprep.subr.mxu0 0.0
    %1145 = vmatpush1.msra.mxu0 0.0
    %1146 = vmatprep.subr.mxu0 0.0
    %1147 = vmatpush1.msra.mxu0 0.0
    %1148 = vmatprep.subr.mxu0 0.0
    %1149 = vmatpush1.msra.mxu0 0.0
    %1150 = vmatprep.subr.mxu0 0.0
    %1151 = vmatpush1.msra.mxu0 0.0
    %1152 = vmatprep.subr.mxu0 0.0
    %1153 = vmatpush1.msra.mxu0 0.0
    %1154 = vmatprep.subr.mxu0 0.0
    %1155 = vmatpush1.msra.mxu0 0.0
    %1156 = vmatprep.subr.mxu0 0.0
    %1157 = vmatpush1.msra.mxu0 0.0
    %1158 = vmatprep.subr.mxu0 0.0
    %1159 = vmatpush1.msra.mxu0 0.0
    %1160 = vmatprep.subr.mxu0 0.0
    %1161 = vmatpush1.msra.mxu0 0.0
    %1162 = vmatprep.subr.mxu0 0.0
    %1163 = vmatpush1.msra.mxu0 0.0
    %1164 = vmatprep.subr.mxu0 0.0
    %1165 = vmatpush1.msra.mxu0 0.0
    %1166 = vmatprep.mubr.f32.mxu0 0.0
    %1167 = vmatmul.mubr.f32.gmra.mrb[0].mxu0 %v1077
    %v1168 = vpop.f32.mrb[0].mxu0
    %v1169 = vadd.f32 0.0, %v1168
    %v1170 = vpop.f32.mrb[0].mxu0
    %1171 = vmatprep.mubr.f32.mxu0 0.0
    %1172 = vmatmul.mubr.f32.gmra.mrb[0].mxu0 %v1082
    %v1173 = vpop.f32.mrb[0].mxu0
    %v1174 = vadd.f32 0.0, %v1173
    %v1175 = vpop.f32.mrb[0].mxu0
    %1176 = vdwg.mxu0
    %s1177 = sld [smem:[#allocation2 + $0x1]]
    %s1178 = scalar_lea.vmem [#allocation7], 32
    %v1179 = vld [vmem:[%s1178] sm:$0xff]
    %v1180 = vld [vmem:[%s1178 + $0x8] sm:$0xff]
    %v1181 = vld [vmem:[%s1178 + $0x10] sm:$0xff]
    %v1182 = vld [vmem:[%s1178 + $0x18] sm:$0xff]
    %1185 = vrot.lane.b32.xlu0 %v1169, 96
    %v1186 = vpop.permute.xlu0 %1185
    %1187 = vrot.lane.b32.xlu0 %v1174, 96
    %v1188 = vpop.permute.xlu0 %1187
    %v1189 = vsel %vm214, %v1169, 0
    %v1191 = vsel %vm214, %v1174, 0
    %v1193 = vsel %vm214, %v1186, 0
    %v1195 = vsel %vm214, %v1188, 0
    %1197 = vmatprep.subr.mxu0 0.0
    %1198 = vmatpush1.xpose.msra.mxu0 %v1193
    %1199 = vmatprep.subr.mxu0 0.0
    %1200 = vmatpush1.xpose.msra.mxu0 %v1195
    %1201 = vmatprep.subr.mxu0 0.0
    %1202 = vmatpush1.xpose.msra.mxu0 0.0
    %1203 = vmatprep.subr.mxu0 0.0
    %1204 = vmatpush1.xpose.msra.mxu0 0.0
    %1205 = vmatprep.subr.mxu0 0.0
    %1206 = vmatpush1.xpose.msra.mxu0 0.0
    %1207 = vmatprep.subr.mxu0 0.0
    %1208 = vmatpush1.xpose.msra.mxu0 0.0
    %1209 = vmatprep.subr.mxu0 0.0
    %1210 = vmatpush1.xpose.msra.mxu0 0.0
    %1211 = vmatprep.subr.mxu0 0.0
    %1212 = vmatpush1.xpose.msra.mxu0 0.0
    %1213 = vmatprep.subr.mxu0 0.0
    %1214 = vmatpush1.xpose.msra.mxu0 0.0
    %1215 = vmatprep.subr.mxu0 0.0
    %1216 = vmatpush1.xpose.msra.mxu0 0.0
    %1217 = vmatprep.subr.mxu0 0.0
    %1218 = vmatpush1.xpose.msra.mxu0 0.0
    %1219 = vmatprep.subr.mxu0 0.0
    %1220 = vmatpush1.xpose.msra.mxu0 0.0
    %1221 = vmatprep.subr.mxu0 0.0
    %1222 = vmatpush1.xpose.msra.mxu0 0.0
    %1223 = vmatprep.subr.mxu0 0.0
    %1224 = vmatpush1.xpose.msra.mxu0 0.0
    %1225 = vmatprep.subr.mxu0 0.0
    %1226 = vmatpush1.xpose.msra.mxu0 0.0
    %1227 = vmatprep.subr.mxu0 0.0
    %1228 = vmatpush1.xpose.msra.mxu0 0.0
    %1229 = vmatprep.subr.mxu0 0.0
    %1230 = vmatpush1.xpose.msra.mxu0 0.0
    %1231 = vmatprep.subr.mxu0 0.0
    %1232 = vmatpush1.xpose.msra.mxu0 0.0
    %1233 = vmatprep.subr.mxu0 0.0
    %1234 = vmatpush1.xpose.msra.mxu0 0.0
    %1235 = vmatprep.subr.mxu0 0.0
    %1236 = vmatpush1.xpose.msra.mxu0 0.0
    %1237 = vmatprep.subr.mxu0 0.0
    %1238 = vmatpush1.xpose.msra.mxu0 0.0
    %1239 = vmatprep.subr.mxu0 0.0
    %1240 = vmatpush1.xpose.msra.mxu0 0.0
    %1241 = vmatprep.subr.mxu0 0.0
    %1242 = vmatpush1.xpose.msra.mxu0 0.0
    %1243 = vmatprep.subr.mxu0 0.0
    %1244 = vmatpush1.xpose.msra.mxu0 0.0
    %1245 = vmatprep.subr.mxu0 0.0
    %1246 = vmatpush1.xpose.msra.mxu0 0.0
    %1247 = vmatprep.subr.mxu0 0.0
    %1248 = vmatpush1.xpose.msra.mxu0 0.0
    %1249 = vmatprep.subr.mxu0 0.0
    %1250 = vmatpush1.xpose.msra.mxu0 0.0
    %1251 = vmatprep.subr.mxu0 0.0
    %1252 = vmatpush1.xpose.msra.mxu0 0.0
    %1253 = vmatprep.subr.mxu0 0.0
    %1254 = vmatpush1.xpose.msra.mxu0 0.0
    %1255 = vmatprep.subr.mxu0 0.0
    %1256 = vmatpush1.xpose.msra.mxu0 0.0
    %1257 = vmatprep.subr.mxu0 0.0
    %1258 = vmatpush1.xpose.msra.mxu0 0.0
    %1259 = vmatprep.subr.mxu0 0.0
    %1260 = vmatpush1.xpose.msra.mxu0 0.0
    %1261 = vmatprep.mubr.f32.mxu0 0.0
    %1262 = vmatmul.mubr.f32.gmra.mrb[0].mxu0 %v1189
    %v1263 = vpop.f32.mrb[0].mxu0
    %v1264 = vadd.f32 0.0, %v1263
    %v1265 = vpop.f32.mrb[0].mxu0
    %1266 = vmatprep.mubr.f32.mxu0 0.0
    %1267 = vmatmul.mubr.f32.gmra.mrb[0].mxu0 %v1191
    %v1268 = vpop.f32.mrb[0].mxu0
    %v1269 = vadd.f32 0.0, %v1268
    %v1270 = vpop.f32.mrb[0].mxu0
    %1271 = vdwg.mxu0
    %1272 = vrot.lane.b32.xlu0 %v1169, 120
    %v1273 = vpop.permute.xlu0 %1272
    %1274 = vrot.lane.b32.xlu0 %v1174, 120
    %v1275 = vpop.permute.xlu0 %1274
    %1276 = vrot.lane.b32.xlu0 %v1169, 88
    %v1277 = vpop.permute.xlu0 %1276
    %1278 = vrot.lane.b32.xlu0 %v1174, 88
    %v1279 = vpop.permute.xlu0 %1278
    %v1280 = vsel %vm214, %v1273, 0
    %v1282 = vsel %vm214, %v1275, 0
    %v1284 = vsel %vm214, %v1277, 0
    %v1286 = vsel %vm214, %v1279, 0
    %1288 = vmatprep.subr.mxu0 0.0
    %1289 = vmatpush1.xpose.msra.mxu0 %v1284
    %1290 = vmatprep.subr.mxu0 0.0
    %1291 = vmatpush1.xpose.msra.mxu0 %v1286
    %1292 = vmatprep.subr.mxu0 0.0
    %1293 = vmatpush1.xpose.msra.mxu0 0.0
    %1294 = vmatprep.subr.mxu0 0.0
    %1295 = vmatpush1.xpose.msra.mxu0 0.0
    %1296 = vmatprep.subr.mxu0 0.0
    %1297 = vmatpush1.xpose.msra.mxu0 0.0
    %1298 = vmatprep.subr.mxu0 0.0
    %1299 = vmatpush1.xpose.msra.mxu0 0.0
    %1300 = vmatprep.subr.mxu0 0.0
    %1301 = vmatpush1.xpose.msra.mxu0 0.0
    %1302 = vmatprep.subr.mxu0 0.0
    %1303 = vmatpush1.xpose.msra.mxu0 0.0
    %1304 = vmatprep.subr.mxu0 0.0
    %1305 = vmatpush1.xpose.msra.mxu0 0.0
    %1306 = vmatprep.subr.mxu0 0.0
    %1307 = vmatpush1.xpose.msra.mxu0 0.0
    %1308 = vmatprep.subr.mxu0 0.0
    %1309 = vmatpush1.xpose.msra.mxu0 0.0
    %1310 = vmatprep.subr.mxu0 0.0
    %1311 = vmatpush1.xpose.msra.mxu0 0.0
    %1312 = vmatprep.subr.mxu0 0.0
    %1313 = vmatpush1.xpose.msra.mxu0 0.0
    %1314 = vmatprep.subr.mxu0 0.0
    %1315 = vmatpush1.xpose.msra.mxu0 0.0
    %1316 = vmatprep.subr.mxu0 0.0
    %1317 = vmatpush1.xpose.msra.mxu0 0.0
    %1318 = vmatprep.subr.mxu0 0.0
    %1319 = vmatpush1.xpose.msra.mxu0 0.0
    %1320 = vmatprep.subr.mxu0 0.0
    %1321 = vmatpush1.xpose.msra.mxu0 0.0
    %1322 = vmatprep.subr.mxu0 0.0
    %1323 = vmatpush1.xpose.msra.mxu0 0.0
    %1324 = vmatprep.subr.mxu0 0.0
    %1325 = vmatpush1.xpose.msra.mxu0 0.0
    %1326 = vmatprep.subr.mxu0 0.0
    %1327 = vmatpush1.xpose.msra.mxu0 0.0
    %1328 = vmatprep.subr.mxu0 0.0
    %1329 = vmatpush1.xpose.msra.mxu0 0.0
    %1330 = vmatprep.subr.mxu0 0.0
    %1331 = vmatpush1.xpose.msra.mxu0 0.0
    %1332 = vmatprep.subr.mxu0 0.0
    %1333 = vmatpush1.xpose.msra.mxu0 0.0
    %1334 = vmatprep.subr.mxu0 0.0
    %1335 = vmatpush1.xpose.msra.mxu0 0.0
    %1336 = vmatprep.subr.mxu0 0.0
    %1337 = vmatpush1.xpose.msra.mxu0 0.0
    %1338 = vmatprep.subr.mxu0 0.0
    %1339 = vmatpush1.xpose.msra.mxu0 0.0
    %1340 = vmatprep.subr.mxu0 0.0
    %1341 = vmatpush1.xpose.msra.mxu0 0.0
    %1342 = vmatprep.subr.mxu0 0.0
    %1343 = vmatpush1.xpose.msra.mxu0 0.0
    %1344 = vmatprep.subr.mxu0 0.0
    %1345 = vmatpush1.xpose.msra.mxu0 0.0
    %1346 = vmatprep.subr.mxu0 0.0
    %1347 = vmatpush1.xpose.msra.mxu0 0.0
    %1348 = vmatprep.subr.mxu0 0.0
    %1349 = vmatpush1.xpose.msra.mxu0 0.0
    %1350 = vmatprep.subr.mxu0 0.0
    %1351 = vmatpush1.xpose.msra.mxu0 0.0
    %1352 = vmatprep.mubr.f32.mxu0 0.0
    %1353 = vmatmul.mubr.f32.gmra.mrb[0].mxu0 %v1280
    %v1354 = vpop.f32.mrb[0].mxu0
    %v1355 = vadd.f32 0.0, %v1354
    %v1356 = vpop.f32.mrb[0].mxu0
    %1357 = vmatprep.mubr.f32.mxu0 0.0
    %1358 = vmatmul.mubr.f32.gmra.mrb[0].mxu0 %v1282
    %v1359 = vpop.f32.mrb[0].mxu0
    %v1360 = vadd.f32 0.0, %v1359
    %v1361 = vpop.f32.mrb[0].mxu0
    %1362 = vdwg.mxu0
    %1363 = vrot.lane.b32.xlu0 %v1169, 112
    %v1364 = vpop.permute.xlu0 %1363
    %1365 = vrot.lane.b32.xlu0 %v1174, 112
    %v1366 = vpop.permute.xlu0 %1365
    %1367 = vrot.lane.b32.xlu0 %v1169, 80
    %v1368 = vpop.permute.xlu0 %1367
    %1369 = vrot.lane.b32.xlu0 %v1174, 80
    %v1370 = vpop.permute.xlu0 %1369
    %v1371 = vsel %vm214, %v1364, 0
    %v1373 = vsel %vm214, %v1366, 0
    %v1375 = vsel %vm214, %v1368, 0
    %v1377 = vsel %vm214, %v1370, 0
    %1379 = vmatprep.subr.mxu0 0.0
    %1380 = vmatpush1.xpose.msra.mxu0 %v1375
    %1381 = vmatprep.subr.mxu0 0.0
    %1382 = vmatpush1.xpose.msra.mxu0 %v1377
    %1383 = vmatprep.subr.mxu0 0.0
    %1384 = vmatpush1.xpose.msra.mxu0 0.0
    %1385 = vmatprep.subr.mxu0 0.0
    %1386 = vmatpush1.xpose.msra.mxu0 0.0
    %1387 = vmatprep.subr.mxu0 0.0
    %1388 = vmatpush1.xpose.msra.mxu0 0.0
    %1389 = vmatprep.subr.mxu0 0.0
    %1390 = vmatpush1.xpose.msra.mxu0 0.0
    %1391 = vmatprep.subr.mxu0 0.0
    %1392 = vmatpush1.xpose.msra.mxu0 0.0
    %1393 = vmatprep.subr.mxu0 0.0
    %1394 = vmatpush1.xpose.msra.mxu0 0.0
    %1395 = vmatprep.subr.mxu0 0.0
    %1396 = vmatpush1.xpose.msra.mxu0 0.0
    %1397 = vmatprep.subr.mxu0 0.0
    %1398 = vmatpush1.xpose.msra.mxu0 0.0
    %1399 = vmatprep.subr.mxu0 0.0
    %1400 = vmatpush1.xpose.msra.mxu0 0.0
    %1401 = vmatprep.subr.mxu0 0.0
    %1402 = vmatpush1.xpose.msra.mxu0 0.0
    %1403 = vmatprep.subr.mxu0 0.0
    %1404 = vmatpush1.xpose.msra.mxu0 0.0
    %1405 = vmatprep.subr.mxu0 0.0
    %1406 = vmatpush1.xpose.msra.mxu0 0.0
    %1407 = vmatprep.subr.mxu0 0.0
    %1408 = vmatpush1.xpose.msra.mxu0 0.0
    %1409 = vmatprep.subr.mxu0 0.0
    %1410 = vmatpush1.xpose.msra.mxu0 0.0
    %1411 = vmatprep.subr.mxu0 0.0
    %1412 = vmatpush1.xpose.msra.mxu0 0.0
    %1413 = vmatprep.subr.mxu0 0.0
    %1414 = vmatpush1.xpose.msra.mxu0 0.0
    %1415 = vmatprep.subr.mxu0 0.0
    %1416 = vmatpush1.xpose.msra.mxu0 0.0
    %1417 = vmatprep.subr.mxu0 0.0
    %1418 = vmatpush1.xpose.msra.mxu0 0.0
    %1419 = vmatprep.subr.mxu0 0.0
    %1420 = vmatpush1.xpose.msra.mxu0 0.0
    %1421 = vmatprep.subr.mxu0 0.0
    %1422 = vmatpush1.xpose.msra.mxu0 0.0
    %1423 = vmatprep.subr.mxu0 0.0
    %1424 = vmatpush1.xpose.msra.mxu0 0.0
    %1425 = vmatprep.subr.mxu0 0.0
    %1426 = vmatpush1.xpose.msra.mxu0 0.0
    %1427 = vmatprep.subr.mxu0 0.0
    %1428 = vmatpush1.xpose.msra.mxu0 0.0
    %1429 = vmatprep.subr.mxu0 0.0
    %1430 = vmatpush1.xpose.msra.mxu0 0.0
    %1431 = vmatprep.subr.mxu0 0.0
    %1432 = vmatpush1.xpose.msra.mxu0 0.0
    %1433 = vmatprep.subr.mxu0 0.0
    %1434 = vmatpush1.xpose.msra.mxu0 0.0
    %1435 = vmatprep.subr.mxu0 0.0
    %1436 = vmatpush1.xpose.msra.mxu0 0.0
    %1437 = vmatprep.subr.mxu0 0.0
    %1438 = vmatpush1.xpose.msra.mxu0 0.0
    %1439 = vmatprep.subr.mxu0 0.0
    %1440 = vmatpush1.xpose.msra.mxu0 0.0
    %1441 = vmatprep.subr.mxu0 0.0
    %1442 = vmatpush1.xpose.msra.mxu0 0.0
    %1443 = vmatprep.mubr.f32.mxu0 0.0
    %1444 = vmatmul.mubr.f32.gmra.mrb[0].mxu0 %v1371
    %v1445 = vpop.f32.mrb[0].mxu0
    %v1446 = vadd.f32 0.0, %v1445
    %v1447 = vpop.f32.mrb[0].mxu0
    %1448 = vmatprep.mubr.f32.mxu0 0.0
    %1449 = vmatmul.mubr.f32.gmra.mrb[0].mxu0 %v1373
    %v1450 = vpop.f32.mrb[0].mxu0
    %v1451 = vadd.f32 0.0, %v1450
    %v1452 = vpop.f32.mrb[0].mxu0
    %1453 = vdwg.mxu0
    %1454 = vrot.lane.b32.xlu0 %v1169, 104
    %v1455 = vpop.permute.xlu0 %1454
    %1456 = vrot.lane.b32.xlu0 %v1174, 104
    %v1457 = vpop.permute.xlu0 %1456
    %1458 = vrot.lane.b32.xlu0 %v1169, 72
    %v1459 = vpop.permute.xlu0 %1458
    %1460 = vrot.lane.b32.xlu0 %v1174, 72
    %v1461 = vpop.permute.xlu0 %1460
    %v1462 = vsel %vm214, %v1455, 0
    %v1464 = vsel %vm214, %v1457, 0
    %v1466 = vsel %vm214, %v1459, 0
    %v1468 = vsel %vm214, %v1461, 0
    %1470 = vmatprep.subr.mxu0 0.0
    %1471 = vmatpush1.xpose.msra.mxu0 %v1466
    %1472 = vmatprep.subr.mxu0 0.0
    %1473 = vmatpush1.xpose.msra.mxu0 %v1468
    %1474 = vmatprep.subr.mxu0 0.0
    %1475 = vmatpush1.xpose.msra.mxu0 0.0
    %1476 = vmatprep.subr.mxu0 0.0
    %1477 = vmatpush1.xpose.msra.mxu0 0.0
    %1478 = vmatprep.subr.mxu0 0.0
    %1479 = vmatpush1.xpose.msra.mxu0 0.0
    %1480 = vmatprep.subr.mxu0 0.0
    %1481 = vmatpush1.xpose.msra.mxu0 0.0
    %1482 = vmatprep.subr.mxu0 0.0
    %1483 = vmatpush1.xpose.msra.mxu0 0.0
    %1484 = vmatprep.subr.mxu0 0.0
    %1485 = vmatpush1.xpose.msra.mxu0 0.0
    %1486 = vmatprep.subr.mxu0 0.0
    %1487 = vmatpush1.xpose.msra.mxu0 0.0
    %1488 = vmatprep.subr.mxu0 0.0
    %1489 = vmatpush1.xpose.msra.mxu0 0.0
    %1490 = vmatprep.subr.mxu0 0.0
    %1491 = vmatpush1.xpose.msra.mxu0 0.0
    %1492 = vmatprep.subr.mxu0 0.0
    %1493 = vmatpush1.xpose.msra.mxu0 0.0
    %1494 = vmatprep.subr.mxu0 0.0
    %1495 = vmatpush1.xpose.msra.mxu0 0.0
    %1496 = vmatprep.subr.mxu0 0.0
    %1497 = vmatpush1.xpose.msra.mxu0 0.0
    %1498 = vmatprep.subr.mxu0 0.0
    %1499 = vmatpush1.xpose.msra.mxu0 0.0
    %1500 = vmatprep.subr.mxu0 0.0
    %1501 = vmatpush1.xpose.msra.mxu0 0.0
    %1502 = vmatprep.subr.mxu0 0.0
    %1503 = vmatpush1.xpose.msra.mxu0 0.0
    %1504 = vmatprep.subr.mxu0 0.0
    %1505 = vmatpush1.xpose.msra.mxu0 0.0
    %1506 = vmatprep.subr.mxu0 0.0
    %1507 = vmatpush1.xpose.msra.mxu0 0.0
    %1508 = vmatprep.subr.mxu0 0.0
    %1509 = vmatpush1.xpose.msra.mxu0 0.0
    %1510 = vmatprep.subr.mxu0 0.0
    %1511 = vmatpush1.xpose.msra.mxu0 0.0
    %1512 = vmatprep.subr.mxu0 0.0
    %1513 = vmatpush1.xpose.msra.mxu0 0.0
    %1514 = vmatprep.subr.mxu0 0.0
    %1515 = vmatpush1.xpose.msra.mxu0 0.0
    %1516 = vmatprep.subr.mxu0 0.0
    %1517 = vmatpush1.xpose.msra.mxu0 0.0
    %1518 = vmatprep.subr.mxu0 0.0
    %1519 = vmatpush1.xpose.msra.mxu0 0.0
    %1520 = vmatprep.subr.mxu0 0.0
    %1521 = vmatpush1.xpose.msra.mxu0 0.0
    %1522 = vmatprep.subr.mxu0 0.0
    %1523 = vmatpush1.xpose.msra.mxu0 0.0
    %1524 = vmatprep.subr.mxu0 0.0
    %1525 = vmatpush1.xpose.msra.mxu0 0.0
    %1526 = vmatprep.subr.mxu0 0.0
    %1527 = vmatpush1.xpose.msra.mxu0 0.0
    %1528 = vmatprep.subr.mxu0 0.0
    %1529 = vmatpush1.xpose.msra.mxu0 0.0
    %1530 = vmatprep.subr.mxu0 0.0
    %1531 = vmatpush1.xpose.msra.mxu0 0.0
    %1532 = vmatprep.subr.mxu0 0.0
    %1533 = vmatpush1.xpose.msra.mxu0 0.0
    %1534 = vmatprep.mubr.f32.mxu0 0.0
    %1535 = vmatmul.mubr.f32.gmra.mrb[0].mxu0 %v1462
    %v1536 = vpop.f32.mrb[0].mxu0
    %v1537 = vadd.f32 0.0, %v1536
    %v1538 = vpop.f32.mrb[0].mxu0
    %1539 = vmatprep.mubr.f32.mxu0 0.0
    %1540 = vmatmul.mubr.f32.gmra.mrb[0].mxu0 %v1464
    %v1541 = vpop.f32.mrb[0].mxu0
    %v1542 = vadd.f32 0.0, %v1541
    %v1543 = vpop.f32.mrb[0].mxu0
    %1544 = vdwg.mxu0
    %1547 = vrot.lane.b32.xlu0 %v1446, 16
    %v1548 = vpop.permute.xlu0 %1547
    %1549 = vrot.lane.b32.xlu0 %v1451, 16
    %v1550 = vpop.permute.xlu0 %1549
    %1555 = vrot.lane.b32.xlu0 %v1355, 32
    %v1556 = vpop.permute.xlu0 %1555
    %1557 = vrot.lane.b32.xlu0 %v1360, 32
    %v1558 = vpop.permute.xlu0 %1557
    %1563 = vrot.lane.b32.xlu0 %v1537, 48
    %v1564 = vpop.permute.xlu0 %1563
    %1565 = vrot.lane.b32.xlu0 %v1542, 48
    %v1566 = vpop.permute.xlu0 %1565
    %v1569 = vsel %vm92, %v1264, %v1548
    %v1570 = vsel %vm92, %v1269, %v1550
    %v1571 = vsel %vm95, %v1569, %v1556
    %v1572 = vsel %vm95, %v1570, %v1558
    %v1573 = vsel %vm98, %v1571, %v1564
    %v1574 = vsel %vm98, %v1572, %v1566
    %v1575 = vadd.f32 %v1573, %v99
    %v1576 = vadd.f32 %v1574, %v100
    %v1577 = vsel %vm603, %v1575, -inf
    %1578 = vmax.xlane.f32.xlu0 %v1577
    %v1579 = vpop.xlane.xlu0 %1578
    %v1580 = vsel %vm603, %v1576, -inf
    %1581 = vmax.xlane.f32.xlu0 %v1580
    %v1582 = vpop.xlane.xlu0 %1581
    %v1583 = vsub.f32 %v1575, %v1579
    %v1584 = vsub.f32 %v1576, %v1582
    %v1585 = vmul.f32 %v1583, 1.442695
    %v1586 = vpow.pop %v1585
    %v1587 = vmul.f32 %v1584, 1.442695
    %v1588 = vpow.pop %v1587
    %v1590 = vsel %vm603, %v1586, 0
    %v1593 = vsel %vm603, %v1588, 0
    %1595 = vmatprep.subr.mxu0 0.0
    %1596 = vmatpush1.msra.mxu0 %v103
    %1597 = vmatprep.subr.mxu0 0.0
    %1598 = vmatpush1.msra.mxu0 %v103
    %1599 = vmatprep.subr.mxu0 0.0
    %1600 = vmatpush1.msra.mxu0 %v106
    %1601 = vmatprep.subr.mxu0 0.0
    %1602 = vmatpush1.msra.mxu0 %v106
    %1603 = vmatprep.subr.mxu0 0.0
    %1604 = vmatpush1.msra.mxu0 %v108
    %1605 = vmatprep.subr.mxu0 0.0
    %1606 = vmatpush1.msra.mxu0 %v108
    %1607 = vmatprep.subr.mxu0 0.0
    %1608 = vmatpush1.msra.mxu0 %v109
    %1609 = vmatprep.subr.mxu0 0.0
    %1610 = vmatpush1.msra.mxu0 %v109
    %1611 = vmatprep.subr.mxu0 0.0
    %1612 = vmatpush1.msra.mxu0 0.0
    %1613 = vmatprep.subr.mxu0 0.0
    %1614 = vmatpush1.msra.mxu0 0.0
    %1615 = vmatprep.subr.mxu0 0.0
    %1616 = vmatpush1.msra.mxu0 0.0
    %1617 = vmatprep.subr.mxu0 0.0
    %1618 = vmatpush1.msra.mxu0 0.0
    %1619 = vmatprep.subr.mxu0 0.0
    %1620 = vmatpush1.msra.mxu0 0.0
    %1621 = vmatprep.subr.mxu0 0.0
    %1622 = vmatpush1.msra.mxu0 0.0
    %1623 = vmatprep.subr.mxu0 0.0
    %1624 = vmatpush1.msra.mxu0 0.0
    %1625 = vmatprep.subr.mxu0 0.0
    %1626 = vmatpush1.msra.mxu0 0.0
    %1627 = vmatprep.subr.mxu0 0.0
    %1628 = vmatpush1.msra.mxu0 0.0
    %1629 = vmatprep.subr.mxu0 0.0
    %1630 = vmatpush1.msra.mxu0 0.0
    %1631 = vmatprep.subr.mxu0 0.0
    %1632 = vmatpush1.msra.mxu0 0.0
    %1633 = vmatprep.subr.mxu0 0.0
    %1634 = vmatpush1.msra.mxu0 0.0
    %1635 = vmatprep.subr.mxu0 0.0
    %1636 = vmatpush1.msra.mxu0 0.0
    %1637 = vmatprep.subr.mxu0 0.0
    %1638 = vmatpush1.msra.mxu0 0.0
    %1639 = vmatprep.subr.mxu0 0.0
    %1640 = vmatpush1.msra.mxu0 0.0
    %1641 = vmatprep.subr.mxu0 0.0
    %1642 = vmatpush1.msra.mxu0 0.0
    %1643 = vmatprep.subr.mxu0 0.0
    %1644 = vmatpush1.msra.mxu0 0.0
    %1645 = vmatprep.subr.mxu0 0.0
    %1646 = vmatpush1.msra.mxu0 0.0
    %1647 = vmatprep.subr.mxu0 0.0
    %1648 = vmatpush1.msra.mxu0 0.0
    %1649 = vmatprep.subr.mxu0 0.0
    %1650 = vmatpush1.msra.mxu0 0.0
    %1651 = vmatprep.subr.mxu0 0.0
    %1652 = vmatpush1.msra.mxu0 0.0
    %1653 = vmatprep.subr.mxu0 0.0
    %1654 = vmatpush1.msra.mxu0 0.0
    %1655 = vmatprep.subr.mxu0 0.0
    %1656 = vmatpush1.msra.mxu0 0.0
    %1657 = vmatprep.subr.mxu0 0.0
    %1658 = vmatpush1.msra.mxu0 0.0
    %1659 = vmatprep.mubr.f32.mxu0 0.0
    %1660 = vmatmul.mubr.f32.gmra.mrb[0].mxu0 %v1590
    %v1661 = vpop.f32.mrb[0].mxu0
    %v1662 = vadd.f32 0.0, %v1661
    %v1663 = vpop.f32.mrb[0].mxu0
    %1664 = vmatprep.mubr.f32.mxu0 0.0
    %1665 = vmatmul.mubr.f32.gmra.mrb[0].mxu0 %v1593
    %v1666 = vpop.f32.mrb[0].mxu0
    %v1667 = vadd.f32 0.0, %v1666
    %v1668 = vpop.f32.mrb[0].mxu0
    %1669 = vdwg.mxu0
    %v1670 = vrcp.pop %v1662
    %v1671 = vrcp.pop %v1667
    %v1672 = vmul.f32 %v1586, %v1670
    %v1673 = vmul.f32 %v1588, %v1671
    %v1674 = vstv %s1177
    %v1675 = vmul.f32 %v1674, %v1672
    %v1676 = vmul.f32 %v1674, %v1673
    %1679 = vrot.lane.b32.xlu0 %v1675, 96
    %v1680 = vpop.permute.xlu0 %1679
    %1681 = vrot.lane.b32.xlu0 %v1676, 96
    %v1682 = vpop.permute.xlu0 %1681
    %v1685 = vsub.f32 %v1672, %v1680
    %v1686 = vsub.f32 %v1673, %v1682
    %1687 = vrot.lane.b32.xlu0 %v1169, 64
    %v1688 = vpop.permute.xlu0 %1687
    %1689 = vrot.lane.b32.xlu0 %v1174, 64
    %v1690 = vpop.permute.xlu0 %1689
    %v1694 = vsel %vm92, %v1685, 0
    %v1697 = vsel %vm92, %v1686, 0
    %1699 = vmatprep.subr.mxu0 0.0
    %1700 = vmatpush1.msra.mxu0 %v1688
    %1701 = vmatprep.subr.mxu0 0.0
    %1702 = vmatpush1.msra.mxu0 %v1690
    %1703 = vmatprep.subr.mxu0 0.0
    %1704 = vmatpush1.msra.mxu0 0.0
    %1705 = vmatprep.subr.mxu0 0.0
    %1706 = vmatpush1.msra.mxu0 0.0
    %1707 = vmatprep.subr.mxu0 0.0
    %1708 = vmatpush1.msra.mxu0 0.0
    %1709 = vmatprep.subr.mxu0 0.0
    %1710 = vmatpush1.msra.mxu0 0.0
    %1711 = vmatprep.subr.mxu0 0.0
    %1712 = vmatpush1.msra.mxu0 0.0
    %1713 = vmatprep.subr.mxu0 0.0
    %1714 = vmatpush1.msra.mxu0 0.0
    %1715 = vmatprep.subr.mxu0 0.0
    %1716 = vmatpush1.msra.mxu0 0.0
    %1717 = vmatprep.subr.mxu0 0.0
    %1718 = vmatpush1.msra.mxu0 0.0
    %1719 = vmatprep.subr.mxu0 0.0
    %1720 = vmatpush1.msra.mxu0 0.0
    %1721 = vmatprep.subr.mxu0 0.0
    %1722 = vmatpush1.msra.mxu0 0.0
    %1723 = vmatprep.subr.mxu0 0.0
    %1724 = vmatpush1.msra.mxu0 0.0
    %1725 = vmatprep.subr.mxu0 0.0
    %1726 = vmatpush1.msra.mxu0 0.0
    %1727 = vmatprep.subr.mxu0 0.0
    %1728 = vmatpush1.msra.mxu0 0.0
    %1729 = vmatprep.subr.mxu0 0.0
    %1730 = vmatpush1.msra.mxu0 0.0
    %1731 = vmatprep.subr.mxu0 0.0
    %1732 = vmatpush1.msra.mxu0 0.0
    %1733 = vmatprep.subr.mxu0 0.0
    %1734 = vmatpush1.msra.mxu0 0.0
    %1735 = vmatprep.subr.mxu0 0.0
    %1736 = vmatpush1.msra.mxu0 0.0
    %1737 = vmatprep.subr.mxu0 0.0
    %1738 = vmatpush1.msra.mxu0 0.0
    %1739 = vmatprep.subr.mxu0 0.0
    %1740 = vmatpush1.msra.mxu0 0.0
    %1741 = vmatprep.subr.mxu0 0.0
    %1742 = vmatpush1.msra.mxu0 0.0
    %1743 = vmatprep.subr.mxu0 0.0
    %1744 = vmatpush1.msra.mxu0 0.0
    %1745 = vmatprep.subr.mxu0 0.0
    %1746 = vmatpush1.msra.mxu0 0.0
    %1747 = vmatprep.subr.mxu0 0.0
    %1748 = vmatpush1.msra.mxu0 0.0
    %1749 = vmatprep.subr.mxu0 0.0
    %1750 = vmatpush1.msra.mxu0 0.0
    %1751 = vmatprep.subr.mxu0 0.0
    %1752 = vmatpush1.msra.mxu0 0.0
    %1753 = vmatprep.subr.mxu0 0.0
    %1754 = vmatpush1.msra.mxu0 0.0
    %1755 = vmatprep.subr.mxu0 0.0
    %1756 = vmatpush1.msra.mxu0 0.0
    %1757 = vmatprep.subr.mxu0 0.0
    %1758 = vmatpush1.msra.mxu0 0.0
    %1759 = vmatprep.subr.mxu0 0.0
    %1760 = vmatpush1.msra.mxu0 0.0
    %1761 = vmatprep.subr.mxu0 0.0
    %1762 = vmatpush1.msra.mxu0 0.0
    %1763 = vmatprep.mubr.f32.mxu0 0.0
    %1764 = vmatmul.mubr.f32.gmra.mrb[0].mxu0 %v1694
    %v1765 = vpop.f32.mrb[0].mxu0
    %v1766 = vadd.f32 0.0, %v1765
    %v1767 = vpop.f32.mrb[0].mxu0
    %1768 = vmatprep.mubr.f32.mxu0 0.0
    %1769 = vmatmul.mubr.f32.gmra.mrb[0].mxu0 %v1697
    %v1770 = vpop.f32.mrb[0].mxu0
    %v1771 = vadd.f32 0.0, %v1770
    %v1772 = vpop.f32.mrb[0].mxu0
    %1773 = vdwg.mxu0
    %v1774 = vmul.f32 %v1766, %v1766
    %v1775 = vmul.f32 %v1771, %v1771
    %v1776 = vsel %vm92, %v1774, 0.0
    %1777 = vadd.xlane.f32.xlu0 %v1776
    %v1778 = vpop.xlane.xlu0 %1777
    %v1779 = vsel %vm92, %v1775, 0.0
    %1780 = vadd.xlane.f32.xlu0 %v1779
    %v1781 = vpop.xlane.xlu0 %1780
    %v1782 = vmul.f32 %v1778, %v809
    %v1783 = vmul.f32 %v1781, %v809
    %v1784 = vadd.f32 %v1782, 1e-05
    %v1785 = vadd.f32 %v1783, 1e-05
    %v1786 = vrsqrt.pop %v1784
    %v1787 = vrsqrt.pop %v1785
    %v1788 = vmul.f32 %v1766, %v1786
    %v1789 = vmul.f32 %v1771, %v1787
    %1790 = vrot.lane.b32.xlu0 %v1685, 112
    %v1791 = vpop.permute.xlu0 %1790
    %1792 = vrot.lane.b32.xlu0 %v1686, 112
    %v1793 = vpop.permute.xlu0 %1792
    %1794 = vrot.lane.b32.xlu0 %v1169, 48
    %v1795 = vpop.permute.xlu0 %1794
    %1796 = vrot.lane.b32.xlu0 %v1174, 48
    %v1797 = vpop.permute.xlu0 %1796
    %v1800 = vsel %vm92, %v1791, 0
    %v1802 = vsel %vm92, %v1793, 0
    %1804 = vmatprep.subr.mxu0 0.0
    %1805 = vmatpush1.msra.mxu0 %v1795
    %1806 = vmatprep.subr.mxu0 0.0
    %1807 = vmatpush1.msra.mxu0 %v1797
    %1808 = vmatprep.subr.mxu0 0.0
    %1809 = vmatpush1.msra.mxu0 0.0
    %1810 = vmatprep.subr.mxu0 0.0
    %1811 = vmatpush1.msra.mxu0 0.0
    %1812 = vmatprep.subr.mxu0 0.0
    %1813 = vmatpush1.msra.mxu0 0.0
    %1814 = vmatprep.subr.mxu0 0.0
    %1815 = vmatpush1.msra.mxu0 0.0
    %1816 = vmatprep.subr.mxu0 0.0
    %1817 = vmatpush1.msra.mxu0 0.0
    %1818 = vmatprep.subr.mxu0 0.0
    %1819 = vmatpush1.msra.mxu0 0.0
    %1820 = vmatprep.subr.mxu0 0.0
    %1821 = vmatpush1.msra.mxu0 0.0
    %1822 = vmatprep.subr.mxu0 0.0
    %1823 = vmatpush1.msra.mxu0 0.0
    %1824 = vmatprep.subr.mxu0 0.0
    %1825 = vmatpush1.msra.mxu0 0.0
    %1826 = vmatprep.subr.mxu0 0.0
    %1827 = vmatpush1.msra.mxu0 0.0
    %1828 = vmatprep.subr.mxu0 0.0
    %1829 = vmatpush1.msra.mxu0 0.0
    %1830 = vmatprep.subr.mxu0 0.0
    %1831 = vmatpush1.msra.mxu0 0.0
    %1832 = vmatprep.subr.mxu0 0.0
    %1833 = vmatpush1.msra.mxu0 0.0
    %1834 = vmatprep.subr.mxu0 0.0
    %1835 = vmatpush1.msra.mxu0 0.0
    %1836 = vmatprep.subr.mxu0 0.0
    %1837 = vmatpush1.msra.mxu0 0.0
    %1838 = vmatprep.subr.mxu0 0.0
    %1839 = vmatpush1.msra.mxu0 0.0
    %1840 = vmatprep.subr.mxu0 0.0
    %1841 = vmatpush1.msra.mxu0 0.0
    %1842 = vmatprep.subr.mxu0 0.0
    %1843 = vmatpush1.msra.mxu0 0.0
    %1844 = vmatprep.subr.mxu0 0.0
    %1845 = vmatpush1.msra.mxu0 0.0
    %1846 = vmatprep.subr.mxu0 0.0
    %1847 = vmatpush1.msra.mxu0 0.0
    %1848 = vmatprep.subr.mxu0 0.0
    %1849 = vmatpush1.msra.mxu0 0.0
    %1850 = vmatprep.subr.mxu0 0.0
    %1851 = vmatpush1.msra.mxu0 0.0
    %1852 = vmatprep.subr.mxu0 0.0
    %1853 = vmatpush1.msra.mxu0 0.0
    %1854 = vmatprep.subr.mxu0 0.0
    %1855 = vmatpush1.msra.mxu0 0.0
    %1856 = vmatprep.subr.mxu0 0.0
    %1857 = vmatpush1.msra.mxu0 0.0
    %1858 = vmatprep.subr.mxu0 0.0
    %1859 = vmatpush1.msra.mxu0 0.0
    %1860 = vmatprep.subr.mxu0 0.0
    %1861 = vmatpush1.msra.mxu0 0.0
    %1862 = vmatprep.subr.mxu0 0.0
    %1863 = vmatpush1.msra.mxu0 0.0
    %1864 = vmatprep.subr.mxu0 0.0
    %1865 = vmatpush1.msra.mxu0 0.0
    %1866 = vmatprep.subr.mxu0 0.0
    %1867 = vmatpush1.msra.mxu0 0.0
    %1868 = vmatprep.mubr.f32.mxu0 0.0
    %1869 = vmatmul.mubr.f32.gmra.mrb[0].mxu0 %v1800
    %v1870 = vpop.f32.mrb[0].mxu0
    %v1871 = vadd.f32 0.0, %v1870
    %v1872 = vpop.f32.mrb[0].mxu0
    %1873 = vmatprep.mubr.f32.mxu0 0.0
    %1874 = vmatmul.mubr.f32.gmra.mrb[0].mxu0 %v1802
    %v1875 = vpop.f32.mrb[0].mxu0
    %v1876 = vadd.f32 0.0, %v1875
    %v1877 = vpop.f32.mrb[0].mxu0
    %1878 = vdwg.mxu0
    %v1879 = vmul.f32 %v1871, %v1871
    %v1880 = vmul.f32 %v1876, %v1876
    %v1881 = vsel %vm92, %v1879, 0.0
    %1882 = vadd.xlane.f32.xlu0 %v1881
    %v1883 = vpop.xlane.xlu0 %1882
    %v1884 = vsel %vm92, %v1880, 0.0
    %1885 = vadd.xlane.f32.xlu0 %v1884
    %v1886 = vpop.xlane.xlu0 %1885
    %v1887 = vmul.f32 %v1883, %v809
    %v1888 = vmul.f32 %v1886, %v809
    %v1889 = vadd.f32 %v1887, 1e-05
    %v1890 = vadd.f32 %v1888, 1e-05
    %v1891 = vrsqrt.pop %v1889
    %v1892 = vrsqrt.pop %v1890
    %v1893 = vmul.f32 %v1871, %v1891
    %v1894 = vmul.f32 %v1876, %v1892
    %v1896 = vsel %vm92, %v1893, 0
    %v1899 = vsel %vm92, %v1894, 0
    %1901 = vmatprep.subr.mxu0 0.0
    %1902 = vmatpush1.msra.mxu0 %v1181
    %1903 = vmatprep.subr.mxu0 0.0
    %1904 = vmatpush1.msra.mxu0 %v1182
    %1905 = vmatprep.subr.mxu0 0.0
    %1906 = vmatpush1.msra.mxu0 0.0
    %1907 = vmatprep.subr.mxu0 0.0
    %1908 = vmatpush1.msra.mxu0 0.0
    %1909 = vmatprep.subr.mxu0 0.0
    %1910 = vmatpush1.msra.mxu0 0.0
    %1911 = vmatprep.subr.mxu0 0.0
    %1912 = vmatpush1.msra.mxu0 0.0
    %1913 = vmatprep.subr.mxu0 0.0
    %1914 = vmatpush1.msra.mxu0 0.0
    %1915 = vmatprep.subr.mxu0 0.0
    %1916 = vmatpush1.msra.mxu0 0.0
    %1917 = vmatprep.subr.mxu0 0.0
    %1918 = vmatpush1.msra.mxu0 0.0
    %1919 = vmatprep.subr.mxu0 0.0
    %1920 = vmatpush1.msra.mxu0 0.0
    %1921 = vmatprep.subr.mxu0 0.0
    %1922 = vmatpush1.msra.mxu0 0.0
    %1923 = vmatprep.subr.mxu0 0.0
    %1924 = vmatpush1.msra.mxu0 0.0
    %1925 = vmatprep.subr.mxu0 0.0
    %1926 = vmatpush1.msra.mxu0 0.0
    %1927 = vmatprep.subr.mxu0 0.0
    %1928 = vmatpush1.msra.mxu0 0.0
    %1929 = vmatprep.subr.mxu0 0.0
    %1930 = vmatpush1.msra.mxu0 0.0
    %1931 = vmatprep.subr.mxu0 0.0
    %1932 = vmatpush1.msra.mxu0 0.0
    %1933 = vmatprep.subr.mxu0 0.0
    %1934 = vmatpush1.msra.mxu0 0.0
    %1935 = vmatprep.subr.mxu0 0.0
    %1936 = vmatpush1.msra.mxu0 0.0
    %1937 = vmatprep.subr.mxu0 0.0
    %1938 = vmatpush1.msra.mxu0 0.0
    %1939 = vmatprep.subr.mxu0 0.0
    %1940 = vmatpush1.msra.mxu0 0.0
    %1941 = vmatprep.subr.mxu0 0.0
    %1942 = vmatpush1.msra.mxu0 0.0
    %1943 = vmatprep.subr.mxu0 0.0
    %1944 = vmatpush1.msra.mxu0 0.0
    %1945 = vmatprep.subr.mxu0 0.0
    %1946 = vmatpush1.msra.mxu0 0.0
    %1947 = vmatprep.subr.mxu0 0.0
    %1948 = vmatpush1.msra.mxu0 0.0
    %1949 = vmatprep.subr.mxu0 0.0
    %1950 = vmatpush1.msra.mxu0 0.0
    %1951 = vmatprep.subr.mxu0 0.0
    %1952 = vmatpush1.msra.mxu0 0.0
    %1953 = vmatprep.subr.mxu0 0.0
    %1954 = vmatpush1.msra.mxu0 0.0
    %1955 = vmatprep.subr.mxu0 0.0
    %1956 = vmatpush1.msra.mxu0 0.0
    %1957 = vmatprep.subr.mxu0 0.0
    %1958 = vmatpush1.msra.mxu0 0.0
    %1959 = vmatprep.subr.mxu0 0.0
    %1960 = vmatpush1.msra.mxu0 0.0
    %1961 = vmatprep.subr.mxu0 0.0
    %1962 = vmatpush1.msra.mxu0 0.0
    %1963 = vmatprep.subr.mxu0 0.0
    %1964 = vmatpush1.msra.mxu0 0.0
    %1965 = vmatprep.mubr.f32.mxu0 0.0
    %1966 = vmatmul.mubr.f32.gmra.mrb[0].mxu0 %v1896
    %v1967 = vpop.f32.mrb[0].mxu0
    %v1968 = vadd.f32 0.0, %v1967
    %v1969 = vpop.f32.mrb[0].mxu0
    %1970 = vmatprep.mubr.f32.mxu0 0.0
    %1971 = vmatmul.mubr.f32.gmra.mrb[0].mxu0 %v1899
    %v1972 = vpop.f32.mrb[0].mxu0
    %v1973 = vadd.f32 0.0, %v1972
    %v1974 = vpop.f32.mrb[0].mxu0
    %1975 = vdwg.mxu0
    %v1977 = vsel %vm92, %v1788, 0
    %v1980 = vsel %vm92, %v1789, 0
    %1982 = vmatprep.subr.mxu0 0.0
    %1983 = vmatpush1.msra.mxu0 %v1179
    %1984 = vmatprep.subr.mxu0 0.0
    %1985 = vmatpush1.msra.mxu0 %v1180
    %1986 = vmatprep.subr.mxu0 0.0
    %1987 = vmatpush1.msra.mxu0 0.0
    %1988 = vmatprep.subr.mxu0 0.0
    %1989 = vmatpush1.msra.mxu0 0.0
    %1990 = vmatprep.subr.mxu0 0.0
    %1991 = vmatpush1.msra.mxu0 0.0
    %1992 = vmatprep.subr.mxu0 0.0
    %1993 = vmatpush1.msra.mxu0 0.0
    %1994 = vmatprep.subr.mxu0 0.0
    %1995 = vmatpush1.msra.mxu0 0.0
    %1996 = vmatprep.subr.mxu0 0.0
    %1997 = vmatpush1.msra.mxu0 0.0
    %1998 = vmatprep.subr.mxu0 0.0
    %1999 = vmatpush1.msra.mxu0 0.0
    %2000 = vmatprep.subr.mxu0 0.0
    %2001 = vmatpush1.msra.mxu0 0.0
    %2002 = vmatprep.subr.mxu0 0.0
    %2003 = vmatpush1.msra.mxu0 0.0
    %2004 = vmatprep.subr.mxu0 0.0
    %2005 = vmatpush1.msra.mxu0 0.0
    %2006 = vmatprep.subr.mxu0 0.0
    %2007 = vmatpush1.msra.mxu0 0.0
    %2008 = vmatprep.subr.mxu0 0.0
    %2009 = vmatpush1.msra.mxu0 0.0
    %2010 = vmatprep.subr.mxu0 0.0
    %2011 = vmatpush1.msra.mxu0 0.0
    %2012 = vmatprep.subr.mxu0 0.0
    %2013 = vmatpush1.msra.mxu0 0.0
    %2014 = vmatprep.subr.mxu0 0.0
    %2015 = vmatpush1.msra.mxu0 0.0
    %2016 = vmatprep.subr.mxu0 0.0
    %2017 = vmatpush1.msra.mxu0 0.0
    %2018 = vmatprep.subr.mxu0 0.0
    %2019 = vmatpush1.msra.mxu0 0.0
    %2020 = vmatprep.subr.mxu0 0.0
    %2021 = vmatpush1.msra.mxu0 0.0
    %2022 = vmatprep.subr.mxu0 0.0
    %2023 = vmatpush1.msra.mxu0 0.0
    %2024 = vmatprep.subr.mxu0 0.0
    %2025 = vmatpush1.msra.mxu0 0.0
    %2026 = vmatprep.subr.mxu0 0.0
    %2027 = vmatpush1.msra.mxu0 0.0
    %2028 = vmatprep.subr.mxu0 0.0
    %2029 = vmatpush1.msra.mxu0 0.0
    %2030 = vmatprep.subr.mxu0 0.0
    %2031 = vmatpush1.msra.mxu0 0.0
    %2032 = vmatprep.subr.mxu0 0.0
    %2033 = vmatpush1.msra.mxu0 0.0
    %2034 = vmatprep.subr.mxu0 0.0
    %2035 = vmatpush1.msra.mxu0 0.0
    %2036 = vmatprep.subr.mxu0 0.0
    %2037 = vmatpush1.msra.mxu0 0.0
    %2038 = vmatprep.subr.mxu0 0.0
    %2039 = vmatpush1.msra.mxu0 0.0
    %2040 = vmatprep.subr.mxu0 0.0
    %2041 = vmatpush1.msra.mxu0 0.0
    %2042 = vmatprep.subr.mxu0 0.0
    %2043 = vmatpush1.msra.mxu0 0.0
    %2044 = vmatprep.subr.mxu0 0.0
    %2045 = vmatpush1.msra.mxu0 0.0
    %2046 = vmatprep.mubr.f32.mxu0 0.0
    %2047 = vmatmul.mubr.f32.gmra.mrb[0].mxu0 %v1977
    %v2048 = vpop.f32.mrb[0].mxu0
    %v2049 = vadd.f32 %v1968, %v2048
    %v2050 = vpop.f32.mrb[0].mxu0
    %2051 = vmatprep.mubr.f32.mxu0 0.0
    %2052 = vmatmul.mubr.f32.gmra.mrb[0].mxu0 %v1980
    %v2053 = vpop.f32.mrb[0].mxu0
    %v2054 = vadd.f32 %v1973, %v2053
    %v2055 = vpop.f32.mrb[0].mxu0
    %2056 = vdwg.mxu0
    %s2057 = scalar_lea.vmem [#allocation6], 256
    %v2058 = vld [vmem:[%s2057] sm:$0xff]
    %v2059 = vld [vmem:[%s2057 + $0x8] sm:$0xff]
    %v2060 = vld [vmem:[%s2057 + $0x10] sm:$0xff]
    %v2061 = vld [vmem:[%s2057 + $0x18] sm:$0xff]
    %v2062 = vld [vmem:[%s2057 + $0x20] sm:$0xff]
    %v2063 = vld [vmem:[%s2057 + $0x28] sm:$0xff]
    %v2064 = vld [vmem:[%s2057 + $0x30] sm:$0xff]
    %v2065 = vld [vmem:[%s2057 + $0x38] sm:$0xff]
    %v2066 = vld [vmem:[%s2057 + $0x40] sm:$0xff]
    %v2067 = vld [vmem:[%s2057 + $0x48] sm:$0xff]
    %v2068 = vld [vmem:[%s2057 + $0x50] sm:$0xff]
    %v2069 = vld [vmem:[%s2057 + $0x58] sm:$0xff]
    %v2070 = vld [vmem:[%s2057 + $0x60] sm:$0xff]
    %v2071 = vld [vmem:[%s2057 + $0x68] sm:$0xff]
    %v2072 = vld [vmem:[%s2057 + $0x70] sm:$0xff]
    %v2073 = vld [vmem:[%s2057 + $0x78] sm:$0xff]
    %2074 = vmatprep.subr.mxu0 0.0
    %2075 = vmatpush1.msra.mxu0 %v2058
    %2076 = vmatprep.subr.mxu0 0.0
    %2077 = vmatpush1.msra.mxu0 %v2059
    %2078 = vmatprep.subr.mxu0 0.0
    %2079 = vmatpush1.msra.mxu0 %v2060
    %2080 = vmatprep.subr.mxu0 0.0
    %2081 = vmatpush1.msra.mxu0 %v2061
    %2082 = vmatprep.subr.mxu0 0.0
    %2083 = vmatpush1.msra.mxu0 %v2062
    %2084 = vmatprep.subr.mxu0 0.0
    %2085 = vmatpush1.msra.mxu0 %v2063
    %2086 = vmatprep.subr.mxu0 0.0
    %2087 = vmatpush1.msra.mxu0 %v2064
    %2088 = vmatprep.subr.mxu0 0.0
    %2089 = vmatpush1.msra.mxu0 %v2065
    %2090 = vmatprep.subr.mxu0 0.0
    %2091 = vmatpush1.msra.mxu0 %v2066
    %2092 = vmatprep.subr.mxu0 0.0
    %2093 = vmatpush1.msra.mxu0 %v2067
    %2094 = vmatprep.subr.mxu0 0.0
    %2095 = vmatpush1.msra.mxu0 %v2068
    %2096 = vmatprep.subr.mxu0 0.0
    %2097 = vmatpush1.msra.mxu0 %v2069
    %2098 = vmatprep.subr.mxu0 0.0
    %2099 = vmatpush1.msra.mxu0 %v2070
    %2100 = vmatprep.subr.mxu0 0.0
    %2101 = vmatpush1.msra.mxu0 %v2071
    %2102 = vmatprep.subr.mxu0 0.0
    %2103 = vmatpush1.msra.mxu0 %v2072
    %2104 = vmatprep.subr.mxu0 0.0
    %2105 = vmatpush1.msra.mxu0 %v2073
    %2106 = vmatprep.subr.mxu0 0.0
    %2107 = vmatpush1.msra.mxu0 0.0
    %2108 = vmatprep.subr.mxu0 0.0
    %2109 = vmatpush1.msra.mxu0 0.0
    %2110 = vmatprep.subr.mxu0 0.0
    %2111 = vmatpush1.msra.mxu0 0.0
    %2112 = vmatprep.subr.mxu0 0.0
    %2113 = vmatpush1.msra.mxu0 0.0
    %2114 = vmatprep.subr.mxu0 0.0
    %2115 = vmatpush1.msra.mxu0 0.0
    %2116 = vmatprep.subr.mxu0 0.0
    %2117 = vmatpush1.msra.mxu0 0.0
    %2118 = vmatprep.subr.mxu0 0.0
    %2119 = vmatpush1.msra.mxu0 0.0
    %2120 = vmatprep.subr.mxu0 0.0
    %2121 = vmatpush1.msra.mxu0 0.0
    %2122 = vmatprep.subr.mxu0 0.0
    %2123 = vmatpush1.msra.mxu0 0.0
    %2124 = vmatprep.subr.mxu0 0.0
    %2125 = vmatpush1.msra.mxu0 0.0
    %2126 = vmatprep.subr.mxu0 0.0
    %2127 = vmatpush1.msra.mxu0 0.0
    %2128 = vmatprep.subr.mxu0 0.0
    %2129 = vmatpush1.msra.mxu0 0.0
    %2130 = vmatprep.subr.mxu0 0.0
    %2131 = vmatpush1.msra.mxu0 0.0
    %2132 = vmatprep.subr.mxu0 0.0
    %2133 = vmatpush1.msra.mxu0 0.0
    %2134 = vmatprep.subr.mxu0 0.0
    %2135 = vmatpush1.msra.mxu0 0.0
    %2136 = vmatprep.subr.mxu0 0.0
    %2137 = vmatpush1.msra.mxu0 0.0
    %2138 = vmatprep.mubr.f32.mxu0 0.0
    %2139 = vmatmul.mubr.f32.gmra.mrb[0].mxu0 %v2049
    %v2140 = vpop.f32.mrb[0].mxu0
    %v2141 = vadd.f32 0.0, %v2140
    %v2142 = vpop.f32.mrb[0].mxu0
    %2143 = vmatprep.mubr.f32.mxu0 0.0
    %2144 = vmatmul.mubr.f32.gmra.mrb[0].mxu0 %v2054
    %v2145 = vpop.f32.mrb[0].mxu0
    %v2146 = vadd.f32 0.0, %v2145
    %v2147 = vpop.f32.mrb[0].mxu0
    %2148 = vdwg.mxu0
    %s2149 = sld [smem:[#allocation2 + $0x2]]
    %s2150 = scalar_lea.vmem [#allocation7], 64
    %v2151 = vld [vmem:[%s2150] sm:$0xff]
    %v2152 = vld [vmem:[%s2150 + $0x8] sm:$0xff]
    %v2153 = vld [vmem:[%s2150 + $0x10] sm:$0xff]
    %v2154 = vld [vmem:[%s2150 + $0x18] sm:$0xff]
    %2157 = vrot.lane.b32.xlu0 %v2141, 96
    %v2158 = vpop.permute.xlu0 %2157
    %2159 = vrot.lane.b32.xlu0 %v2146, 96
    %v2160 = vpop.permute.xlu0 %2159
    %v2161 = vsel %vm214, %v2141, 0
    %v2163 = vsel %vm214, %v2146, 0
    %v2165 = vsel %vm214, %v2158, 0
    %v2167 = vsel %vm214, %v2160, 0
    %2169 = vmatprep.subr.mxu0 0.0
    %2170 = vmatpush1.xpose.msra.mxu0 %v2165
    %2171 = vmatprep.subr.mxu0 0.0
    %2172 = vmatpush1.xpose.msra.mxu0 %v2167
    %2173 = vmatprep.subr.mxu0 0.0
    %2174 = vmatpush1.xpose.msra.mxu0 0.0
    %2175 = vmatprep.subr.mxu0 0.0
    %2176 = vmatpush1.xpose.msra.mxu0 0.0
    %2177 = vmatprep.subr.mxu0 0.0
    %2178 = vmatpush1.xpose.msra.mxu0 0.0
    %2179 = vmatprep.subr.mxu0 0.0
    %2180 = vmatpush1.xpose.msra.mxu0 0.0
    %2181 = vmatprep.subr.mxu0 0.0
    %2182 = vmatpush1.xpose.msra.mxu0 0.0
    %2183 = vmatprep.subr.mxu0 0.0
    %2184 = vmatpush1.xpose.msra.mxu0 0.0
    %2185 = vmatprep.subr.mxu0 0.0
    %2186 = vmatpush1.xpose.msra.mxu0 0.0
    %2187 = vmatprep.subr.mxu0 0.0
    %2188 = vmatpush1.xpose.msra.mxu0 0.0
    %2189 = vmatprep.subr.mxu0 0.0
    %2190 = vmatpush1.xpose.msra.mxu0 0.0
    %2191 = vmatprep.subr.mxu0 0.0
    %2192 = vmatpush1.xpose.msra.mxu0 0.0
    %2193 = vmatprep.subr.mxu0 0.0
    %2194 = vmatpush1.xpose.msra.mxu0 0.0
    %2195 = vmatprep.subr.mxu0 0.0
    %2196 = vmatpush1.xpose.msra.mxu0 0.0
    %2197 = vmatprep.subr.mxu0 0.0
    %2198 = vmatpush1.xpose.msra.mxu0 0.0
    %2199 = vmatprep.subr.mxu0 0.0
    %2200 = vmatpush1.xpose.msra.mxu0 0.0
    %2201 = vmatprep.subr.mxu0 0.0
    %2202 = vmatpush1.xpose.msra.mxu0 0.0
    %2203 = vmatprep.subr.mxu0 0.0
    %2204 = vmatpush1.xpose.msra.mxu0 0.0
    %2205 = vmatprep.subr.mxu0 0.0
    %2206 = vmatpush1.xpose.msra.mxu0 0.0
    %2207 = vmatprep.subr.mxu0 0.0
    %2208 = vmatpush1.xpose.msra.mxu0 0.0
    %2209 = vmatprep.subr.mxu0 0.0
    %2210 = vmatpush1.xpose.msra.mxu0 0.0
    %2211 = vmatprep.subr.mxu0 0.0
    %2212 = vmatpush1.xpose.msra.mxu0 0.0
    %2213 = vmatprep.subr.mxu0 0.0
    %2214 = vmatpush1.xpose.msra.mxu0 0.0
    %2215 = vmatprep.subr.mxu0 0.0
    %2216 = vmatpush1.xpose.msra.mxu0 0.0
    %2217 = vmatprep.subr.mxu0 0.0
    %2218 = vmatpush1.xpose.msra.mxu0 0.0
    %2219 = vmatprep.subr.mxu0 0.0
    %2220 = vmatpush1.xpose.msra.mxu0 0.0
    %2221 = vmatprep.subr.mxu0 0.0
    %2222 = vmatpush1.xpose.msra.mxu0 0.0
    %2223 = vmatprep.subr.mxu0 0.0
    %2224 = vmatpush1.xpose.msra.mxu0 0.0
    %2225 = vmatprep.subr.mxu0 0.0
    %2226 = vmatpush1.xpose.msra.mxu0 0.0
    %2227 = vmatprep.subr.mxu0 0.0
    %2228 = vmatpush1.xpose.msra.mxu0 0.0
    %2229 = vmatprep.subr.mxu0 0.0
    %2230 = vmatpush1.xpose.msra.mxu0 0.0
    %2231 = vmatprep.subr.mxu0 0.0
    %2232 = vmatpush1.xpose.msra.mxu0 0.0
    %2233 = vmatprep.mubr.f32.mxu0 0.0
    %2234 = vmatmul.mubr.f32.gmra.mrb[0].mxu0 %v2161
    %v2235 = vpop.f32.mrb[0].mxu0
    %v2236 = vadd.f32 0.0, %v2235
    %v2237 = vpop.f32.mrb[0].mxu0
    %2238 = vmatprep.mubr.f32.mxu0 0.0
    %2239 = vmatmul.mubr.f32.gmra.mrb[0].mxu0 %v2163
    %v2240 = vpop.f32.mrb[0].mxu0
    %v2241 = vadd.f32 0.0, %v2240
    %v2242 = vpop.f32.mrb[0].mxu0
    %2243 = vdwg.mxu0
    %2244 = vrot.lane.b32.xlu0 %v2141, 120
    %v2245 = vpop.permute.xlu0 %2244
    %2246 = vrot.lane.b32.xlu0 %v2146, 120
    %v2247 = vpop.permute.xlu0 %2246
    %2248 = vrot.lane.b32.xlu0 %v2141, 88
    %v2249 = vpop.permute.xlu0 %2248
    %2250 = vrot.lane.b32.xlu0 %v2146, 88
    %v2251 = vpop.permute.xlu0 %2250
    %v2252 = vsel %vm214, %v2245, 0
    %v2254 = vsel %vm214, %v2247, 0
    %v2256 = vsel %vm214, %v2249, 0
    %v2258 = vsel %vm214, %v2251, 0
    %2260 = vmatprep.subr.mxu0 0.0
    %2261 = vmatpush1.xpose.msra.mxu0 %v2256
    %2262 = vmatprep.subr.mxu0 0.0
    %2263 = vmatpush1.xpose.msra.mxu0 %v2258
    %2264 = vmatprep.subr.mxu0 0.0
    %2265 = vmatpush1.xpose.msra.mxu0 0.0
    %2266 = vmatprep.subr.mxu0 0.0
    %2267 = vmatpush1.xpose.msra.mxu0 0.0
    %2268 = vmatprep.subr.mxu0 0.0
    %2269 = vmatpush1.xpose.msra.mxu0 0.0
    %2270 = vmatprep.subr.mxu0 0.0
    %2271 = vmatpush1.xpose.msra.mxu0 0.0
    %2272 = vmatprep.subr.mxu0 0.0
    %2273 = vmatpush1.xpose.msra.mxu0 0.0
    %2274 = vmatprep.subr.mxu0 0.0
    %2275 = vmatpush1.xpose.msra.mxu0 0.0
    %2276 = vmatprep.subr.mxu0 0.0
    %2277 = vmatpush1.xpose.msra.mxu0 0.0
    %2278 = vmatprep.subr.mxu0 0.0
    %2279 = vmatpush1.xpose.msra.mxu0 0.0
    %2280 = vmatprep.subr.mxu0 0.0
    %2281 = vmatpush1.xpose.msra.mxu0 0.0
    %2282 = vmatprep.subr.mxu0 0.0
    %2283 = vmatpush1.xpose.msra.mxu0 0.0
    %2284 = vmatprep.subr.mxu0 0.0
    %2285 = vmatpush1.xpose.msra.mxu0 0.0
    %2286 = vmatprep.subr.mxu0 0.0
    %2287 = vmatpush1.xpose.msra.mxu0 0.0
    %2288 = vmatprep.subr.mxu0 0.0
    %2289 = vmatpush1.xpose.msra.mxu0 0.0
    %2290 = vmatprep.subr.mxu0 0.0
    %2291 = vmatpush1.xpose.msra.mxu0 0.0
    %2292 = vmatprep.subr.mxu0 0.0
    %2293 = vmatpush1.xpose.msra.mxu0 0.0
    %2294 = vmatprep.subr.mxu0 0.0
    %2295 = vmatpush1.xpose.msra.mxu0 0.0
    %2296 = vmatprep.subr.mxu0 0.0
    %2297 = vmatpush1.xpose.msra.mxu0 0.0
    %2298 = vmatprep.subr.mxu0 0.0
    %2299 = vmatpush1.xpose.msra.mxu0 0.0
    %2300 = vmatprep.subr.mxu0 0.0
    %2301 = vmatpush1.xpose.msra.mxu0 0.0
    %2302 = vmatprep.subr.mxu0 0.0
    %2303 = vmatpush1.xpose.msra.mxu0 0.0
    %2304 = vmatprep.subr.mxu0 0.0
    %2305 = vmatpush1.xpose.msra.mxu0 0.0
    %2306 = vmatprep.subr.mxu0 0.0
    %2307 = vmatpush1.xpose.msra.mxu0 0.0
    %2308 = vmatprep.subr.mxu0 0.0
    %2309 = vmatpush1.xpose.msra.mxu0 0.0
    %2310 = vmatprep.subr.mxu0 0.0
    %2311 = vmatpush1.xpose.msra.mxu0 0.0
    %2312 = vmatprep.subr.mxu0 0.0
    %2313 = vmatpush1.xpose.msra.mxu0 0.0
    %2314 = vmatprep.subr.mxu0 0.0
    %2315 = vmatpush1.xpose.msra.mxu0 0.0
    %2316 = vmatprep.subr.mxu0 0.0
    %2317 = vmatpush1.xpose.msra.mxu0 0.0
    %2318 = vmatprep.subr.mxu0 0.0
    %2319 = vmatpush1.xpose.msra.mxu0 0.0
    %2320 = vmatprep.subr.mxu0 0.0
    %2321 = vmatpush1.xpose.msra.mxu0 0.0
    %2322 = vmatprep.subr.mxu0 0.0
    %2323 = vmatpush1.xpose.msra.mxu0 0.0
    %2324 = vmatprep.mubr.f32.mxu0 0.0
    %2325 = vmatmul.mubr.f32.gmra.mrb[0].mxu0 %v2252
    %v2326 = vpop.f32.mrb[0].mxu0
    %v2327 = vadd.f32 0.0, %v2326
    %v2328 = vpop.f32.mrb[0].mxu0
    %2329 = vmatprep.mubr.f32.mxu0 0.0
    %2330 = vmatmul.mubr.f32.gmra.mrb[0].mxu0 %v2254
    %v2331 = vpop.f32.mrb[0].mxu0
    %v2332 = vadd.f32 0.0, %v2331
    %v2333 = vpop.f32.mrb[0].mxu0
    %2334 = vdwg.mxu0
    %2335 = vrot.lane.b32.xlu0 %v2141, 112
    %v2336 = vpop.permute.xlu0 %2335
    %2337 = vrot.lane.b32.xlu0 %v2146, 112
    %v2338 = vpop.permute.xlu0 %2337
    %2339 = vrot.lane.b32.xlu0 %v2141, 80
    %v2340 = vpop.permute.xlu0 %2339
    %2341 = vrot.lane.b32.xlu0 %v2146, 80
    %v2342 = vpop.permute.xlu0 %2341
    %v2343 = vsel %vm214, %v2336, 0
    %v2345 = vsel %vm214, %v2338, 0
    %v2347 = vsel %vm214, %v2340, 0
    %v2349 = vsel %vm214, %v2342, 0
    %2351 = vmatprep.subr.mxu0 0.0
    %2352 = vmatpush1.xpose.msra.mxu0 %v2347
    %2353 = vmatprep.subr.mxu0 0.0
    %2354 = vmatpush1.xpose.msra.mxu0 %v2349
    %2355 = vmatprep.subr.mxu0 0.0
    %2356 = vmatpush1.xpose.msra.mxu0 0.0
    %2357 = vmatprep.subr.mxu0 0.0
    %2358 = vmatpush1.xpose.msra.mxu0 0.0
    %2359 = vmatprep.subr.mxu0 0.0
    %2360 = vmatpush1.xpose.msra.mxu0 0.0
    %2361 = vmatprep.subr.mxu0 0.0
    %2362 = vmatpush1.xpose.msra.mxu0 0.0
    %2363 = vmatprep.subr.mxu0 0.0
    %2364 = vmatpush1.xpose.msra.mxu0 0.0
    %2365 = vmatprep.subr.mxu0 0.0
    %2366 = vmatpush1.xpose.msra.mxu0 0.0
    %2367 = vmatprep.subr.mxu0 0.0
    %2368 = vmatpush1.xpose.msra.mxu0 0.0
    %2369 = vmatprep.subr.mxu0 0.0
    %2370 = vmatpush1.xpose.msra.mxu0 0.0
    %2371 = vmatprep.subr.mxu0 0.0
    %2372 = vmatpush1.xpose.msra.mxu0 0.0
    %2373 = vmatprep.subr.mxu0 0.0
    %2374 = vmatpush1.xpose.msra.mxu0 0.0
    %2375 = vmatprep.subr.mxu0 0.0
    %2376 = vmatpush1.xpose.msra.mxu0 0.0
    %2377 = vmatprep.subr.mxu0 0.0
    %2378 = vmatpush1.xpose.msra.mxu0 0.0
    %2379 = vmatprep.subr.mxu0 0.0
    %2380 = vmatpush1.xpose.msra.mxu0 0.0
    %2381 = vmatprep.subr.mxu0 0.0
    %2382 = vmatpush1.xpose.msra.mxu0 0.0
    %2383 = vmatprep.subr.mxu0 0.0
    %2384 = vmatpush1.xpose.msra.mxu0 0.0
    %2385 = vmatprep.subr.mxu0 0.0
    %2386 = vmatpush1.xpose.msra.mxu0 0.0
    %2387 = vmatprep.subr.mxu0 0.0
    %2388 = vmatpush1.xpose.msra.mxu0 0.0
    %2389 = vmatprep.subr.mxu0 0.0
    %2390 = vmatpush1.xpose.msra.mxu0 0.0
    %2391 = vmatprep.subr.mxu0 0.0
    %2392 = vmatpush1.xpose.msra.mxu0 0.0
    %2393 = vmatprep.subr.mxu0 0.0
    %2394 = vmatpush1.xpose.msra.mxu0 0.0
    %2395 = vmatprep.subr.mxu0 0.0
    %2396 = vmatpush1.xpose.msra.mxu0 0.0
    %2397 = vmatprep.subr.mxu0 0.0
    %2398 = vmatpush1.xpose.msra.mxu0 0.0
    %2399 = vmatprep.subr.mxu0 0.0
    %2400 = vmatpush1.xpose.msra.mxu0 0.0
    %2401 = vmatprep.subr.mxu0 0.0
    %2402 = vmatpush1.xpose.msra.mxu0 0.0
    %2403 = vmatprep.subr.mxu0 0.0
    %2404 = vmatpush1.xpose.msra.mxu0 0.0
    %2405 = vmatprep.subr.mxu0 0.0
    %2406 = vmatpush1.xpose.msra.mxu0 0.0
    %2407 = vmatprep.subr.mxu0 0.0
    %2408 = vmatpush1.xpose.msra.mxu0 0.0
    %2409 = vmatprep.subr.mxu0 0.0
    %2410 = vmatpush1.xpose.msra.mxu0 0.0
    %2411 = vmatprep.subr.mxu0 0.0
    %2412 = vmatpush1.xpose.msra.mxu0 0.0
    %2413 = vmatprep.subr.mxu0 0.0
    %2414 = vmatpush1.xpose.msra.mxu0 0.0
    %2415 = vmatprep.mubr.f32.mxu0 0.0
    %2416 = vmatmul.mubr.f32.gmra.mrb[0].mxu0 %v2343
    %v2417 = vpop.f32.mrb[0].mxu0
    %v2418 = vadd.f32 0.0, %v2417
    %v2419 = vpop.f32.mrb[0].mxu0
    %2420 = vmatprep.mubr.f32.mxu0 0.0
    %2421 = vmatmul.mubr.f32.gmra.mrb[0].mxu0 %v2345
    %v2422 = vpop.f32.mrb[0].mxu0
    %v2423 = vadd.f32 0.0, %v2422
    %v2424 = vpop.f32.mrb[0].mxu0
    %2425 = vdwg.mxu0
    %2426 = vrot.lane.b32.xlu0 %v2141, 104
    %v2427 = vpop.permute.xlu0 %2426
    %2428 = vrot.lane.b32.xlu0 %v2146, 104
    %v2429 = vpop.permute.xlu0 %2428
    %2430 = vrot.lane.b32.xlu0 %v2141, 72
    %v2431 = vpop.permute.xlu0 %2430
    %2432 = vrot.lane.b32.xlu0 %v2146, 72
    %v2433 = vpop.permute.xlu0 %2432
    %v2434 = vsel %vm214, %v2427, 0
    %v2436 = vsel %vm214, %v2429, 0
    %v2438 = vsel %vm214, %v2431, 0
    %v2440 = vsel %vm214, %v2433, 0
    %2442 = vmatprep.subr.mxu0 0.0
    %2443 = vmatpush1.xpose.msra.mxu0 %v2438
    %2444 = vmatprep.subr.mxu0 0.0
    %2445 = vmatpush1.xpose.msra.mxu0 %v2440
    %2446 = vmatprep.subr.mxu0 0.0
    %2447 = vmatpush1.xpose.msra.mxu0 0.0
    %2448 = vmatprep.subr.mxu0 0.0
    %2449 = vmatpush1.xpose.msra.mxu0 0.0
    %2450 = vmatprep.subr.mxu0 0.0
    %2451 = vmatpush1.xpose.msra.mxu0 0.0
    %2452 = vmatprep.subr.mxu0 0.0
    %2453 = vmatpush1.xpose.msra.mxu0 0.0
    %2454 = vmatprep.subr.mxu0 0.0
    %2455 = vmatpush1.xpose.msra.mxu0 0.0
    %2456 = vmatprep.subr.mxu0 0.0
    %2457 = vmatpush1.xpose.msra.mxu0 0.0
    %2458 = vmatprep.subr.mxu0 0.0
    %2459 = vmatpush1.xpose.msra.mxu0 0.0
    %2460 = vmatprep.subr.mxu0 0.0
    %2461 = vmatpush1.xpose.msra.mxu0 0.0
    %2462 = vmatprep.subr.mxu0 0.0
    %2463 = vmatpush1.xpose.msra.mxu0 0.0
    %2464 = vmatprep.subr.mxu0 0.0
    %2465 = vmatpush1.xpose.msra.mxu0 0.0
    %2466 = vmatprep.subr.mxu0 0.0
    %2467 = vmatpush1.xpose.msra.mxu0 0.0
    %2468 = vmatprep.subr.mxu0 0.0
    %2469 = vmatpush1.xpose.msra.mxu0 0.0
    %2470 = vmatprep.subr.mxu0 0.0
    %2471 = vmatpush1.xpose.msra.mxu0 0.0
    %2472 = vmatprep.subr.mxu0 0.0
    %2473 = vmatpush1.xpose.msra.mxu0 0.0
    %2474 = vmatprep.subr.mxu0 0.0
    %2475 = vmatpush1.xpose.msra.mxu0 0.0
    %2476 = vmatprep.subr.mxu0 0.0
    %2477 = vmatpush1.xpose.msra.mxu0 0.0
    %2478 = vmatprep.subr.mxu0 0.0
    %2479 = vmatpush1.xpose.msra.mxu0 0.0
    %2480 = vmatprep.subr.mxu0 0.0
    %2481 = vmatpush1.xpose.msra.mxu0 0.0
    %2482 = vmatprep.subr.mxu0 0.0
    %2483 = vmatpush1.xpose.msra.mxu0 0.0
    %2484 = vmatprep.subr.mxu0 0.0
    %2485 = vmatpush1.xpose.msra.mxu0 0.0
    %2486 = vmatprep.subr.mxu0 0.0
    %2487 = vmatpush1.xpose.msra.mxu0 0.0
    %2488 = vmatprep.subr.mxu0 0.0
    %2489 = vmatpush1.xpose.msra.mxu0 0.0
    %2490 = vmatprep.subr.mxu0 0.0
    %2491 = vmatpush1.xpose.msra.mxu0 0.0
    %2492 = vmatprep.subr.mxu0 0.0
    %2493 = vmatpush1.xpose.msra.mxu0 0.0
    %2494 = vmatprep.subr.mxu0 0.0
    %2495 = vmatpush1.xpose.msra.mxu0 0.0
    %2496 = vmatprep.subr.mxu0 0.0
    %2497 = vmatpush1.xpose.msra.mxu0 0.0
    %2498 = vmatprep.subr.mxu0 0.0
    %2499 = vmatpush1.xpose.msra.mxu0 0.0
    %2500 = vmatprep.subr.mxu0 0.0
    %2501 = vmatpush1.xpose.msra.mxu0 0.0
    %2502 = vmatprep.subr.mxu0 0.0
    %2503 = vmatpush1.xpose.msra.mxu0 0.0
    %2504 = vmatprep.subr.mxu0 0.0
    %2505 = vmatpush1.xpose.msra.mxu0 0.0
    %2506 = vmatprep.mubr.f32.mxu0 0.0
    %2507 = vmatmul.mubr.f32.gmra.mrb[0].mxu0 %v2434
    %v2508 = vpop.f32.mrb[0].mxu0
    %v2509 = vadd.f32 0.0, %v2508
    %v2510 = vpop.f32.mrb[0].mxu0
    %2511 = vmatprep.mubr.f32.mxu0 0.0
    %2512 = vmatmul.mubr.f32.gmra.mrb[0].mxu0 %v2436
    %v2513 = vpop.f32.mrb[0].mxu0
    %v2514 = vadd.f32 0.0, %v2513
    %v2515 = vpop.f32.mrb[0].mxu0
    %2516 = vdwg.mxu0
    %2519 = vrot.lane.b32.xlu0 %v2418, 16
    %v2520 = vpop.permute.xlu0 %2519
    %2521 = vrot.lane.b32.xlu0 %v2423, 16
    %v2522 = vpop.permute.xlu0 %2521
    %2527 = vrot.lane.b32.xlu0 %v2327, 32
    %v2528 = vpop.permute.xlu0 %2527
    %2529 = vrot.lane.b32.xlu0 %v2332, 32
    %v2530 = vpop.permute.xlu0 %2529
    %2535 = vrot.lane.b32.xlu0 %v2509, 48
    %v2536 = vpop.permute.xlu0 %2535
    %2537 = vrot.lane.b32.xlu0 %v2514, 48
    %v2538 = vpop.permute.xlu0 %2537
    %v2541 = vsel %vm92, %v2236, %v2520
    %v2542 = vsel %vm92, %v2241, %v2522
    %v2543 = vsel %vm95, %v2541, %v2528
    %v2544 = vsel %vm95, %v2542, %v2530
    %v2545 = vsel %vm98, %v2543, %v2536
    %v2546 = vsel %vm98, %v2544, %v2538
    %v2547 = vadd.f32 %v2545, %v99
    %v2548 = vadd.f32 %v2546, %v100
    %v2549 = vsel %vm603, %v2547, -inf
    %2550 = vmax.xlane.f32.xlu0 %v2549
    %v2551 = vpop.xlane.xlu0 %2550
    %v2552 = vsel %vm603, %v2548, -inf
    %2553 = vmax.xlane.f32.xlu0 %v2552
    %v2554 = vpop.xlane.xlu0 %2553
    %v2555 = vsub.f32 %v2547, %v2551
    %v2556 = vsub.f32 %v2548, %v2554
    %v2557 = vmul.f32 %v2555, 1.442695
    %v2558 = vpow.pop %v2557
    %v2559 = vmul.f32 %v2556, 1.442695
    %v2560 = vpow.pop %v2559
    %v2562 = vsel %vm603, %v2558, 0
    %v2565 = vsel %vm603, %v2560, 0
    %2567 = vmatprep.subr.mxu0 0.0
    %2568 = vmatpush1.msra.mxu0 %v103
    %2569 = vmatprep.subr.mxu0 0.0
    %2570 = vmatpush1.msra.mxu0 %v103
    %2571 = vmatprep.subr.mxu0 0.0
    %2572 = vmatpush1.msra.mxu0 %v106
    %2573 = vmatprep.subr.mxu0 0.0
    %2574 = vmatpush1.msra.mxu0 %v106
    %2575 = vmatprep.subr.mxu0 0.0
    %2576 = vmatpush1.msra.mxu0 %v108
    %2577 = vmatprep.subr.mxu0 0.0
    %2578 = vmatpush1.msra.mxu0 %v108
    %2579 = vmatprep.subr.mxu0 0.0
    %2580 = vmatpush1.msra.mxu0 %v109
    %2581 = vmatprep.subr.mxu0 0.0
    %2582 = vmatpush1.msra.mxu0 %v109
    %2583 = vmatprep.subr.mxu0 0.0
    %2584 = vmatpush1.msra.mxu0 0.0
    %2585 = vmatprep.subr.mxu0 0.0
    %2586 = vmatpush1.msra.mxu0 0.0
    %2587 = vmatprep.subr.mxu0 0.0
    %2588 = vmatpush1.msra.mxu0 0.0
    %2589 = vmatprep.subr.mxu0 0.0
    %2590 = vmatpush1.msra.mxu0 0.0
    %2591 = vmatprep.subr.mxu0 0.0
    %2592 = vmatpush1.msra.mxu0 0.0
    %2593 = vmatprep.subr.mxu0 0.0
    %2594 = vmatpush1.msra.mxu0 0.0
    %2595 = vmatprep.subr.mxu0 0.0
    %2596 = vmatpush1.msra.mxu0 0.0
    %2597 = vmatprep.subr.mxu0 0.0
    %2598 = vmatpush1.msra.mxu0 0.0
    %2599 = vmatprep.subr.mxu0 0.0
    %2600 = vmatpush1.msra.mxu0 0.0
    %2601 = vmatprep.subr.mxu0 0.0
    %2602 = vmatpush1.msra.mxu0 0.0
    %2603 = vmatprep.subr.mxu0 0.0
    %2604 = vmatpush1.msra.mxu0 0.0
    %2605 = vmatprep.subr.mxu0 0.0
    %2606 = vmatpush1.msra.mxu0 0.0
    %2607 = vmatprep.subr.mxu0 0.0
    %2608 = vmatpush1.msra.mxu0 0.0
    %2609 = vmatprep.subr.mxu0 0.0
    %2610 = vmatpush1.msra.mxu0 0.0
    %2611 = vmatprep.subr.mxu0 0.0
    %2612 = vmatpush1.msra.mxu0 0.0
    %2613 = vmatprep.subr.mxu0 0.0
    %2614 = vmatpush1.msra.mxu0 0.0
    %2615 = vmatprep.subr.mxu0 0.0
    %2616 = vmatpush1.msra.mxu0 0.0
    %2617 = vmatprep.subr.mxu0 0.0
    %2618 = vmatpush1.msra.mxu0 0.0
    %2619 = vmatprep.subr.mxu0 0.0
    %2620 = vmatpush1.msra.mxu0 0.0
    %2621 = vmatprep.subr.mxu0 0.0
    %2622 = vmatpush1.msra.mxu0 0.0
    %2623 = vmatprep.subr.mxu0 0.0
    %2624 = vmatpush1.msra.mxu0 0.0
    %2625 = vmatprep.subr.mxu0 0.0
    %2626 = vmatpush1.msra.mxu0 0.0
    %2627 = vmatprep.subr.mxu0 0.0
    %2628 = vmatpush1.msra.mxu0 0.0
    %2629 = vmatprep.subr.mxu0 0.0
    %2630 = vmatpush1.msra.mxu0 0.0
    %2631 = vmatprep.mubr.f32.mxu0 0.0
    %2632 = vmatmul.mubr.f32.gmra.mrb[0].mxu0 %v2562
    %v2633 = vpop.f32.mrb[0].mxu0
    %v2634 = vadd.f32 0.0, %v2633
    %v2635 = vpop.f32.mrb[0].mxu0
    %2636 = vmatprep.mubr.f32.mxu0 0.0
    %2637 = vmatmul.mubr.f32.gmra.mrb[0].mxu0 %v2565
    %v2638 = vpop.f32.mrb[0].mxu0
    %v2639 = vadd.f32 0.0, %v2638
    %v2640 = vpop.f32.mrb[0].mxu0
    %2641 = vdwg.mxu0
    %v2642 = vrcp.pop %v2634
    %v2643 = vrcp.pop %v2639
    %v2644 = vmul.f32 %v2558, %v2642
    %v2645 = vmul.f32 %v2560, %v2643
    %v2646 = vstv %s2149
    %v2647 = vmul.f32 %v2646, %v2644
    %v2648 = vmul.f32 %v2646, %v2645
    %2651 = vrot.lane.b32.xlu0 %v2647, 96
    %v2652 = vpop.permute.xlu0 %2651
    %2653 = vrot.lane.b32.xlu0 %v2648, 96
    %v2654 = vpop.permute.xlu0 %2653
    %v2657 = vsub.f32 %v2644, %v2652
    %v2658 = vsub.f32 %v2645, %v2654
    %2659 = vrot.lane.b32.xlu0 %v2141, 64
    %v2660 = vpop.permute.xlu0 %2659
    %2661 = vrot.lane.b32.xlu0 %v2146, 64
    %v2662 = vpop.permute.xlu0 %2661
    %v2666 = vsel %vm92, %v2657, 0
    %v2669 = vsel %vm92, %v2658, 0
    %2671 = vmatprep.subr.mxu0 0.0
    %2672 = vmatpush1.msra.mxu0 %v2660
    %2673 = vmatprep.subr.mxu0 0.0
    %2674 = vmatpush1.msra.mxu0 %v2662
    %2675 = vmatprep.subr.mxu0 0.0
    %2676 = vmatpush1.msra.mxu0 0.0
    %2677 = vmatprep.subr.mxu0 0.0
    %2678 = vmatpush1.msra.mxu0 0.0
    %2679 = vmatprep.subr.mxu0 0.0
    %2680 = vmatpush1.msra.mxu0 0.0
    %2681 = vmatprep.subr.mxu0 0.0
    %2682 = vmatpush1.msra.mxu0 0.0
    %2683 = vmatprep.subr.mxu0 0.0
    %2684 = vmatpush1.msra.mxu0 0.0
    %2685 = vmatprep.subr.mxu0 0.0
    %2686 = vmatpush1.msra.mxu0 0.0
    %2687 = vmatprep.subr.mxu0 0.0
    %2688 = vmatpush1.msra.mxu0 0.0
    %2689 = vmatprep.subr.mxu0 0.0
    %2690 = vmatpush1.msra.mxu0 0.0
    %2691 = vmatprep.subr.mxu0 0.0
    %2692 = vmatpush1.msra.mxu0 0.0
    %2693 = vmatprep.subr.mxu0 0.0
    %2694 = vmatpush1.msra.mxu0 0.0
    %2695 = vmatprep.subr.mxu0 0.0
    %2696 = vmatpush1.msra.mxu0 0.0
    %2697 = vmatprep.subr.mxu0 0.0
    %2698 = vmatpush1.msra.mxu0 0.0
    %2699 = vmatprep.subr.mxu0 0.0
    %2700 = vmatpush1.msra.mxu0 0.0
    %2701 = vmatprep.subr.mxu0 0.0
    %2702 = vmatpush1.msra.mxu0 0.0
    %2703 = vmatprep.subr.mxu0 0.0
    %2704 = vmatpush1.msra.mxu0 0.0
    %2705 = vmatprep.subr.mxu0 0.0
    %2706 = vmatpush1.msra.mxu0 0.0
    %2707 = vmatprep.subr.mxu0 0.0
    %2708 = vmatpush1.msra.mxu0 0.0
    %2709 = vmatprep.subr.mxu0 0.0
    %2710 = vmatpush1.msra.mxu0 0.0
    %2711 = vmatprep.subr.mxu0 0.0
    %2712 = vmatpush1.msra.mxu0 0.0
    %2713 = vmatprep.subr.mxu0 0.0
    %2714 = vmatpush1.msra.mxu0 0.0
    %2715 = vmatprep.subr.mxu0 0.0
    %2716 = vmatpush1.msra.mxu0 0.0
    %2717 = vmatprep.subr.mxu0 0.0
    %2718 = vmatpush1.msra.mxu0 0.0
    %2719 = vmatprep.subr.mxu0 0.0
    %2720 = vmatpush1.msra.mxu0 0.0
    %2721 = vmatprep.subr.mxu0 0.0
    %2722 = vmatpush1.msra.mxu0 0.0
    %2723 = vmatprep.subr.mxu0 0.0
    %2724 = vmatpush1.msra.mxu0 0.0
    %2725 = vmatprep.subr.mxu0 0.0
    %2726 = vmatpush1.msra.mxu0 0.0
    %2727 = vmatprep.subr.mxu0 0.0
    %2728 = vmatpush1.msra.mxu0 0.0
    %2729 = vmatprep.subr.mxu0 0.0
    %2730 = vmatpush1.msra.mxu0 0.0
    %2731 = vmatprep.subr.mxu0 0.0
    %2732 = vmatpush1.msra.mxu0 0.0
    %2733 = vmatprep.subr.mxu0 0.0
    %2734 = vmatpush1.msra.mxu0 0.0
    %2735 = vmatprep.mubr.f32.mxu0 0.0
    %2736 = vmatmul.mubr.f32.gmra.mrb[0].mxu0 %v2666
    %v2737 = vpop.f32.mrb[0].mxu0
    %v2738 = vadd.f32 0.0, %v2737
    %v2739 = vpop.f32.mrb[0].mxu0
    %2740 = vmatprep.mubr.f32.mxu0 0.0
    %2741 = vmatmul.mubr.f32.gmra.mrb[0].mxu0 %v2669
    %v2742 = vpop.f32.mrb[0].mxu0
    %v2743 = vadd.f32 0.0, %v2742
    %v2744 = vpop.f32.mrb[0].mxu0
    %2745 = vdwg.mxu0
    %v2746 = vmul.f32 %v2738, %v2738
    %v2747 = vmul.f32 %v2743, %v2743
    %v2748 = vsel %vm92, %v2746, 0.0
    %2749 = vadd.xlane.f32.xlu0 %v2748
    %v2750 = vpop.xlane.xlu0 %2749
    %v2751 = vsel %vm92, %v2747, 0.0
    %2752 = vadd.xlane.f32.xlu0 %v2751
    %v2753 = vpop.xlane.xlu0 %2752
    %v2754 = vmul.f32 %v2750, %v809
    %v2755 = vmul.f32 %v2753, %v809
    %v2756 = vadd.f32 %v2754, 1e-05
    %v2757 = vadd.f32 %v2755, 1e-05
    %v2758 = vrsqrt.pop %v2756
    %v2759 = vrsqrt.pop %v2757
    %v2760 = vmul.f32 %v2738, %v2758
    %v2761 = vmul.f32 %v2743, %v2759
    %2762 = vrot.lane.b32.xlu0 %v2657, 112
    %v2763 = vpop.permute.xlu0 %2762
    %2764 = vrot.lane.b32.xlu0 %v2658, 112
    %v2765 = vpop.permute.xlu0 %2764
    %2766 = vrot.lane.b32.xlu0 %v2141, 48
    %v2767 = vpop.permute.xlu0 %2766
    %2768 = vrot.lane.b32.xlu0 %v2146, 48
    %v2769 = vpop.permute.xlu0 %2768
    %v2772 = vsel %vm92, %v2763, 0
    %v2774 = vsel %vm92, %v2765, 0
    %2776 = vmatprep.subr.mxu0 0.0
    %2777 = vmatpush1.msra.mxu0 %v2767
    %2778 = vmatprep.subr.mxu0 0.0
    %2779 = vmatpush1.msra.mxu0 %v2769
    %2780 = vmatprep.subr.mxu0 0.0
    %2781 = vmatpush1.msra.mxu0 0.0
    %2782 = vmatprep.subr.mxu0 0.0
    %2783 = vmatpush1.msra.mxu0 0.0
    %2784 = vmatprep.subr.mxu0 0.0
    %2785 = vmatpush1.msra.mxu0 0.0
    %2786 = vmatprep.subr.mxu0 0.0
    %2787 = vmatpush1.msra.mxu0 0.0
    %2788 = vmatprep.subr.mxu0 0.0
    %2789 = vmatpush1.msra.mxu0 0.0
    %2790 = vmatprep.subr.mxu0 0.0
    %2791 = vmatpush1.msra.mxu0 0.0
    %2792 = vmatprep.subr.mxu0 0.0
    %2793 = vmatpush1.msra.mxu0 0.0
    %2794 = vmatprep.subr.mxu0 0.0
    %2795 = vmatpush1.msra.mxu0 0.0
    %2796 = vmatprep.subr.mxu0 0.0
    %2797 = vmatpush1.msra.mxu0 0.0
    %2798 = vmatprep.subr.mxu0 0.0
    %2799 = vmatpush1.msra.mxu0 0.0
    %2800 = vmatprep.subr.mxu0 0.0
    %2801 = vmatpush1.msra.mxu0 0.0
    %2802 = vmatprep.subr.mxu0 0.0
    %2803 = vmatpush1.msra.mxu0 0.0
    %2804 = vmatprep.subr.mxu0 0.0
    %2805 = vmatpush1.msra.mxu0 0.0
    %2806 = vmatprep.subr.mxu0 0.0
    %2807 = vmatpush1.msra.mxu0 0.0
    %2808 = vmatprep.subr.mxu0 0.0
    %2809 = vmatpush1.msra.mxu0 0.0
    %2810 = vmatprep.subr.mxu0 0.0
    %2811 = vmatpush1.msra.mxu0 0.0
    %2812 = vmatprep.subr.mxu0 0.0
    %2813 = vmatpush1.msra.mxu0 0.0
    %2814 = vmatprep.subr.mxu0 0.0
    %2815 = vmatpush1.msra.mxu0 0.0
    %2816 = vmatprep.subr.mxu0 0.0
    %2817 = vmatpush1.msra.mxu0 0.0
    %2818 = vmatprep.subr.mxu0 0.0
    %2819 = vmatpush1.msra.mxu0 0.0
    %2820 = vmatprep.subr.mxu0 0.0
    %2821 = vmatpush1.msra.mxu0 0.0
    %2822 = vmatprep.subr.mxu0 0.0
    %2823 = vmatpush1.msra.mxu0 0.0
    %2824 = vmatprep.subr.mxu0 0.0
    %2825 = vmatpush1.msra.mxu0 0.0
    %2826 = vmatprep.subr.mxu0 0.0
    %2827 = vmatpush1.msra.mxu0 0.0
    %2828 = vmatprep.subr.mxu0 0.0
    %2829 = vmatpush1.msra.mxu0 0.0
    %2830 = vmatprep.subr.mxu0 0.0
    %2831 = vmatpush1.msra.mxu0 0.0
    %2832 = vmatprep.subr.mxu0 0.0
    %2833 = vmatpush1.msra.mxu0 0.0
    %2834 = vmatprep.subr.mxu0 0.0
    %2835 = vmatpush1.msra.mxu0 0.0
    %2836 = vmatprep.subr.mxu0 0.0
    %2837 = vmatpush1.msra.mxu0 0.0
    %2838 = vmatprep.subr.mxu0 0.0
    %2839 = vmatpush1.msra.mxu0 0.0
    %2840 = vmatprep.mubr.f32.mxu0 0.0
    %2841 = vmatmul.mubr.f32.gmra.mrb[0].mxu0 %v2772
    %v2842 = vpop.f32.mrb[0].mxu0
    %v2843 = vadd.f32 0.0, %v2842
    %v2844 = vpop.f32.mrb[0].mxu0
    %2845 = vmatprep.mubr.f32.mxu0 0.0
    %2846 = vmatmul.mubr.f32.gmra.mrb[0].mxu0 %v2774
    %v2847 = vpop.f32.mrb[0].mxu0
    %v2848 = vadd.f32 0.0, %v2847
    %v2849 = vpop.f32.mrb[0].mxu0
    %2850 = vdwg.mxu0
    %v2851 = vmul.f32 %v2843, %v2843
    %v2852 = vmul.f32 %v2848, %v2848
    %v2853 = vsel %vm92, %v2851, 0.0
    %2854 = vadd.xlane.f32.xlu0 %v2853
    %v2855 = vpop.xlane.xlu0 %2854
    %v2856 = vsel %vm92, %v2852, 0.0
    %2857 = vadd.xlane.f32.xlu0 %v2856
    %v2858 = vpop.xlane.xlu0 %2857
    %v2859 = vmul.f32 %v2855, %v809
    %v2860 = vmul.f32 %v2858, %v809
    %v2861 = vadd.f32 %v2859, 1e-05
    %v2862 = vadd.f32 %v2860, 1e-05
    %v2863 = vrsqrt.pop %v2861
    %v2864 = vrsqrt.pop %v2862
    %v2865 = vmul.f32 %v2843, %v2863
    %v2866 = vmul.f32 %v2848, %v2864
    %v2868 = vsel %vm92, %v2865, 0
    %v2871 = vsel %vm92, %v2866, 0
    %2873 = vmatprep.subr.mxu0 0.0
    %2874 = vmatpush1.msra.mxu0 %v2153
    %2875 = vmatprep.subr.mxu0 0.0
    %2876 = vmatpush1.msra.mxu0 %v2154
    %2877 = vmatprep.subr.mxu0 0.0
    %2878 = vmatpush1.msra.mxu0 0.0
    %2879 = vmatprep.subr.mxu0 0.0
    %2880 = vmatpush1.msra.mxu0 0.0
    %2881 = vmatprep.subr.mxu0 0.0
    %2882 = vmatpush1.msra.mxu0 0.0
    %2883 = vmatprep.subr.mxu0 0.0
    %2884 = vmatpush1.msra.mxu0 0.0
    %2885 = vmatprep.subr.mxu0 0.0
    %2886 = vmatpush1.msra.mxu0 0.0
    %2887 = vmatprep.subr.mxu0 0.0
    %2888 = vmatpush1.msra.mxu0 0.0
    %2889 = vmatprep.subr.mxu0 0.0
    %2890 = vmatpush1.msra.mxu0 0.0
    %2891 = vmatprep.subr.mxu0 0.0
    %2892 = vmatpush1.msra.mxu0 0.0
    %2893 = vmatprep.subr.mxu0 0.0
    %2894 = vmatpush1.msra.mxu0 0.0
    %2895 = vmatprep.subr.mxu0 0.0
    %2896 = vmatpush1.msra.mxu0 0.0
    %2897 = vmatprep.subr.mxu0 0.0
    %2898 = vmatpush1.msra.mxu0 0.0
    %2899 = vmatprep.subr.mxu0 0.0
    %2900 = vmatpush1.msra.mxu0 0.0
    %2901 = vmatprep.subr.mxu0 0.0
    %2902 = vmatpush1.msra.mxu0 0.0
    %2903 = vmatprep.subr.mxu0 0.0
    %2904 = vmatpush1.msra.mxu0 0.0
    %2905 = vmatprep.subr.mxu0 0.0
    %2906 = vmatpush1.msra.mxu0 0.0
    %2907 = vmatprep.subr.mxu0 0.0
    %2908 = vmatpush1.msra.mxu0 0.0
    %2909 = vmatprep.subr.mxu0 0.0
    %2910 = vmatpush1.msra.mxu0 0.0
    %2911 = vmatprep.subr.mxu0 0.0
    %2912 = vmatpush1.msra.mxu0 0.0
    %2913 = vmatprep.subr.mxu0 0.0
    %2914 = vmatpush1.msra.mxu0 0.0
    %2915 = vmatprep.subr.mxu0 0.0
    %2916 = vmatpush1.msra.mxu0 0.0
    %2917 = vmatprep.subr.mxu0 0.0
    %2918 = vmatpush1.msra.mxu0 0.0
    %2919 = vmatprep.subr.mxu0 0.0
    %2920 = vmatpush1.msra.mxu0 0.0
    %2921 = vmatprep.subr.mxu0 0.0
    %2922 = vmatpush1.msra.mxu0 0.0
    %2923 = vmatprep.subr.mxu0 0.0
    %2924 = vmatpush1.msra.mxu0 0.0
    %2925 = vmatprep.subr.mxu0 0.0
    %2926 = vmatpush1.msra.mxu0 0.0
    %2927 = vmatprep.subr.mxu0 0.0
    %2928 = vmatpush1.msra.mxu0 0.0
    %2929 = vmatprep.subr.mxu0 0.0
    %2930 = vmatpush1.msra.mxu0 0.0
    %2931 = vmatprep.subr.mxu0 0.0
    %2932 = vmatpush1.msra.mxu0 0.0
    %2933 = vmatprep.subr.mxu0 0.0
    %2934 = vmatpush1.msra.mxu0 0.0
    %2935 = vmatprep.subr.mxu0 0.0
    %2936 = vmatpush1.msra.mxu0 0.0
    %2937 = vmatprep.mubr.f32.mxu0 0.0
    %2938 = vmatmul.mubr.f32.gmra.mrb[0].mxu0 %v2868
    %v2939 = vpop.f32.mrb[0].mxu0
    %v2940 = vadd.f32 0.0, %v2939
    %v2941 = vpop.f32.mrb[0].mxu0
    %2942 = vmatprep.mubr.f32.mxu0 0.0
    %2943 = vmatmul.mubr.f32.gmra.mrb[0].mxu0 %v2871
    %v2944 = vpop.f32.mrb[0].mxu0
    %v2945 = vadd.f32 0.0, %v2944
    %v2946 = vpop.f32.mrb[0].mxu0
    %2947 = vdwg.mxu0
    %v2949 = vsel %vm92, %v2760, 0
    %v2952 = vsel %vm92, %v2761, 0
    %2954 = vmatprep.subr.mxu0 0.0
    %2955 = vmatpush1.msra.mxu0 %v2151
    %2956 = vmatprep.subr.mxu0 0.0
    %2957 = vmatpush1.msra.mxu0 %v2152
    %2958 = vmatprep.subr.mxu0 0.0
    %2959 = vmatpush1.msra.mxu0 0.0
    %2960 = vmatprep.subr.mxu0 0.0
    %2961 = vmatpush1.msra.mxu0 0.0
    %2962 = vmatprep.subr.mxu0 0.0
    %2963 = vmatpush1.msra.mxu0 0.0
    %2964 = vmatprep.subr.mxu0 0.0
    %2965 = vmatpush1.msra.mxu0 0.0
    %2966 = vmatprep.subr.mxu0 0.0
    %2967 = vmatpush1.msra.mxu0 0.0
    %2968 = vmatprep.subr.mxu0 0.0
    %2969 = vmatpush1.msra.mxu0 0.0
    %2970 = vmatprep.subr.mxu0 0.0
    %2971 = vmatpush1.msra.mxu0 0.0
    %2972 = vmatprep.subr.mxu0 0.0
    %2973 = vmatpush1.msra.mxu0 0.0
    %2974 = vmatprep.subr.mxu0 0.0
    %2975 = vmatpush1.msra.mxu0 0.0
    %2976 = vmatprep.subr.mxu0 0.0
    %2977 = vmatpush1.msra.mxu0 0.0
    %2978 = vmatprep.subr.mxu0 0.0
    %2979 = vmatpush1.msra.mxu0 0.0
    %2980 = vmatprep.subr.mxu0 0.0
    %2981 = vmatpush1.msra.mxu0 0.0
    %2982 = vmatprep.subr.mxu0 0.0
    %2983 = vmatpush1.msra.mxu0 0.0
    %2984 = vmatprep.subr.mxu0 0.0
    %2985 = vmatpush1.msra.mxu0 0.0
    %2986 = vmatprep.subr.mxu0 0.0
    %2987 = vmatpush1.msra.mxu0 0.0
    %2988 = vmatprep.subr.mxu0 0.0
    %2989 = vmatpush1.msra.mxu0 0.0
    %2990 = vmatprep.subr.mxu0 0.0
    %2991 = vmatpush1.msra.mxu0 0.0
    %2992 = vmatprep.subr.mxu0 0.0
    %2993 = vmatpush1.msra.mxu0 0.0
    %2994 = vmatprep.subr.mxu0 0.0
    %2995 = vmatpush1.msra.mxu0 0.0
    %2996 = vmatprep.subr.mxu0 0.0
    %2997 = vmatpush1.msra.mxu0 0.0
    %2998 = vmatprep.subr.mxu0 0.0
    %2999 = vmatpush1.msra.mxu0 0.0
    %3000 = vmatprep.subr.mxu0 0.0
    %3001 = vmatpush1.msra.mxu0 0.0
    %3002 = vmatprep.subr.mxu0 0.0
    %3003 = vmatpush1.msra.mxu0 0.0
    %3004 = vmatprep.subr.mxu0 0.0
    %3005 = vmatpush1.msra.mxu0 0.0
    %3006 = vmatprep.subr.mxu0 0.0
    %3007 = vmatpush1.msra.mxu0 0.0
    %3008 = vmatprep.subr.mxu0 0.0
    %3009 = vmatpush1.msra.mxu0 0.0
    %3010 = vmatprep.subr.mxu0 0.0
    %3011 = vmatpush1.msra.mxu0 0.0
    %3012 = vmatprep.subr.mxu0 0.0
    %3013 = vmatpush1.msra.mxu0 0.0
    %3014 = vmatprep.subr.mxu0 0.0
    %3015 = vmatpush1.msra.mxu0 0.0
    %3016 = vmatprep.subr.mxu0 0.0
    %3017 = vmatpush1.msra.mxu0 0.0
    %3018 = vmatprep.mubr.f32.mxu0 0.0
    %3019 = vmatmul.mubr.f32.gmra.mrb[0].mxu0 %v2949
    %v3020 = vpop.f32.mrb[0].mxu0
    %v3021 = vadd.f32 %v2940, %v3020
    %v3022 = vpop.f32.mrb[0].mxu0
    %3023 = vmatprep.mubr.f32.mxu0 0.0
    %3024 = vmatmul.mubr.f32.gmra.mrb[0].mxu0 %v2952
    %v3025 = vpop.f32.mrb[0].mxu0
    %v3026 = vadd.f32 %v2945, %v3025
    %v3027 = vpop.f32.mrb[0].mxu0
    %3028 = vdwg.mxu0
    %s3029 = scalar_lea.vmem [#allocation6], 384
    %v3030 = vld [vmem:[%s3029] sm:$0xff]
    %v3031 = vld [vmem:[%s3029 + $0x8] sm:$0xff]
    %v3032 = vld [vmem:[%s3029 + $0x10] sm:$0xff]
    %v3033 = vld [vmem:[%s3029 + $0x18] sm:$0xff]
    %v3034 = vld [vmem:[%s3029 + $0x20] sm:$0xff]
    %v3035 = vld [vmem:[%s3029 + $0x28] sm:$0xff]
    %v3036 = vld [vmem:[%s3029 + $0x30] sm:$0xff]
    %v3037 = vld [vmem:[%s3029 + $0x38] sm:$0xff]
    %v3038 = vld [vmem:[%s3029 + $0x40] sm:$0xff]
    %v3039 = vld [vmem:[%s3029 + $0x48] sm:$0xff]
    %v3040 = vld [vmem:[%s3029 + $0x50] sm:$0xff]
    %v3041 = vld [vmem:[%s3029 + $0x58] sm:$0xff]
    %v3042 = vld [vmem:[%s3029 + $0x60] sm:$0xff]
    %v3043 = vld [vmem:[%s3029 + $0x68] sm:$0xff]
    %v3044 = vld [vmem:[%s3029 + $0x70] sm:$0xff]
    %v3045 = vld [vmem:[%s3029 + $0x78] sm:$0xff]
    %3046 = vmatprep.subr.mxu0 0.0
    %3047 = vmatpush1.msra.mxu0 %v3030
    %3048 = vmatprep.subr.mxu0 0.0
    %3049 = vmatpush1.msra.mxu0 %v3031
    %3050 = vmatprep.subr.mxu0 0.0
    %3051 = vmatpush1.msra.mxu0 %v3032
    %3052 = vmatprep.subr.mxu0 0.0
    %3053 = vmatpush1.msra.mxu0 %v3033
    %3054 = vmatprep.subr.mxu0 0.0
    %3055 = vmatpush1.msra.mxu0 %v3034
    %3056 = vmatprep.subr.mxu0 0.0
    %3057 = vmatpush1.msra.mxu0 %v3035
    %3058 = vmatprep.subr.mxu0 0.0
    %3059 = vmatpush1.msra.mxu0 %v3036
    %3060 = vmatprep.subr.mxu0 0.0
    %3061 = vmatpush1.msra.mxu0 %v3037
    %3062 = vmatprep.subr.mxu0 0.0
    %3063 = vmatpush1.msra.mxu0 %v3038
    %3064 = vmatprep.subr.mxu0 0.0
    %3065 = vmatpush1.msra.mxu0 %v3039
    %3066 = vmatprep.subr.mxu0 0.0
    %3067 = vmatpush1.msra.mxu0 %v3040
    %3068 = vmatprep.subr.mxu0 0.0
    %3069 = vmatpush1.msra.mxu0 %v3041
    %3070 = vmatprep.subr.mxu0 0.0
    %3071 = vmatpush1.msra.mxu0 %v3042
    %3072 = vmatprep.subr.mxu0 0.0
    %3073 = vmatpush1.msra.mxu0 %v3043
    %3074 = vmatprep.subr.mxu0 0.0
    %3075 = vmatpush1.msra.mxu0 %v3044
    %3076 = vmatprep.subr.mxu0 0.0
    %3077 = vmatpush1.msra.mxu0 %v3045
    %3078 = vmatprep.subr.mxu0 0.0
    %3079 = vmatpush1.msra.mxu0 0.0
    %3080 = vmatprep.subr.mxu0 0.0
    %3081 = vmatpush1.msra.mxu0 0.0
    %3082 = vmatprep.subr.mxu0 0.0
    %3083 = vmatpush1.msra.mxu0 0.0
    %3084 = vmatprep.subr.mxu0 0.0
    %3085 = vmatpush1.msra.mxu0 0.0
    %3086 = vmatprep.subr.mxu0 0.0
    %3087 = vmatpush1.msra.mxu0 0.0
    %3088 = vmatprep.subr.mxu0 0.0
    %3089 = vmatpush1.msra.mxu0 0.0
    %3090 = vmatprep.subr.mxu0 0.0
    %3091 = vmatpush1.msra.mxu0 0.0
    %3092 = vmatprep.subr.mxu0 0.0
    %3093 = vmatpush1.msra.mxu0 0.0
    %3094 = vmatprep.subr.mxu0 0.0
    %3095 = vmatpush1.msra.mxu0 0.0
    %3096 = vmatprep.subr.mxu0 0.0
    %3097 = vmatpush1.msra.mxu0 0.0
    %3098 = vmatprep.subr.mxu0 0.0
    %3099 = vmatpush1.msra.mxu0 0.0
    %3100 = vmatprep.subr.mxu0 0.0
    %3101 = vmatpush1.msra.mxu0 0.0
    %3102 = vmatprep.subr.mxu0 0.0
    %3103 = vmatpush1.msra.mxu0 0.0
    %3104 = vmatprep.subr.mxu0 0.0
    %3105 = vmatpush1.msra.mxu0 0.0
    %3106 = vmatprep.subr.mxu0 0.0
    %3107 = vmatpush1.msra.mxu0 0.0
    %3108 = vmatprep.subr.mxu0 0.0
    %3109 = vmatpush1.msra.mxu0 0.0
    %3110 = vmatprep.mubr.f32.mxu0 0.0
    %3111 = vmatmul.mubr.f32.gmra.mrb[0].mxu0 %v3021
    %v3112 = vpop.f32.mrb[0].mxu0
    %v3113 = vadd.f32 0.0, %v3112
    %v3114 = vpop.f32.mrb[0].mxu0
    %3115 = vmatprep.mubr.f32.mxu0 0.0
    %3116 = vmatmul.mubr.f32.gmra.mrb[0].mxu0 %v3026
    %v3117 = vpop.f32.mrb[0].mxu0
    %v3118 = vadd.f32 0.0, %v3117
    %v3119 = vpop.f32.mrb[0].mxu0
    %3120 = vdwg.mxu0
    %s3121 = sld [smem:[#allocation2 + $0x3]]
    %s3122 = scalar_lea.vmem [#allocation7], 96
    %v3123 = vld [vmem:[%s3122] sm:$0xff]
    %v3124 = vld [vmem:[%s3122 + $0x8] sm:$0xff]
    %v3125 = vld [vmem:[%s3122 + $0x10] sm:$0xff]
    %v3126 = vld [vmem:[%s3122 + $0x18] sm:$0xff]
    %3129 = vrot.lane.b32.xlu0 %v3113, 96
    %v3130 = vpop.permute.xlu0 %3129
    %3131 = vrot.lane.b32.xlu0 %v3118, 96
    %v3132 = vpop.permute.xlu0 %3131
    %v3133 = vsel %vm214, %v3113, 0
    %v3135 = vsel %vm214, %v3118, 0
    %v3137 = vsel %vm214, %v3130, 0
    %v3139 = vsel %vm214, %v3132, 0
    %3141 = vmatprep.subr.mxu0 0.0
    %3142 = vmatpush1.xpose.msra.mxu0 %v3137
    %3143 = vmatprep.subr.mxu0 0.0
    %3144 = vmatpush1.xpose.msra.mxu0 %v3139
    %3145 = vmatprep.subr.mxu0 0.0
    %3146 = vmatpush1.xpose.msra.mxu0 0.0
    %3147 = vmatprep.subr.mxu0 0.0
    %3148 = vmatpush1.xpose.msra.mxu0 0.0
    %3149 = vmatprep.subr.mxu0 0.0
    %3150 = vmatpush1.xpose.msra.mxu0 0.0
    %3151 = vmatprep.subr.mxu0 0.0
    %3152 = vmatpush1.xpose.msra.mxu0 0.0
    %3153 = vmatprep.subr.mxu0 0.0
    %3154 = vmatpush1.xpose.msra.mxu0 0.0
    %3155 = vmatprep.subr.mxu0 0.0
    %3156 = vmatpush1.xpose.msra.mxu0 0.0
    %3157 = vmatprep.subr.mxu0 0.0
    %3158 = vmatpush1.xpose.msra.mxu0 0.0
    %3159 = vmatprep.subr.mxu0 0.0
    %3160 = vmatpush1.xpose.msra.mxu0 0.0
    %3161 = vmatprep.subr.mxu0 0.0
    %3162 = vmatpush1.xpose.msra.mxu0 0.0
    %3163 = vmatprep.subr.mxu0 0.0
    %3164 = vmatpush1.xpose.msra.mxu0 0.0
    %3165 = vmatprep.subr.mxu0 0.0
    %3166 = vmatpush1.xpose.msra.mxu0 0.0
    %3167 = vmatprep.subr.mxu0 0.0
    %3168 = vmatpush1.xpose.msra.mxu0 0.0
    %3169 = vmatprep.subr.mxu0 0.0
    %3170 = vmatpush1.xpose.msra.mxu0 0.0
    %3171 = vmatprep.subr.mxu0 0.0
    %3172 = vmatpush1.xpose.msra.mxu0 0.0
    %3173 = vmatprep.subr.mxu0 0.0
    %3174 = vmatpush1.xpose.msra.mxu0 0.0
    %3175 = vmatprep.subr.mxu0 0.0
    %3176 = vmatpush1.xpose.msra.mxu0 0.0
    %3177 = vmatprep.subr.mxu0 0.0
    %3178 = vmatpush1.xpose.msra.mxu0 0.0
    %3179 = vmatprep.subr.mxu0 0.0
    %3180 = vmatpush1.xpose.msra.mxu0 0.0
    %3181 = vmatprep.subr.mxu0 0.0
    %3182 = vmatpush1.xpose.msra.mxu0 0.0
    %3183 = vmatprep.subr.mxu0 0.0
    %3184 = vmatpush1.xpose.msra.mxu0 0.0
    %3185 = vmatprep.subr.mxu0 0.0
    %3186 = vmatpush1.xpose.msra.mxu0 0.0
    %3187 = vmatprep.subr.mxu0 0.0
    %3188 = vmatpush1.xpose.msra.mxu0 0.0
    %3189 = vmatprep.subr.mxu0 0.0
    %3190 = vmatpush1.xpose.msra.mxu0 0.0
    %3191 = vmatprep.subr.mxu0 0.0
    %3192 = vmatpush1.xpose.msra.mxu0 0.0
    %3193 = vmatprep.subr.mxu0 0.0
    %3194 = vmatpush1.xpose.msra.mxu0 0.0
    %3195 = vmatprep.subr.mxu0 0.0
    %3196 = vmatpush1.xpose.msra.mxu0 0.0
    %3197 = vmatprep.subr.mxu0 0.0
    %3198 = vmatpush1.xpose.msra.mxu0 0.0
    %3199 = vmatprep.subr.mxu0 0.0
    %3200 = vmatpush1.xpose.msra.mxu0 0.0
    %3201 = vmatprep.subr.mxu0 0.0
    %3202 = vmatpush1.xpose.msra.mxu0 0.0
    %3203 = vmatprep.subr.mxu0 0.0
    %3204 = vmatpush1.xpose.msra.mxu0 0.0
    %3205 = vmatprep.mubr.f32.mxu0 0.0
    %3206 = vmatmul.mubr.f32.gmra.mrb[0].mxu0 %v3133
    %v3207 = vpop.f32.mrb[0].mxu0
    %v3208 = vadd.f32 0.0, %v3207
    %v3209 = vpop.f32.mrb[0].mxu0
    %3210 = vmatprep.mubr.f32.mxu0 0.0
    %3211 = vmatmul.mubr.f32.gmra.mrb[0].mxu0 %v3135
    %v3212 = vpop.f32.mrb[0].mxu0
    %v3213 = vadd.f32 0.0, %v3212
    %v3214 = vpop.f32.mrb[0].mxu0
    %3215 = vdwg.mxu0
    %3216 = vrot.lane.b32.xlu0 %v3113, 120
    %v3217 = vpop.permute.xlu0 %3216
    %3218 = vrot.lane.b32.xlu0 %v3118, 120
    %v3219 = vpop.permute.xlu0 %3218
    %3220 = vrot.lane.b32.xlu0 %v3113, 88
    %v3221 = vpop.permute.xlu0 %3220
    %3222 = vrot.lane.b32.xlu0 %v3118, 88
    %v3223 = vpop.permute.xlu0 %3222
    %v3224 = vsel %vm214, %v3217, 0
    %v3226 = vsel %vm214, %v3219, 0
    %v3228 = vsel %vm214, %v3221, 0
    %v3230 = vsel %vm214, %v3223, 0
    %3232 = vmatprep.subr.mxu0 0.0
    %3233 = vmatpush1.xpose.msra.mxu0 %v3228
    %3234 = vmatprep.subr.mxu0 0.0
    %3235 = vmatpush1.xpose.msra.mxu0 %v3230
    %3236 = vmatprep.subr.mxu0 0.0
    %3237 = vmatpush1.xpose.msra.mxu0 0.0
    %3238 = vmatprep.subr.mxu0 0.0
    %3239 = vmatpush1.xpose.msra.mxu0 0.0
    %3240 = vmatprep.subr.mxu0 0.0
    %3241 = vmatpush1.xpose.msra.mxu0 0.0
    %3242 = vmatprep.subr.mxu0 0.0
    %3243 = vmatpush1.xpose.msra.mxu0 0.0
    %3244 = vmatprep.subr.mxu0 0.0
    %3245 = vmatpush1.xpose.msra.mxu0 0.0
    %3246 = vmatprep.subr.mxu0 0.0
    %3247 = vmatpush1.xpose.msra.mxu0 0.0
    %3248 = vmatprep.subr.mxu0 0.0
    %3249 = vmatpush1.xpose.msra.mxu0 0.0
    %3250 = vmatprep.subr.mxu0 0.0
    %3251 = vmatpush1.xpose.msra.mxu0 0.0
    %3252 = vmatprep.subr.mxu0 0.0
    %3253 = vmatpush1.xpose.msra.mxu0 0.0
    %3254 = vmatprep.subr.mxu0 0.0
    %3255 = vmatpush1.xpose.msra.mxu0 0.0
    %3256 = vmatprep.subr.mxu0 0.0
    %3257 = vmatpush1.xpose.msra.mxu0 0.0
    %3258 = vmatprep.subr.mxu0 0.0
    %3259 = vmatpush1.xpose.msra.mxu0 0.0
    %3260 = vmatprep.subr.mxu0 0.0
    %3261 = vmatpush1.xpose.msra.mxu0 0.0
    %3262 = vmatprep.subr.mxu0 0.0
    %3263 = vmatpush1.xpose.msra.mxu0 0.0
    %3264 = vmatprep.subr.mxu0 0.0
    %3265 = vmatpush1.xpose.msra.mxu0 0.0
    %3266 = vmatprep.subr.mxu0 0.0
    %3267 = vmatpush1.xpose.msra.mxu0 0.0
    %3268 = vmatprep.subr.mxu0 0.0
    %3269 = vmatpush1.xpose.msra.mxu0 0.0
    %3270 = vmatprep.subr.mxu0 0.0
    %3271 = vmatpush1.xpose.msra.mxu0 0.0
    %3272 = vmatprep.subr.mxu0 0.0
    %3273 = vmatpush1.xpose.msra.mxu0 0.0
    %3274 = vmatprep.subr.mxu0 0.0
    %3275 = vmatpush1.xpose.msra.mxu0 0.0
    %3276 = vmatprep.subr.mxu0 0.0
    %3277 = vmatpush1.xpose.msra.mxu0 0.0
    %3278 = vmatprep.subr.mxu0 0.0
    %3279 = vmatpush1.xpose.msra.mxu0 0.0
    %3280 = vmatprep.subr.mxu0 0.0
    %3281 = vmatpush1.xpose.msra.mxu0 0.0
    %3282 = vmatprep.subr.mxu0 0.0
    %3283 = vmatpush1.xpose.msra.mxu0 0.0
    %3284 = vmatprep.subr.mxu0 0.0
    %3285 = vmatpush1.xpose.msra.mxu0 0.0
    %3286 = vmatprep.subr.mxu0 0.0
    %3287 = vmatpush1.xpose.msra.mxu0 0.0
    %3288 = vmatprep.subr.mxu0 0.0
    %3289 = vmatpush1.xpose.msra.mxu0 0.0
    %3290 = vmatprep.subr.mxu0 0.0
    %3291 = vmatpush1.xpose.msra.mxu0 0.0
    %3292 = vmatprep.subr.mxu0 0.0
    %3293 = vmatpush1.xpose.msra.mxu0 0.0
    %3294 = vmatprep.subr.mxu0 0.0
    %3295 = vmatpush1.xpose.msra.mxu0 0.0
    %3296 = vmatprep.mubr.f32.mxu0 0.0
    %3297 = vmatmul.mubr.f32.gmra.mrb[0].mxu0 %v3224
    %v3298 = vpop.f32.mrb[0].mxu0
    %v3299 = vadd.f32 0.0, %v3298
    %v3300 = vpop.f32.mrb[0].mxu0
    %3301 = vmatprep.mubr.f32.mxu0 0.0
    %3302 = vmatmul.mubr.f32.gmra.mrb[0].mxu0 %v3226
    %v3303 = vpop.f32.mrb[0].mxu0
    %v3304 = vadd.f32 0.0, %v3303
    %v3305 = vpop.f32.mrb[0].mxu0
    %3306 = vdwg.mxu0
    %3307 = vrot.lane.b32.xlu0 %v3113, 112
    %v3308 = vpop.permute.xlu0 %3307
    %3309 = vrot.lane.b32.xlu0 %v3118, 112
    %v3310 = vpop.permute.xlu0 %3309
    %3311 = vrot.lane.b32.xlu0 %v3113, 80
    %v3312 = vpop.permute.xlu0 %3311
    %3313 = vrot.lane.b32.xlu0 %v3118, 80
    %v3314 = vpop.permute.xlu0 %3313
    %v3315 = vsel %vm214, %v3308, 0
    %v3317 = vsel %vm214, %v3310, 0
    %v3319 = vsel %vm214, %v3312, 0
    %v3321 = vsel %vm214, %v3314, 0
    %3323 = vmatprep.subr.mxu0 0.0
    %3324 = vmatpush1.xpose.msra.mxu0 %v3319
    %3325 = vmatprep.subr.mxu0 0.0
    %3326 = vmatpush1.xpose.msra.mxu0 %v3321
    %3327 = vmatprep.subr.mxu0 0.0
    %3328 = vmatpush1.xpose.msra.mxu0 0.0
    %3329 = vmatprep.subr.mxu0 0.0
    %3330 = vmatpush1.xpose.msra.mxu0 0.0
    %3331 = vmatprep.subr.mxu0 0.0
    %3332 = vmatpush1.xpose.msra.mxu0 0.0
    %3333 = vmatprep.subr.mxu0 0.0
    %3334 = vmatpush1.xpose.msra.mxu0 0.0
    %3335 = vmatprep.subr.mxu0 0.0
    %3336 = vmatpush1.xpose.msra.mxu0 0.0
    %3337 = vmatprep.subr.mxu0 0.0
    %3338 = vmatpush1.xpose.msra.mxu0 0.0
    %3339 = vmatprep.subr.mxu0 0.0
    %3340 = vmatpush1.xpose.msra.mxu0 0.0
    %3341 = vmatprep.subr.mxu0 0.0
    %3342 = vmatpush1.xpose.msra.mxu0 0.0
    %3343 = vmatprep.subr.mxu0 0.0
    %3344 = vmatpush1.xpose.msra.mxu0 0.0
    %3345 = vmatprep.subr.mxu0 0.0
    %3346 = vmatpush1.xpose.msra.mxu0 0.0
    %3347 = vmatprep.subr.mxu0 0.0
    %3348 = vmatpush1.xpose.msra.mxu0 0.0
    %3349 = vmatprep.subr.mxu0 0.0
    %3350 = vmatpush1.xpose.msra.mxu0 0.0
    %3351 = vmatprep.subr.mxu0 0.0
    %3352 = vmatpush1.xpose.msra.mxu0 0.0
    %3353 = vmatprep.subr.mxu0 0.0
    %3354 = vmatpush1.xpose.msra.mxu0 0.0
    %3355 = vmatprep.subr.mxu0 0.0
    %3356 = vmatpush1.xpose.msra.mxu0 0.0
    %3357 = vmatprep.subr.mxu0 0.0
    %3358 = vmatpush1.xpose.msra.mxu0 0.0
    %3359 = vmatprep.subr.mxu0 0.0
    %3360 = vmatpush1.xpose.msra.mxu0 0.0
    %3361 = vmatprep.subr.mxu0 0.0
    %3362 = vmatpush1.xpose.msra.mxu0 0.0
    %3363 = vmatprep.subr.mxu0 0.0
    %3364 = vmatpush1.xpose.msra.mxu0 0.0
    %3365 = vmatprep.subr.mxu0 0.0
    %3366 = vmatpush1.xpose.msra.mxu0 0.0
    %3367 = vmatprep.subr.mxu0 0.0
    %3368 = vmatpush1.xpose.msra.mxu0 0.0
    %3369 = vmatprep.subr.mxu0 0.0
    %3370 = vmatpush1.xpose.msra.mxu0 0.0
    %3371 = vmatprep.subr.mxu0 0.0
    %3372 = vmatpush1.xpose.msra.mxu0 0.0
    %3373 = vmatprep.subr.mxu0 0.0
    %3374 = vmatpush1.xpose.msra.mxu0 0.0
    %3375 = vmatprep.subr.mxu0 0.0
    %3376 = vmatpush1.xpose.msra.mxu0 0.0
    %3377 = vmatprep.subr.mxu0 0.0
    %3378 = vmatpush1.xpose.msra.mxu0 0.0
    %3379 = vmatprep.subr.mxu0 0.0
    %3380 = vmatpush1.xpose.msra.mxu0 0.0
    %3381 = vmatprep.subr.mxu0 0.0
    %3382 = vmatpush1.xpose.msra.mxu0 0.0
    %3383 = vmatprep.subr.mxu0 0.0
    %3384 = vmatpush1.xpose.msra.mxu0 0.0
    %3385 = vmatprep.subr.mxu0 0.0
    %3386 = vmatpush1.xpose.msra.mxu0 0.0
    %3387 = vmatprep.mubr.f32.mxu0 0.0
    %3388 = vmatmul.mubr.f32.gmra.mrb[0].mxu0 %v3315
    %v3389 = vpop.f32.mrb[0].mxu0
    %v3390 = vadd.f32 0.0, %v3389
    %v3391 = vpop.f32.mrb[0].mxu0
    %3392 = vmatprep.mubr.f32.mxu0 0.0
    %3393 = vmatmul.mubr.f32.gmra.mrb[0].mxu0 %v3317
    %v3394 = vpop.f32.mrb[0].mxu0
    %v3395 = vadd.f32 0.0, %v3394
    %v3396 = vpop.f32.mrb[0].mxu0
    %3397 = vdwg.mxu0
    %3398 = vrot.lane.b32.xlu0 %v3113, 104
    %v3399 = vpop.permute.xlu0 %3398
    %3400 = vrot.lane.b32.xlu0 %v3118, 104
    %v3401 = vpop.permute.xlu0 %3400
    %3402 = vrot.lane.b32.xlu0 %v3113, 72
    %v3403 = vpop.permute.xlu0 %3402
    %3404 = vrot.lane.b32.xlu0 %v3118, 72
    %v3405 = vpop.permute.xlu0 %3404
    %v3406 = vsel %vm214, %v3399, 0
    %v3408 = vsel %vm214, %v3401, 0
    %v3410 = vsel %vm214, %v3403, 0
    %v3412 = vsel %vm214, %v3405, 0
    %3414 = vmatprep.subr.mxu0 0.0
    %3415 = vmatpush1.xpose.msra.mxu0 %v3410
    %3416 = vmatprep.subr.mxu0 0.0
    %3417 = vmatpush1.xpose.msra.mxu0 %v3412
    %3418 = vmatprep.subr.mxu0 0.0
    %3419 = vmatpush1.xpose.msra.mxu0 0.0
    %3420 = vmatprep.subr.mxu0 0.0
    %3421 = vmatpush1.xpose.msra.mxu0 0.0
    %3422 = vmatprep.subr.mxu0 0.0
    %3423 = vmatpush1.xpose.msra.mxu0 0.0
    %3424 = vmatprep.subr.mxu0 0.0
    %3425 = vmatpush1.xpose.msra.mxu0 0.0
    %3426 = vmatprep.subr.mxu0 0.0
    %3427 = vmatpush1.xpose.msra.mxu0 0.0
    %3428 = vmatprep.subr.mxu0 0.0
    %3429 = vmatpush1.xpose.msra.mxu0 0.0
    %3430 = vmatprep.subr.mxu0 0.0
    %3431 = vmatpush1.xpose.msra.mxu0 0.0
    %3432 = vmatprep.subr.mxu0 0.0
    %3433 = vmatpush1.xpose.msra.mxu0 0.0
    %3434 = vmatprep.subr.mxu0 0.0
    %3435 = vmatpush1.xpose.msra.mxu0 0.0
    %3436 = vmatprep.subr.mxu0 0.0
    %3437 = vmatpush1.xpose.msra.mxu0 0.0
    %3438 = vmatprep.subr.mxu0 0.0
    %3439 = vmatpush1.xpose.msra.mxu0 0.0
    %3440 = vmatprep.subr.mxu0 0.0
    %3441 = vmatpush1.xpose.msra.mxu0 0.0
    %3442 = vmatprep.subr.mxu0 0.0
    %3443 = vmatpush1.xpose.msra.mxu0 0.0
    %3444 = vmatprep.subr.mxu0 0.0
    %3445 = vmatpush1.xpose.msra.mxu0 0.0
    %3446 = vmatprep.subr.mxu0 0.0
    %3447 = vmatpush1.xpose.msra.mxu0 0.0
    %3448 = vmatprep.subr.mxu0 0.0
    %3449 = vmatpush1.xpose.msra.mxu0 0.0
    %3450 = vmatprep.subr.mxu0 0.0
    %3451 = vmatpush1.xpose.msra.mxu0 0.0
    %3452 = vmatprep.subr.mxu0 0.0
    %3453 = vmatpush1.xpose.msra.mxu0 0.0
    %3454 = vmatprep.subr.mxu0 0.0
    %3455 = vmatpush1.xpose.msra.mxu0 0.0
    %3456 = vmatprep.subr.mxu0 0.0
    %3457 = vmatpush1.xpose.msra.mxu0 0.0
    %3458 = vmatprep.subr.mxu0 0.0
    %3459 = vmatpush1.xpose.msra.mxu0 0.0
    %3460 = vmatprep.subr.mxu0 0.0
    %3461 = vmatpush1.xpose.msra.mxu0 0.0
    %3462 = vmatprep.subr.mxu0 0.0
    %3463 = vmatpush1.xpose.msra.mxu0 0.0
    %3464 = vmatprep.subr.mxu0 0.0
    %3465 = vmatpush1.xpose.msra.mxu0 0.0
    %3466 = vmatprep.subr.mxu0 0.0
    %3467 = vmatpush1.xpose.msra.mxu0 0.0
    %3468 = vmatprep.subr.mxu0 0.0
    %3469 = vmatpush1.xpose.msra.mxu0 0.0
    %3470 = vmatprep.subr.mxu0 0.0
    %3471 = vmatpush1.xpose.msra.mxu0 0.0
    %3472 = vmatprep.subr.mxu0 0.0
    %3473 = vmatpush1.xpose.msra.mxu0 0.0
    %3474 = vmatprep.subr.mxu0 0.0
    %3475 = vmatpush1.xpose.msra.mxu0 0.0
    %3476 = vmatprep.subr.mxu0 0.0
    %3477 = vmatpush1.xpose.msra.mxu0 0.0
    %3478 = vmatprep.mubr.f32.mxu0 0.0
    %3479 = vmatmul.mubr.f32.gmra.mrb[0].mxu0 %v3406
    %v3480 = vpop.f32.mrb[0].mxu0
    %v3481 = vadd.f32 0.0, %v3480
    %v3482 = vpop.f32.mrb[0].mxu0
    %3483 = vmatprep.mubr.f32.mxu0 0.0
    %3484 = vmatmul.mubr.f32.gmra.mrb[0].mxu0 %v3408
    %v3485 = vpop.f32.mrb[0].mxu0
    %v3486 = vadd.f32 0.0, %v3485
    %v3487 = vpop.f32.mrb[0].mxu0
    %3488 = vdwg.mxu0
    %3491 = vrot.lane.b32.xlu0 %v3390, 16
    %v3492 = vpop.permute.xlu0 %3491
    %3493 = vrot.lane.b32.xlu0 %v3395, 16
    %v3494 = vpop.permute.xlu0 %3493
    %3499 = vrot.lane.b32.xlu0 %v3299, 32
    %v3500 = vpop.permute.xlu0 %3499
    %3501 = vrot.lane.b32.xlu0 %v3304, 32
    %v3502 = vpop.permute.xlu0 %3501
    %3507 = vrot.lane.b32.xlu0 %v3481, 48
    %v3508 = vpop.permute.xlu0 %3507
    %3509 = vrot.lane.b32.xlu0 %v3486, 48
    %v3510 = vpop.permute.xlu0 %3509
    %v3513 = vsel %vm92, %v3208, %v3492
    %v3514 = vsel %vm92, %v3213, %v3494
    %v3515 = vsel %vm95, %v3513, %v3500
    %v3516 = vsel %vm95, %v3514, %v3502
    %v3517 = vsel %vm98, %v3515, %v3508
    %v3518 = vsel %vm98, %v3516, %v3510
    %v3519 = vadd.f32 %v3517, %v99
    %v3520 = vadd.f32 %v3518, %v100
    %v3521 = vsel %vm603, %v3519, -inf
    %3522 = vmax.xlane.f32.xlu0 %v3521
    %v3523 = vpop.xlane.xlu0 %3522
    %v3524 = vsel %vm603, %v3520, -inf
    %3525 = vmax.xlane.f32.xlu0 %v3524
    %v3526 = vpop.xlane.xlu0 %3525
    %v3527 = vsub.f32 %v3519, %v3523
    %v3528 = vsub.f32 %v3520, %v3526
    %v3529 = vmul.f32 %v3527, 1.442695
    %v3530 = vpow.pop %v3529
    %v3531 = vmul.f32 %v3528, 1.442695
    %v3532 = vpow.pop %v3531
    %v3534 = vsel %vm603, %v3530, 0
    %v3537 = vsel %vm603, %v3532, 0
    %3539 = vmatprep.subr.mxu0 0.0
    %3540 = vmatpush1.msra.mxu0 %v103
    %3541 = vmatprep.subr.mxu0 0.0
    %3542 = vmatpush1.msra.mxu0 %v103
    %3543 = vmatprep.subr.mxu0 0.0
    %3544 = vmatpush1.msra.mxu0 %v106
    %3545 = vmatprep.subr.mxu0 0.0
    %3546 = vmatpush1.msra.mxu0 %v106
    %3547 = vmatprep.subr.mxu0 0.0
    %3548 = vmatpush1.msra.mxu0 %v108
    %3549 = vmatprep.subr.mxu0 0.0
    %3550 = vmatpush1.msra.mxu0 %v108
    %3551 = vmatprep.subr.mxu0 0.0
    %3552 = vmatpush1.msra.mxu0 %v109
    %3553 = vmatprep.subr.mxu0 0.0
    %3554 = vmatpush1.msra.mxu0 %v109
    %3555 = vmatprep.subr.mxu0 0.0
    %3556 = vmatpush1.msra.mxu0 0.0
    %3557 = vmatprep.subr.mxu0 0.0
    %3558 = vmatpush1.msra.mxu0 0.0
    %3559 = vmatprep.subr.mxu0 0.0
    %3560 = vmatpush1.msra.mxu0 0.0
    %3561 = vmatprep.subr.mxu0 0.0
    %3562 = vmatpush1.msra.mxu0 0.0
    %3563 = vmatprep.subr.mxu0 0.0
    %3564 = vmatpush1.msra.mxu0 0.0
    %3565 = vmatprep.subr.mxu0 0.0
    %3566 = vmatpush1.msra.mxu0 0.0
    %3567 = vmatprep.subr.mxu0 0.0
    %3568 = vmatpush1.msra.mxu0 0.0
    %3569 = vmatprep.subr.mxu0 0.0
    %3570 = vmatpush1.msra.mxu0 0.0
    %3571 = vmatprep.subr.mxu0 0.0
    %3572 = vmatpush1.msra.mxu0 0.0
    %3573 = vmatprep.subr.mxu0 0.0
    %3574 = vmatpush1.msra.mxu0 0.0
    %3575 = vmatprep.subr.mxu0 0.0
    %3576 = vmatpush1.msra.mxu0 0.0
    %3577 = vmatprep.subr.mxu0 0.0
    %3578 = vmatpush1.msra.mxu0 0.0
    %3579 = vmatprep.subr.mxu0 0.0
    %3580 = vmatpush1.msra.mxu0 0.0
    %3581 = vmatprep.subr.mxu0 0.0
    %3582 = vmatpush1.msra.mxu0 0.0
    %3583 = vmatprep.subr.mxu0 0.0
    %3584 = vmatpush1.msra.mxu0 0.0
    %3585 = vmatprep.subr.mxu0 0.0
    %3586 = vmatpush1.msra.mxu0 0.0
    %3587 = vmatprep.subr.mxu0 0.0
    %3588 = vmatpush1.msra.mxu0 0.0
    %3589 = vmatprep.subr.mxu0 0.0
    %3590 = vmatpush1.msra.mxu0 0.0
    %3591 = vmatprep.subr.mxu0 0.0
    %3592 = vmatpush1.msra.mxu0 0.0
    %3593 = vmatprep.subr.mxu0 0.0
    %3594 = vmatpush1.msra.mxu0 0.0
    %3595 = vmatprep.subr.mxu0 0.0
    %3596 = vmatpush1.msra.mxu0 0.0
    %3597 = vmatprep.subr.mxu0 0.0
    %3598 = vmatpush1.msra.mxu0 0.0
    %3599 = vmatprep.subr.mxu0 0.0
    %3600 = vmatpush1.msra.mxu0 0.0
    %3601 = vmatprep.subr.mxu0 0.0
    %3602 = vmatpush1.msra.mxu0 0.0
    %3603 = vmatprep.mubr.f32.mxu0 0.0
    %3604 = vmatmul.mubr.f32.gmra.mrb[0].mxu0 %v3534
    %v3605 = vpop.f32.mrb[0].mxu0
    %v3606 = vadd.f32 0.0, %v3605
    %v3607 = vpop.f32.mrb[0].mxu0
    %3608 = vmatprep.mubr.f32.mxu0 0.0
    %3609 = vmatmul.mubr.f32.gmra.mrb[0].mxu0 %v3537
    %v3610 = vpop.f32.mrb[0].mxu0
    %v3611 = vadd.f32 0.0, %v3610
    %v3612 = vpop.f32.mrb[0].mxu0
    %3613 = vdwg.mxu0
    %v3614 = vrcp.pop %v3606
    %v3615 = vrcp.pop %v3611
    %v3616 = vmul.f32 %v3530, %v3614
    %v3617 = vmul.f32 %v3532, %v3615
    %v3618 = vstv %s3121
    %v3619 = vmul.f32 %v3618, %v3616
    %v3620 = vmul.f32 %v3618, %v3617
    %3623 = vrot.lane.b32.xlu0 %v3619, 96
    %v3624 = vpop.permute.xlu0 %3623
    %3625 = vrot.lane.b32.xlu0 %v3620, 96
    %v3626 = vpop.permute.xlu0 %3625
    %v3629 = vsub.f32 %v3616, %v3624
    %v3630 = vsub.f32 %v3617, %v3626
    %3631 = vrot.lane.b32.xlu0 %v3113, 64
    %v3632 = vpop.permute.xlu0 %3631
    %3633 = vrot.lane.b32.xlu0 %v3118, 64
    %v3634 = vpop.permute.xlu0 %3633
    %v3638 = vsel %vm92, %v3629, 0
    %v3641 = vsel %vm92, %v3630, 0
    %3643 = vmatprep.subr.mxu0 0.0
    %3644 = vmatpush1.msra.mxu0 %v3632
    %3645 = vmatprep.subr.mxu0 0.0
    %3646 = vmatpush1.msra.mxu0 %v3634
    %3647 = vmatprep.subr.mxu0 0.0
    %3648 = vmatpush1.msra.mxu0 0.0
    %3649 = vmatprep.subr.mxu0 0.0
    %3650 = vmatpush1.msra.mxu0 0.0
    %3651 = vmatprep.subr.mxu0 0.0
    %3652 = vmatpush1.msra.mxu0 0.0
    %3653 = vmatprep.subr.mxu0 0.0
    %3654 = vmatpush1.msra.mxu0 0.0
    %3655 = vmatprep.subr.mxu0 0.0
    %3656 = vmatpush1.msra.mxu0 0.0
    %3657 = vmatprep.subr.mxu0 0.0
    %3658 = vmatpush1.msra.mxu0 0.0
    %3659 = vmatprep.subr.mxu0 0.0
    %3660 = vmatpush1.msra.mxu0 0.0
    %3661 = vmatprep.subr.mxu0 0.0
    %3662 = vmatpush1.msra.mxu0 0.0
    %3663 = vmatprep.subr.mxu0 0.0
    %3664 = vmatpush1.msra.mxu0 0.0
    %3665 = vmatprep.subr.mxu0 0.0
    %3666 = vmatpush1.msra.mxu0 0.0
    %3667 = vmatprep.subr.mxu0 0.0
    %3668 = vmatpush1.msra.mxu0 0.0
    %3669 = vmatprep.subr.mxu0 0.0
    %3670 = vmatpush1.msra.mxu0 0.0
    %3671 = vmatprep.subr.mxu0 0.0
    %3672 = vmatpush1.msra.mxu0 0.0
    %3673 = vmatprep.subr.mxu0 0.0
    %3674 = vmatpush1.msra.mxu0 0.0
    %3675 = vmatprep.subr.mxu0 0.0
    %3676 = vmatpush1.msra.mxu0 0.0
    %3677 = vmatprep.subr.mxu0 0.0
    %3678 = vmatpush1.msra.mxu0 0.0
    %3679 = vmatprep.subr.mxu0 0.0
    %3680 = vmatpush1.msra.mxu0 0.0
    %3681 = vmatprep.subr.mxu0 0.0
    %3682 = vmatpush1.msra.mxu0 0.0
    %3683 = vmatprep.subr.mxu0 0.0
    %3684 = vmatpush1.msra.mxu0 0.0
    %3685 = vmatprep.subr.mxu0 0.0
    %3686 = vmatpush1.msra.mxu0 0.0
    %3687 = vmatprep.subr.mxu0 0.0
    %3688 = vmatpush1.msra.mxu0 0.0
    %3689 = vmatprep.subr.mxu0 0.0
    %3690 = vmatpush1.msra.mxu0 0.0
    %3691 = vmatprep.subr.mxu0 0.0
    %3692 = vmatpush1.msra.mxu0 0.0
    %3693 = vmatprep.subr.mxu0 0.0
    %3694 = vmatpush1.msra.mxu0 0.0
    %3695 = vmatprep.subr.mxu0 0.0
    %3696 = vmatpush1.msra.mxu0 0.0
    %3697 = vmatprep.subr.mxu0 0.0
    %3698 = vmatpush1.msra.mxu0 0.0
    %3699 = vmatprep.subr.mxu0 0.0
    %3700 = vmatpush1.msra.mxu0 0.0
    %3701 = vmatprep.subr.mxu0 0.0
    %3702 = vmatpush1.msra.mxu0 0.0
    %3703 = vmatprep.subr.mxu0 0.0
    %3704 = vmatpush1.msra.mxu0 0.0
    %3705 = vmatprep.subr.mxu0 0.0
    %3706 = vmatpush1.msra.mxu0 0.0
    %3707 = vmatprep.mubr.f32.mxu0 0.0
    %3708 = vmatmul.mubr.f32.gmra.mrb[0].mxu0 %v3638
    %v3709 = vpop.f32.mrb[0].mxu0
    %v3710 = vadd.f32 0.0, %v3709
    %v3711 = vpop.f32.mrb[0].mxu0
    %3712 = vmatprep.mubr.f32.mxu0 0.0
    %3713 = vmatmul.mubr.f32.gmra.mrb[0].mxu0 %v3641
    %v3714 = vpop.f32.mrb[0].mxu0
    %v3715 = vadd.f32 0.0, %v3714
    %v3716 = vpop.f32.mrb[0].mxu0
    %3717 = vdwg.mxu0
    %v3718 = vmul.f32 %v3710, %v3710
    %v3719 = vmul.f32 %v3715, %v3715
    %v3720 = vsel %vm92, %v3718, 0.0
    %3721 = vadd.xlane.f32.xlu0 %v3720
    %v3722 = vpop.xlane.xlu0 %3721
    %v3723 = vsel %vm92, %v3719, 0.0
    %3724 = vadd.xlane.f32.xlu0 %v3723
    %v3725 = vpop.xlane.xlu0 %3724
    %v3726 = vmul.f32 %v3722, %v809
    %v3727 = vmul.f32 %v3725, %v809
    %v3728 = vadd.f32 %v3726, 1e-05
    %v3729 = vadd.f32 %v3727, 1e-05
    %v3730 = vrsqrt.pop %v3728
    %v3731 = vrsqrt.pop %v3729
    %v3732 = vmul.f32 %v3710, %v3730
    %v3733 = vmul.f32 %v3715, %v3731
    %3734 = vrot.lane.b32.xlu0 %v3629, 112
    %v3735 = vpop.permute.xlu0 %3734
    %3736 = vrot.lane.b32.xlu0 %v3630, 112
    %v3737 = vpop.permute.xlu0 %3736
    %3738 = vrot.lane.b32.xlu0 %v3113, 48
    %v3739 = vpop.permute.xlu0 %3738
    %3740 = vrot.lane.b32.xlu0 %v3118, 48
    %v3741 = vpop.permute.xlu0 %3740
    %v3744 = vsel %vm92, %v3735, 0
    %v3746 = vsel %vm92, %v3737, 0
    %3748 = vmatprep.subr.mxu0 0.0
    %3749 = vmatpush1.msra.mxu0 %v3739
    %3750 = vmatprep.subr.mxu0 0.0
    %3751 = vmatpush1.msra.mxu0 %v3741
    %3752 = vmatprep.subr.mxu0 0.0
    %3753 = vmatpush1.msra.mxu0 0.0
    %3754 = vmatprep.subr.mxu0 0.0
    %3755 = vmatpush1.msra.mxu0 0.0
    %3756 = vmatprep.subr.mxu0 0.0
    %3757 = vmatpush1.msra.mxu0 0.0
    %3758 = vmatprep.subr.mxu0 0.0
    %3759 = vmatpush1.msra.mxu0 0.0
    %3760 = vmatprep.subr.mxu0 0.0
    %3761 = vmatpush1.msra.mxu0 0.0
    %3762 = vmatprep.subr.mxu0 0.0
    %3763 = vmatpush1.msra.mxu0 0.0
    %3764 = vmatprep.subr.mxu0 0.0
    %3765 = vmatpush1.msra.mxu0 0.0
    %3766 = vmatprep.subr.mxu0 0.0
    %3767 = vmatpush1.msra.mxu0 0.0
    %3768 = vmatprep.subr.mxu0 0.0
    %3769 = vmatpush1.msra.mxu0 0.0
    %3770 = vmatprep.subr.mxu0 0.0
    %3771 = vmatpush1.msra.mxu0 0.0
    %3772 = vmatprep.subr.mxu0 0.0
    %3773 = vmatpush1.msra.mxu0 0.0
    %3774 = vmatprep.subr.mxu0 0.0
    %3775 = vmatpush1.msra.mxu0 0.0
    %3776 = vmatprep.subr.mxu0 0.0
    %3777 = vmatpush1.msra.mxu0 0.0
    %3778 = vmatprep.subr.mxu0 0.0
    %3779 = vmatpush1.msra.mxu0 0.0
    %3780 = vmatprep.subr.mxu0 0.0
    %3781 = vmatpush1.msra.mxu0 0.0
    %3782 = vmatprep.subr.mxu0 0.0
    %3783 = vmatpush1.msra.mxu0 0.0
    %3784 = vmatprep.subr.mxu0 0.0
    %3785 = vmatpush1.msra.mxu0 0.0
    %3786 = vmatprep.subr.mxu0 0.0
    %3787 = vmatpush1.msra.mxu0 0.0
    %3788 = vmatprep.subr.mxu0 0.0
    %3789 = vmatpush1.msra.mxu0 0.0
    %3790 = vmatprep.subr.mxu0 0.0
    %3791 = vmatpush1.msra.mxu0 0.0
    %3792 = vmatprep.subr.mxu0 0.0
    %3793 = vmatpush1.msra.mxu0 0.0
    %3794 = vmatprep.subr.mxu0 0.0
    %3795 = vmatpush1.msra.mxu0 0.0
    %3796 = vmatprep.subr.mxu0 0.0
    %3797 = vmatpush1.msra.mxu0 0.0
    %3798 = vmatprep.subr.mxu0 0.0
    %3799 = vmatpush1.msra.mxu0 0.0
    %3800 = vmatprep.subr.mxu0 0.0
    %3801 = vmatpush1.msra.mxu0 0.0
    %3802 = vmatprep.subr.mxu0 0.0
    %3803 = vmatpush1.msra.mxu0 0.0
    %3804 = vmatprep.subr.mxu0 0.0
    %3805 = vmatpush1.msra.mxu0 0.0
    %3806 = vmatprep.subr.mxu0 0.0
    %3807 = vmatpush1.msra.mxu0 0.0
    %3808 = vmatprep.subr.mxu0 0.0
    %3809 = vmatpush1.msra.mxu0 0.0
    %3810 = vmatprep.subr.mxu0 0.0
    %3811 = vmatpush1.msra.mxu0 0.0
    %3812 = vmatprep.mubr.f32.mxu0 0.0
    %3813 = vmatmul.mubr.f32.gmra.mrb[0].mxu0 %v3744
    %v3814 = vpop.f32.mrb[0].mxu0
    %v3815 = vadd.f32 0.0, %v3814
    %v3816 = vpop.f32.mrb[0].mxu0
    %3817 = vmatprep.mubr.f32.mxu0 0.0
    %3818 = vmatmul.mubr.f32.gmra.mrb[0].mxu0 %v3746
    %v3819 = vpop.f32.mrb[0].mxu0
    %v3820 = vadd.f32 0.0, %v3819
    %v3821 = vpop.f32.mrb[0].mxu0
    %3822 = vdwg.mxu0
    %v3823 = vmul.f32 %v3815, %v3815
    %v3824 = vmul.f32 %v3820, %v3820
    %v3825 = vsel %vm92, %v3823, 0.0
    %3826 = vadd.xlane.f32.xlu0 %v3825
    %v3827 = vpop.xlane.xlu0 %3826
    %v3828 = vsel %vm92, %v3824, 0.0
    %3829 = vadd.xlane.f32.xlu0 %v3828
    %v3830 = vpop.xlane.xlu0 %3829
    %v3831 = vmul.f32 %v3827, %v809
    %v3832 = vmul.f32 %v3830, %v809
    %v3833 = vadd.f32 %v3831, 1e-05
    %v3834 = vadd.f32 %v3832, 1e-05
    %v3835 = vrsqrt.pop %v3833
    %v3836 = vrsqrt.pop %v3834
    %v3837 = vmul.f32 %v3815, %v3835
    %v3838 = vmul.f32 %v3820, %v3836
    %v3840 = vsel %vm92, %v3837, 0
    %v3843 = vsel %vm92, %v3838, 0
    %3845 = vmatprep.subr.mxu0 0.0
    %3846 = vmatpush1.msra.mxu0 %v3125
    %3847 = vmatprep.subr.mxu0 0.0
    %3848 = vmatpush1.msra.mxu0 %v3126
    %3849 = vmatprep.subr.mxu0 0.0
    %3850 = vmatpush1.msra.mxu0 0.0
    %3851 = vmatprep.subr.mxu0 0.0
    %3852 = vmatpush1.msra.mxu0 0.0
    %3853 = vmatprep.subr.mxu0 0.0
    %3854 = vmatpush1.msra.mxu0 0.0
    %3855 = vmatprep.subr.mxu0 0.0
    %3856 = vmatpush1.msra.mxu0 0.0
    %3857 = vmatprep.subr.mxu0 0.0
    %3858 = vmatpush1.msra.mxu0 0.0
    %3859 = vmatprep.subr.mxu0 0.0
    %3860 = vmatpush1.msra.mxu0 0.0
    %3861 = vmatprep.subr.mxu0 0.0
    %3862 = vmatpush1.msra.mxu0 0.0
    %3863 = vmatprep.subr.mxu0 0.0
    %3864 = vmatpush1.msra.mxu0 0.0
    %3865 = vmatprep.subr.mxu0 0.0
    %3866 = vmatpush1.msra.mxu0 0.0
    %3867 = vmatprep.subr.mxu0 0.0
    %3868 = vmatpush1.msra.mxu0 0.0
    %3869 = vmatprep.subr.mxu0 0.0
    %3870 = vmatpush1.msra.mxu0 0.0
    %3871 = vmatprep.subr.mxu0 0.0
    %3872 = vmatpush1.msra.mxu0 0.0
    %3873 = vmatprep.subr.mxu0 0.0
    %3874 = vmatpush1.msra.mxu0 0.0
    %3875 = vmatprep.subr.mxu0 0.0
    %3876 = vmatpush1.msra.mxu0 0.0
    %3877 = vmatprep.subr.mxu0 0.0
    %3878 = vmatpush1.msra.mxu0 0.0
    %3879 = vmatprep.subr.mxu0 0.0
    %3880 = vmatpush1.msra.mxu0 0.0
    %3881 = vmatprep.subr.mxu0 0.0
    %3882 = vmatpush1.msra.mxu0 0.0
    %3883 = vmatprep.subr.mxu0 0.0
    %3884 = vmatpush1.msra.mxu0 0.0
    %3885 = vmatprep.subr.mxu0 0.0
    %3886 = vmatpush1.msra.mxu0 0.0
    %3887 = vmatprep.subr.mxu0 0.0
    %3888 = vmatpush1.msra.mxu0 0.0
    %3889 = vmatprep.subr.mxu0 0.0
    %3890 = vmatpush1.msra.mxu0 0.0
    %3891 = vmatprep.subr.mxu0 0.0
    %3892 = vmatpush1.msra.mxu0 0.0
    %3893 = vmatprep.subr.mxu0 0.0
    %3894 = vmatpush1.msra.mxu0 0.0
    %3895 = vmatprep.subr.mxu0 0.0
    %3896 = vmatpush1.msra.mxu0 0.0
    %3897 = vmatprep.subr.mxu0 0.0
    %3898 = vmatpush1.msra.mxu0 0.0
    %3899 = vmatprep.subr.mxu0 0.0
    %3900 = vmatpush1.msra.mxu0 0.0
    %3901 = vmatprep.subr.mxu0 0.0
    %3902 = vmatpush1.msra.mxu0 0.0
    %3903 = vmatprep.subr.mxu0 0.0
    %3904 = vmatpush1.msra.mxu0 0.0
    %3905 = vmatprep.subr.mxu0 0.0
    %3906 = vmatpush1.msra.mxu0 0.0
    %3907 = vmatprep.subr.mxu0 0.0
    %3908 = vmatpush1.msra.mxu0 0.0
    %3909 = vmatprep.mubr.f32.mxu0 0.0
    %3910 = vmatmul.mubr.f32.gmra.mrb[0].mxu0 %v3840
    %v3911 = vpop.f32.mrb[0].mxu0
    %v3912 = vadd.f32 0.0, %v3911
    %v3913 = vpop.f32.mrb[0].mxu0
    %3914 = vmatprep.mubr.f32.mxu0 0.0
    %3915 = vmatmul.mubr.f32.gmra.mrb[0].mxu0 %v3843
    %v3916 = vpop.f32.mrb[0].mxu0
    %v3917 = vadd.f32 0.0, %v3916
    %v3918 = vpop.f32.mrb[0].mxu0
    %3919 = vdwg.mxu0
    %v3921 = vsel %vm92, %v3732, 0
    %v3924 = vsel %vm92, %v3733, 0
    %3926 = vmatprep.subr.mxu0 0.0
    %3927 = vmatpush1.msra.mxu0 %v3123
    %3928 = vmatprep.subr.mxu0 0.0
    %3929 = vmatpush1.msra.mxu0 %v3124
    %3930 = vmatprep.subr.mxu0 0.0
    %3931 = vmatpush1.msra.mxu0 0.0
    %3932 = vmatprep.subr.mxu0 0.0
    %3933 = vmatpush1.msra.mxu0 0.0
    %3934 = vmatprep.subr.mxu0 0.0
    %3935 = vmatpush1.msra.mxu0 0.0
    %3936 = vmatprep.subr.mxu0 0.0
    %3937 = vmatpush1.msra.mxu0 0.0
    %3938 = vmatprep.subr.mxu0 0.0
    %3939 = vmatpush1.msra.mxu0 0.0
    %3940 = vmatprep.subr.mxu0 0.0
    %3941 = vmatpush1.msra.mxu0 0.0
    %3942 = vmatprep.subr.mxu0 0.0
    %3943 = vmatpush1.msra.mxu0 0.0
    %3944 = vmatprep.subr.mxu0 0.0
    %3945 = vmatpush1.msra.mxu0 0.0
    %3946 = vmatprep.subr.mxu0 0.0
    %3947 = vmatpush1.msra.mxu0 0.0
    %3948 = vmatprep.subr.mxu0 0.0
    %3949 = vmatpush1.msra.mxu0 0.0
    %3950 = vmatprep.subr.mxu0 0.0
    %3951 = vmatpush1.msra.mxu0 0.0
    %3952 = vmatprep.subr.mxu0 0.0
    %3953 = vmatpush1.msra.mxu0 0.0
    %3954 = vmatprep.subr.mxu0 0.0
    %3955 = vmatpush1.msra.mxu0 0.0
    %3956 = vmatprep.subr.mxu0 0.0
    %3957 = vmatpush1.msra.mxu0 0.0
    %3958 = vmatprep.subr.mxu0 0.0
    %3959 = vmatpush1.msra.mxu0 0.0
    %3960 = vmatprep.subr.mxu0 0.0
    %3961 = vmatpush1.msra.mxu0 0.0
    %3962 = vmatprep.subr.mxu0 0.0
    %3963 = vmatpush1.msra.mxu0 0.0
    %3964 = vmatprep.subr.mxu0 0.0
    %3965 = vmatpush1.msra.mxu0 0.0
    %3966 = vmatprep.subr.mxu0 0.0
    %3967 = vmatpush1.msra.mxu0 0.0
    %3968 = vmatprep.subr.mxu0 0.0
    %3969 = vmatpush1.msra.mxu0 0.0
    %3970 = vmatprep.subr.mxu0 0.0
    %3971 = vmatpush1.msra.mxu0 0.0
    %3972 = vmatprep.subr.mxu0 0.0
    %3973 = vmatpush1.msra.mxu0 0.0
    %3974 = vmatprep.subr.mxu0 0.0
    %3975 = vmatpush1.msra.mxu0 0.0
    %3976 = vmatprep.subr.mxu0 0.0
    %3977 = vmatpush1.msra.mxu0 0.0
    %3978 = vmatprep.subr.mxu0 0.0
    %3979 = vmatpush1.msra.mxu0 0.0
    %3980 = vmatprep.subr.mxu0 0.0
    %3981 = vmatpush1.msra.mxu0 0.0
    %3982 = vmatprep.subr.mxu0 0.0
    %3983 = vmatpush1.msra.mxu0 0.0
    %3984 = vmatprep.subr.mxu0 0.0
    %3985 = vmatpush1.msra.mxu0 0.0
    %3986 = vmatprep.subr.mxu0 0.0
    %3987 = vmatpush1.msra.mxu0 0.0
    %3988 = vmatprep.subr.mxu0 0.0
    %3989 = vmatpush1.msra.mxu0 0.0
    %3990 = vmatprep.mubr.f32.mxu0 0.0
    %3991 = vmatmul.mubr.f32.gmra.mrb[0].mxu0 %v3921
    %v3992 = vpop.f32.mrb[0].mxu0
    %v3993 = vadd.f32 %v3912, %v3992
    %v3994 = vpop.f32.mrb[0].mxu0
    %3995 = vmatprep.mubr.f32.mxu0 0.0
    %3996 = vmatmul.mubr.f32.gmra.mrb[0].mxu0 %v3924
    %v3997 = vpop.f32.mrb[0].mxu0
    %v3998 = vadd.f32 %v3917, %v3997
    %v3999 = vpop.f32.mrb[0].mxu0
    %4000 = vdwg.mxu0
    %4001 = vst [vmem:[%s4] sm:$0xff] %v3993
    %4002 = vst [vmem:[%s4 + $0x8] sm:$0xff] %v3998
    %4005 = vrot.lane.b32.xlu0 %v2141, 32
    %v4006 = vpop.permute.xlu0 %4005
    %4007 = vrot.lane.b32.xlu0 %v2146, 32
    %v4008 = vpop.permute.xlu0 %4007
    %v4011 = vsel %vm95, %v211, %v1169
    %v4012 = vsel %vm95, %v213, %v1174
    %v4013 = vsel %vm603, %v4011, %v4006
    %v4014 = vsel %vm603, %v4012, %v4008
    %vm4015 = vcmask 785408
    %v4016 = vsel %vm4015, %v4013, %v3632
    %v4017 = vsel %vm4015, %v4014, %v3634
    %4018 = vst [vmem:[#allocation9] sm:$0xff] %v4016
    %4019 = vst [vmem:[#allocation9 + $0x8] sm:$0xff] %v4017
    %4022 = vrot.lane.b32.xlu0 %v3113, 32
    %v4023 = vpop.permute.xlu0 %4022
    %4024 = vrot.lane.b32.xlu0 %v3118, 32
    %v4025 = vpop.permute.xlu0 %4024
    %v4028 = vsel %vm95, %v715, %v1186
    %v4029 = vsel %vm95, %v717, %v1188
    %v4030 = vsel %vm603, %v4028, %v2141
    %v4031 = vsel %vm603, %v4029, %v2146
    %v4032 = vsel %vm4015, %v4030, %v4023
    %v4033 = vsel %vm4015, %v4031, %v4025
    %4034 = vst [vmem:[#allocation10] sm:$0xff] %v4032
    %4035 = vst [vmem:[#allocation10 + $0x8] sm:$0xff] %v4033
    // Predicated region
    $region30: #{_forward_jit.1} parent=1 // pred_check
      _
    $region31: #{_forward_jit.1} parent=1 // pred_check_branch
      %4037 = sbr.rel (0) target = $region33
    $region32: #{_forward_jit.1} parent=1 // pred_region
      _
    $region33: #{_forward_jit.1} parent=1 // pred_fallthru
      _
    // Predicated region
    $region34: #{_forward_jit.1} parent=1 // pred_check
      _
    $region35: #{_forward_jit.1} parent=1 // pred_check_branch
      %4039 = sbr.rel (0) target = $region37
    $region36: #{_forward_jit.1} parent=1 // pred_region
      %s4041 = ssub.s32 256, 256
      %4042 = vsyncadd [#allocation4], %s4041
      %s4043 = sshll.u32 [#allocation9], 4
      %s4044 = int_to_ptr.vmem [resolvable:$true] %s4043
      %4049 = dma.vmem_to_hbm [thread:$0]  %s4044, 256, %s5, [#allocation4], 128, 128, 8
    $region37: #{_forward_jit.1} parent=1 // pred_fallthru
      _
    // Predicated region
    $region38: #{_forward_jit.1} parent=1 // pred_check
      _
    $region39: #{_forward_jit.1} parent=1 // pred_check_branch
      %4051 = sbr.rel (0) target = $region41
    $region40: #{_forward_jit.1} parent=1 // pred_region
      %s4053 = ssub.s32 256, 256
      %4054 = vsyncadd [#allocation11], %s4053
      %s4055 = sshll.u32 [#allocation10], 4
      %s4056 = int_to_ptr.vmem [resolvable:$true] %s4055
      %4061 = dma.vmem_to_hbm [thread:$0]  %s4056, 256, %s6, [#allocation11], 128, 128, 8
    $region41: #{_forward_jit.1} parent=1 // pred_fallthru
      _
    // Predicated region
    $region42: #{_forward_jit.1} parent=1 // pred_check
      _
    $region43: #{_forward_jit.1} parent=1 // pred_check_branch
      %4063 = sbr.rel (0) target = $region45
    $region44: #{_forward_jit.1} parent=1 // pred_region
      _
    $region45: #{_forward_jit.1} parent=1 // pred_fallthru
      _
    // Predicated region
    $region46: #{_forward_jit.1} parent=1 // pred_check
      _
    $region47: #{_forward_jit.1} parent=1 // pred_check_branch
      %4065 = sbr.rel (0) target = $region49
    $region48: #{_forward_jit.1} parent=1 // pred_region
      %4066 = dma.done [#allocation4], 256
    $region49: #{_forward_jit.1} parent=1 // pred_fallthru
      _
    // Predicated region
    $region50: #{_forward_jit.1} parent=1 // pred_check
      _
    $region51: #{_forward_jit.1} parent=1 // pred_check_branch
      %4068 = sbr.rel (0) target = $region53
    $region52: #{_forward_jit.1} parent=1 // pred_region
      %4069 = dma.done [#allocation11], 256
    $region53: #{_forward_jit.1} parent=1 // pred_fallthru
      _
    %4070 = vsyncpa [#allocation3], 1
    %4071 = vsyncpa [#allocation8], 1
    %4072 = vsyncpa [#allocation4], 1
    %4073 = vsyncpa [#allocation11], 1
    %4074 = vsyncpa [#allocation5], 1

</llo_original>
